<compile_context>
chip_gen: v7x
topology: tpu7x:2x2x1
jax: 0.10.0
libtpu: 0.0.40
codegen_flags: <defaults>
</compile_context>

<pallas_src>
import functools
import math

import jax
import jax.numpy as jnp
from jax import lax
from jax.experimental import pallas as pl
from jax.experimental.pallas import tpu as pltpu


def _round_up(x: int, m: int) -> int:
    return ((x + m - 1) // m) * m


def _batch_split(b_pad: int):
    # Two batch blocks when possible so the serial recurrence uses both TCs (v7x).
    nb = 2 if (b_pad >= 16 and b_pad % 16 == 0) else 1
    return nb, b_pad // nb


def _pick_time_chunk(requested: int, seq_len: int, b_blk: int, hidden: int,
                     budget_bytes: int = 20 << 20) -> int:
    """Largest time chunk <= requested whose streamed blocks fit the VMEM budget."""
    tc = max(8, min(_round_up(requested, 8), _round_up(seq_len, 8)))
    per_step = 2 * b_blk * (4 * hidden + hidden) * 4   # gx + out, f32, double-buffered
    while tc > 8 and per_step * tc > budget_bytes:
        tc = max(8, (tc // 2 // 8) * 8)
    return tc


# ---------------------------------------------------------------------------
# Kernel 1: multi-layer unidirectional LSTM recurrence (input proj. hoisted).
# ---------------------------------------------------------------------------
def _make_lstm_kernel(tt: int, hidden: int):
    def kernel(gx_ref, whh_ref, out_ref, h_scr, c_scr):
        # Reset the carried (h, c) state at the start of each batch block's sweep.
        @pl.when(pl.program_id(1) == 0)
        def _():
            h_scr[...] = jnp.zeros_like(h_scr)
            c_scr[...] = jnp.zeros_like(c_scr)

        def step(i, carry):
            h = h_scr[...]                           # f32 carry
            c = c_scr[...]
            # Recurrent projection only (input projection hoisted in the wrapper).
            # whh_ref is indexed inside the step (bf16) so the compiler is free to
            # re-load it instead of pinning 4H*H values across the unrolled body.
            gates = gx_ref[i] + jnp.dot(h.astype(whh_ref.dtype), whh_ref[...],
                                        preferred_element_type=jnp.float32)
            # Gate columns pre-ordered (i, f, o, g): one sigmoid over 3H lanes.
            sig = jax.nn.sigmoid(gates[:, : 3 * hidden])
            i_g = sig[:, :hidden]
            f_g = sig[:, hidden:2 * hidden]
            o_g = sig[:, 2 * hidden:3 * hidden]
            g_g = jnp.tanh(gates[:, 3 * hidden:])
            c_new = f_g * c + i_g * g_g
            h_new = o_g * jnp.tanh(c_new)
            h_scr[...] = h_new
            c_scr[...] = c_new
            out_ref[i] = h_new
            return carry

        lax.fori_loop(0, tt, step, None, unroll=True)

    return kernel


def lstm_recurrence(gates_x, whh_t, *, time_chunk):
    """gates_x: (T_pad, B_pad, 4H) f32 = x @ W_ih^T + (b_ih+b_hh); whh_t: (H,4H) bf16."""
    T_pad, B_pad, G = gates_x.shape
    H = whh_t.shape[0]
    assert T_pad % time_chunk == 0 and G == 4 * H
    nt = T_pad // time_chunk
    nb, B_blk = _batch_split(B_pad)
    return pl.pallas_call(
        _make_lstm_kernel(time_chunk, H),
        out_shape=jax.ShapeDtypeStruct((T_pad, B_pad, H), jnp.float32),
        # batch axis is megacore-parallel (>=2 blocks on v7x), time is the carry.
        grid=(nb, nt),
        in_specs=[
            pl.BlockSpec((time_chunk, B_blk, G), lambda b, t: (t, b, 0)),
            pl.BlockSpec((H, G), lambda b, t: (0, 0)),
        ],
        out_specs=pl.BlockSpec((time_chunk, B_blk, H), lambda b, t: (t, b, 0)),
        scratch_shapes=[
            pltpu.VMEM((B_blk, H), jnp.float32),  # h carry (f32)
            pltpu.VMEM((B_blk, H), jnp.float32),  # c carry (f32)
        ],
        compiler_params=pltpu.CompilerParams(
            dimension_semantics=("parallel", "arbitrary"),
            vmem_limit_bytes=32 * 1024 * 1024),
    )(gates_x, whh_t)


# ---------------------------------------------------------------------------
# Kernel 2: multi-head attention core — all heads per batch element, lane-dense.
# ---------------------------------------------------------------------------
def _make_attn_kernel(num_heads: int, dh: int, scale: float):
    def kernel(q_ref, k_ref, v_ref, ctx_ref):
        q = q_ref[0]          # (Tq, H) bf16
        k = k_ref[0]          # (S,  H) bf16
        v = v_ref[0]          # (S,  H) bf16
        parts = []
        for h in range(num_heads):                       # static, small
            sl = slice(h * dh, (h + 1) * dh)
            qh, kh, vh = q[:, sl], k[:, sl], v[:, sl]
            # qh @ kh^T without an explicit transpose (contract the dh axes).
            s = lax.dot_general(qh, kh, (((1,), (1,)), ((), ())),
                                preferred_element_type=jnp.float32) * scale
            s = s - jnp.max(s, axis=-1, keepdims=True)
            e = jnp.exp(s)
            inv = pl.reciprocal(jnp.sum(e, axis=-1, keepdims=True), approx=True)
            p = (e * inv).astype(v.dtype)
            parts.append(jnp.dot(p, vh, preferred_element_type=jnp.float32))
        # Single lane-dense (Tq, H) write; layout matches torch's head concat.
        ctx_ref[0] = jnp.concatenate(parts, axis=-1)

    return kernel


def mha_core(q, k, v, *, num_heads, scale):
    """q: (B, Tq, H) bf16; k, v: (B, S, H) bf16 — projections hoisted in wrapper."""
    B, Tq, H = q.shape
    S = k.shape[1]
    dh = H // num_heads
    return pl.pallas_call(
        _make_attn_kernel(num_heads, dh, scale),
        out_shape=jax.ShapeDtypeStruct((B, Tq, H), jnp.float32),
        grid=(B,),
        in_specs=[
            pl.BlockSpec((1, Tq, H), lambda b: (b, 0, 0)),
            pl.BlockSpec((1, S, H), lambda b: (b, 0, 0)),
            pl.BlockSpec((1, S, H), lambda b: (b, 0, 0)),
        ],
        out_specs=pl.BlockSpec((1, Tq, H), lambda b: (b, 0, 0)),
        compiler_params=pltpu.CompilerParams(
            dimension_semantics=("parallel",),
            vmem_limit_bytes=32 * 1024 * 1024),
    )(q, k, v)


# ---------------------------------------------------------------------------
# Kernel 3: fc(cat(outputs, context)) + log_softmax, class-tiled with online LSE.
# ---------------------------------------------------------------------------
def _fc_logits_kernel(x1_ref, x2_ref, w1_ref, w2_ref, b_ref,
                      logit_ref, lse_ref, m_scr, l_scr):
    c = pl.program_id(1)

    @pl.when(c == 0)
    def _():
        m_scr[...] = jnp.full_like(m_scr, -1e30)
        l_scr[...] = jnp.zeros_like(l_scr)

    z = (jnp.dot(x1_ref[...].astype(w1_ref.dtype), w1_ref[...],
                 preferred_element_type=jnp.float32)
         + jnp.dot(x2_ref[...].astype(w2_ref.dtype), w2_ref[...],
                   preferred_element_type=jnp.float32)
         + b_ref[...])
    logit_ref[...] = z

    m_prev = m_scr[...]
    m_new = jnp.maximum(m_prev, jnp.max(z, axis=-1, keepdims=True))
    l_scr[...] = (l_scr[...] * jnp.exp(m_prev - m_new)
                  + jnp.sum(jnp.exp(z - m_new), axis=-1, keepdims=True))
    m_scr[...] = m_new

    @pl.when(c == pl.num_programs(1) - 1)
    def _():
        lse_ref[...] = m_scr[...] + jnp.log(l_scr[...])


def _logsub_kernel(logit_ref, lse_ref, out_ref):
    out_ref[...] = logit_ref[...] - lse_ref[...]


def fc_logsoftmax(x1, x2, w1, w2, b, *, row_tile=256):
    """x1, x2: (N, H) f32; w1, w2: (H, C) bf16; b: (1, C) f32 -> (N, C) log-probs."""
    N, H = x1.shape
    C = w1.shape[1]
    row_tile = min(row_tile, _round_up(N, 8))
    N_pad = _round_up(N, row_tile)
    C_pad = _round_up(C, 128)
    tc = 512 if C_pad % 512 == 0 else (256 if C_pad % 256 == 0 else 128)
    n_rows, n_ct = N_pad // row_tile, C_pad // tc

    x1p = jnp.pad(x1, ((0, N_pad - N), (0, 0)))
    x2p = jnp.pad(x2, ((0, N_pad - N), (0, 0)))
    w1p = jnp.pad(w1, ((0, 0), (0, C_pad - C)))
    w2p = jnp.pad(w2, ((0, 0), (0, C_pad - C)))
    bp = jnp.pad(b, ((0, 0), (0, C_pad - C)), constant_values=-1e30)  # kill padded cols

    logits, lse = pl.pallas_call(
        _fc_logits_kernel,
        out_shape=(jax.ShapeDtypeStruct((N_pad, C_pad), jnp.float32),
                   jax.ShapeDtypeStruct((N_pad, 1), jnp.float32)),
        grid=(n_rows, n_ct),
        in_specs=[
            pl.BlockSpec((row_tile, H), lambda i, c: (i, 0)),
            pl.BlockSpec((row_tile, H), lambda i, c: (i, 0)),
            pl.BlockSpec((H, tc), lambda i, c: (0, c)),
            pl.BlockSpec((H, tc), lambda i, c: (0, c)),
            pl.BlockSpec((1, tc), lambda i, c: (0, c)),
        ],
        out_specs=(pl.BlockSpec((row_tile, tc), lambda i, c: (i, c)),
                   pl.BlockSpec((row_tile, 1), lambda i, c: (i, 0))),
        scratch_shapes=[pltpu.VMEM((row_tile, 1), jnp.float32),   # running max
                        pltpu.VMEM((row_tile, 1), jnp.float32)],  # running sum
        compiler_params=pltpu.CompilerParams(
            dimension_semantics=("parallel", "arbitrary"),
            vmem_limit_bytes=32 * 1024 * 1024),
    )(x1p, x2p, w1p, w2p, bp)

    out = pl.pallas_call(
        _logsub_kernel,
        out_shape=jax.ShapeDtypeStruct((N_pad, C_pad), jnp.float32),
        grid=(n_rows, n_ct),
        in_specs=[
            pl.BlockSpec((row_tile, tc), lambda i, c: (i, c)),
            pl.BlockSpec((row_tile, 1), lambda i, c: (i, 0)),
        ],
        out_specs=pl.BlockSpec((row_tile, tc), lambda i, c: (i, c)),
        compiler_params=pltpu.CompilerParams(
            dimension_semantics=("parallel", "parallel"),
            vmem_limit_bytes=32 * 1024 * 1024),
    )(logits, lse)
    return out[:N, :C]


# ---------------------------------------------------------------------------
# Parameters (PyTorch layout) + kernel-layout prep (bf16 matmul weights).
# ---------------------------------------------------------------------------
def init_speller_params(key, *, num_classes, hidden_dim, num_layers, num_heads):
    del num_heads  # head count does not change parameter shapes (d_model -> d_model)
    H = hidden_dim
    n_keys = 1 + 4 * num_layers + 6 + 2
    keys = iter(jax.random.split(key, n_keys))

    def uni(k, shape, bound):
        return jax.random.uniform(k, shape, jnp.float32, -bound, bound)

    pt = {"embedding": jax.random.normal(next(keys), (num_classes, H), jnp.float32)}
    kb = 1.0 / math.sqrt(H)
    lstm = []
    for _ in range(num_layers):
        w_ih = uni(next(keys), (4 * H, H), kb)   # Speller: input_size == hidden_size
        w_hh = uni(next(keys), (4 * H, H), kb)
        b_ih = uni(next(keys), (4 * H,), kb)
        b_hh = uni(next(keys), (4 * H,), kb)
        lstm.append((w_ih, w_hh, b_ih, b_hh))
    pt["lstm"] = lstm
    for name in ("q_proj", "k_proj", "v_proj"):
        pt[name] = (uni(next(keys), (H, H), kb), uni(next(keys), (H,), kb))
    kfc = 1.0 / math.sqrt(2 * H)
    pt["fc"] = (uni(next(keys), (num_classes, 2 * H), kfc),
                uni(next(keys), (num_classes,), kfc))
    return pt


def prep_kernel_params(pt, matmul_dtype=jnp.bfloat16):
    """Transpose weights, fold LSTM biases, reorder gates (i,f,g,o)->(i,f,o,g),
    and store all matmul weights in bf16 (biases stay f32)."""
    H = pt["embedding"].shape[1]

    def reorder(m):  # leading axis is the 4H gate axis
        i, f, g, o = jnp.split(m, 4, axis=0)
        return jnp.concatenate([i, f, o, g], axis=0)

    kp = {"embedding": pt["embedding"]}
    lstm = []
    for (w_ih, w_hh, b_ih, b_hh) in pt["lstm"]:
        lstm.append((reorder(w_ih).T.astype(matmul_dtype),       # (D_in, 4H)
                     reorder(w_hh).T.astype(matmul_dtype),       # (H, 4H)
                     reorder(b_ih + b_hh)[None, :]))             # (1, 4H) f32
    kp["lstm"] = lstm
    for name in ("q_proj", "k_proj", "v_proj"):
        w, b = pt[name]
        kp[name] = (w.T.astype(matmul_dtype), b)
    w_fc, b_fc = pt["fc"]
    kp["fc"] = (w_fc[:, :H].T.astype(matmul_dtype),              # split for fused concat
                w_fc[:, H:].T.astype(matmul_dtype),
                b_fc[None, :])
    return kp


# ---------------------------------------------------------------------------
# Speller forward (teacher forcing, eval mode).
# ---------------------------------------------------------------------------
@functools.partial(jax.jit, static_argnames=("num_heads", "time_chunk"))
def speller_forward(params, encoder_outputs, targets, *, num_heads, time_chunk=32):
    H = params["embedding"].shape[1]
    C = params["embedding"].shape[0]
    bf16 = jnp.bfloat16
    # targets end with <eos>; dropping it mirrors targets[targets != eos].view(B,-1)
    dec_inputs = targets[:, :-1]
    B, T = dec_inputs.shape
    S = encoder_outputs.shape[1]

    # --- embedding (gather) + input dropout (identity in eval) --------------
    emb = jnp.take(params["embedding"], dec_inputs, axis=0)            # (B, T, H)

    # --- multi-layer unidirectional LSTM (Pallas recurrence) ----------------
    B_pad = _round_up(B, 8)
    _, B_blk = _batch_split(B_pad)
    tc_eff = _pick_time_chunk(time_chunk, T, B_blk, H)
    T_pad = _round_up(T, tc_eff)
    x = jnp.transpose(emb, (1, 0, 2))                                  # (T, B, H)
    x = jnp.pad(x, ((0, T_pad - T), (0, B_pad - B), (0, 0)))
    for (wih_t, whh_t, bias) in params["lstm"]:
        # Hoisted input projection: one big bf16 matmul per layer, f32 accumulate.
        gx = jnp.einsum("tbd,dg->tbg", x.astype(bf16), wih_t,
                        preferred_element_type=jnp.float32) + bias
        x = lstm_recurrence(gx, whh_t, time_chunk=tc_eff)
        # TODO(synk): inter-layer LSTM dropout (p=0.3) omitted — eval-mode semantics.
    dec_out = jnp.transpose(x[:T, :B], (1, 0, 2))                      # (B, T, H) f32

    # --- multi-head attention over encoder outputs --------------------------
    wq_t, bq = params["q_proj"]
    wk_t, bk = params["k_proj"]
    wv_t, bv = params["v_proj"]
    q = (jnp.einsum("btd,dk->btk", dec_out.astype(bf16), wq_t,
                    preferred_element_type=jnp.float32) + bq).astype(bf16)
    k = (jnp.einsum("bsd,dk->bsk", encoder_outputs.astype(bf16), wk_t,
                    preferred_element_type=jnp.float32) + bk).astype(bf16)
    v = (jnp.einsum("bsd,dk->bsk", encoder_outputs.astype(bf16), wv_t,
                    preferred_element_type=jnp.float32) + bv).astype(bf16)
    # NOTE: scale is 1/sqrt(d_model) (not 1/sqrt(d_head)) to match the reference
    # MultiHeadAttention (self.sqrt_dim = sqrt(d_model)).
    ctx = mha_core(q, k, v, num_heads=num_heads, scale=1.0 / math.sqrt(H))  # (B,T,H) f32

    # --- fc + log_softmax (concat folded into split-weight matmul) ----------
    w1, w2, b_fc = params["fc"]
    N = B * T
    out = fc_logsoftmax(dec_out.reshape(N, H), ctx.reshape(N, H), w1, w2, b_fc)
    return out.reshape(B, T, C)


# ---------------------------------------------------------------------------
# Pure-JAX f32 reference (mirrors Speller.forward, teacher forcing, eval mode).
# ---------------------------------------------------------------------------
def reference_forward(pt, encoder_outputs, targets, *, num_heads):
    emb_w = pt["embedding"]
    H = emb_w.shape[1]
    dec_inputs = targets[:, :-1]
    B, T = dec_inputs.shape
    S = encoder_outputs.shape[1]
    x = emb_w[dec_inputs]
    for (w_ih, w_hh, b_ih, b_hh) in pt["lstm"]:
        def cell(carry, x_t, w_ih=w_ih, w_hh=w_hh, b_ih=b_ih, b_hh=b_hh):
            h, c = carry
            g = x_t @ w_ih.T + b_ih + h @ w_hh.T + b_hh
            i = jax.nn.sigmoid(g[:, :H])
            f = jax.nn.sigmoid(g[:, H:2 * H])
            gg = jnp.tanh(g[:, 2 * H:3 * H])
            o = jax.nn.sigmoid(g[:, 3 * H:])
            c = f * c + i * gg
            h = o * jnp.tanh(c)
            return (h, c), h
        init = (jnp.zeros((B, H), jnp.float32), jnp.zeros((B, H), jnp.float32))
        _, ys = lax.scan(cell, init, jnp.swapaxes(x, 0, 1))
        x = jnp.swapaxes(ys, 0, 1)
    dec_out = x
    (wq, bq), (wk, bk), (wv, bv) = pt["q_proj"], pt["k_proj"], pt["v_proj"]
    q = dec_out @ wq.T + bq
    k = encoder_outputs @ wk.T + bk
    v = encoder_outputs @ wv.T + bv
    dh = H // num_heads
    qh = q.reshape(B, T, num_heads, dh).transpose(2, 0, 1, 3).reshape(num_heads * B, T, dh)
    kh = k.reshape(B, S, num_heads, dh).transpose(2, 0, 1, 3).reshape(num_heads * B, S, dh)
    vh = v.reshape(B, S, num_heads, dh).transpose(2, 0, 1, 3).reshape(num_heads * B, S, dh)
    score = jnp.einsum("btd,bsd->bts", qh, kh) / math.sqrt(H)
    attn = jax.nn.softmax(score, axis=-1)
    ctx = jnp.einsum("bts,bsd->btd", attn, vh)
    ctx = ctx.reshape(num_heads, B, T, dh).transpose(1, 2, 0, 3).reshape(B, T, H)
    w_fc, b_fc = pt["fc"]
    logits = jnp.concatenate([dec_out, ctx], axis=-1) @ w_fc.T + b_fc
    return jax.nn.log_softmax(logits, axis=-1)


if __name__ == "__main__":
    B, S, T = 2, 16, 8                 # batch, encoder length, decoder length
    H, NH, NL, C = 128, 4, 2, 128      # hidden (lane-aligned), heads, layers, classes
    SOS_ID, EOS_ID = 1, 2

    key = jax.random.PRNGKey(0)
    k_enc, k_tgt, k_par = jax.random.split(key, 3)

    encoder_outputs = jax.random.normal(k_enc, (B, S, H), jnp.float32)
    body = jax.random.randint(k_tgt, (B, T - 1), 3, C).astype(jnp.int32)
    targets = jnp.concatenate(
        [jnp.full((B, 1), SOS_ID, jnp.int32), body,
         jnp.full((B, 1), EOS_ID, jnp.int32)], axis=1)        # (B, T+1), ends in <eos>

    pt_params = init_speller_params(k_par, num_classes=C, hidden_dim=H,
                                    num_layers=NL, num_heads=NH)
    kernel_params = prep_kernel_params(pt_params)

    out = speller_forward(kernel_params, encoder_outputs, targets,
                          num_heads=NH, time_chunk=32)
    out = jax.block_until_ready(out)

    assert out.shape == (B, T, C), out.shape
    assert bool(jnp.all(jnp.isfinite(out)))
    # log-probabilities must normalize (lse computed from the same in-kernel logits)
    assert bool(jnp.allclose(jnp.sum(jnp.exp(out), axis=-1), 1.0, atol=2e-3))

    # Parity vs. the f32 reference; tolerance loosened because matmul operands are
    # bf16 (MXU-native on v6e/v7x) while accumulation stays f32.
    ref = reference_forward(pt_params, encoder_outputs, targets, num_heads=NH)
    assert bool(jnp.allclose(out, ref, atol=1e-1, rtol=1e-1)), \
        float(jnp.max(jnp.abs(out - ref)))

    print("KERNEL_OK")
</pallas_src>

<mosaic_0001>
module attributes {stable_mosaic.version = 11 : i64} {
  func.func @kernel(%arg0: i32, %arg1: i32, %arg2: memref<8x8x512xf32, #tpu.memory_space<vmem>>, %arg3: memref<128x512xbf16, #tpu.memory_space<vmem>>, %arg4: memref<8x8x128xf32, #tpu.memory_space<vmem>>, %arg5: memref<8x128xf32, #tpu.memory_space<vmem>>, %arg6: memref<8x128xf32, #tpu.memory_space<vmem>>) attributes {dimension_semantics = [#tpu.dimension_semantics<parallel>, #tpu.dimension_semantics<arbitrary>], iteration_bounds = array<i64: 1, 1>, scalar_prefetch = 0 : i64, scratch_operands = 2 : i64, tpu.core_type = #tpu.core_type<tc>, window_params = [{transform_indices = @transform_0, window_bounds = array<i64: 8, 8, 512>}, {pipeline_mode = #tpu.pipeline_mode<synchronous>, transform_indices = @transform_1, window_bounds = array<i64: 128, 512>}, {transform_indices = @transform_2, window_bounds = array<i64: 8, 8, 128>}]} {
    %c0_i32 = arith.constant 0 : i32
    %0 = arith.cmpi eq, %arg1, %c0_i32 : i32
    %1 = arith.extui %0 : i1 to i32
    %c0_i32_0 = arith.constant 0 : i32
    %2 = arith.cmpi ne, %1, %c0_i32_0 : i32
    scf.if %2 {
      %cst_128 = arith.constant 0.000000e+00 : f32
      %251 = vector.broadcast %cst_128 : f32 to vector<8x128xf32>
      %c0_129 = arith.constant 0 : index
      %c0_130 = arith.constant 0 : index
      %252 = vector.load %arg5[%c0_129, %c0_130] : memref<8x128xf32, #tpu.memory_space<vmem>>, vector<8x128xf32>
      tpu.vector_store %arg5[%c0_129, %c0_130], %251 {strides = array<i32>} : memref<8x128xf32, #tpu.memory_space<vmem>>, vector<8x128xf32>,
      %cst_131 = arith.constant 0.000000e+00 : f32
      %253 = vector.broadcast %cst_131 : f32 to vector<8x128xf32>
      %c0_132 = arith.constant 0 : index
      %c0_133 = arith.constant 0 : index
      %254 = vector.load %arg6[%c0_132, %c0_133] : memref<8x128xf32, #tpu.memory_space<vmem>>, vector<8x128xf32>
      tpu.vector_store %arg6[%c0_132, %c0_133], %253 {strides = array<i32>} : memref<8x128xf32, #tpu.memory_space<vmem>>, vector<8x128xf32>,
    } else {
    }
    %c0_i32_1 = arith.constant 0 : i32
    %c0 = arith.constant 0 : index
    %c0_2 = arith.constant 0 : index
    %3 = vector.load %arg5[%c0, %c0_2] : memref<8x128xf32, #tpu.memory_space<vmem>>, vector<8x128xf32>
    %c0_3 = arith.constant 0 : index
    %c0_4 = arith.constant 0 : index
    %4 = vector.load %arg6[%c0_3, %c0_4] : memref<8x128xf32, #tpu.memory_space<vmem>>, vector<8x128xf32>
    %5 = arith.index_cast %c0_i32_1 : i32 to index
    %c0_5 = arith.constant 0 : index
    %c0_6 = arith.constant 0 : index
    %6 = vector.load %arg2[%5, %c0_5, %c0_6] : memref<8x8x512xf32, #tpu.memory_space<vmem>>, vector<1x8x512xf32>
    %7 = vector.shape_cast %6 : vector<1x8x512xf32> to vector<8x512xf32>
    %8 = arith.truncf %3 : vector<8x128xf32> to vector<8x128xbf16>
    %c0_7 = arith.constant 0 : index
    %c0_8 = arith.constant 0 : index
    %9 = vector.load %arg3[%c0_7, %c0_8] : memref<128x512xbf16, #tpu.memory_space<vmem>>, vector<128x512xbf16>
    %cst = arith.constant dense<0.000000e+00> : vector<8x512xf32>
    %10 = tpu.matmul %8, %9, %cst {dimension_numbers = #tpu.dot_dimension_numbers<[1], [0], [0], [1], [0, 0, 1, 1], [], []>} : vector<8x128xbf16>, vector<128x512xbf16>, vector<8x512xf32> -> vector<8x512xf32>
    %11 = arith.addf %7, %10 : vector<8x512xf32>
    %12 = vector.extract_strided_slice %11 {offsets = [0, 0], sizes = [8, 384], strides = [1, 1]} : vector<8x512xf32> to vector<8x384xf32>
    %13 = arith.negf %12 : vector<8x384xf32>
    %14 = math.exp %13 : vector<8x384xf32>
    %cst_9 = arith.constant 1.000000e+00 : f32
    %15 = vector.broadcast %cst_9 : f32 to vector<8x384xf32>
    %16 = arith.addf %15, %14 : vector<8x384xf32>
    %17 = arith.divf %15, %16 : vector<8x384xf32>
    %18 = vector.extract_strided_slice %17 {offsets = [0, 0], sizes = [8, 128], strides = [1, 1]} : vector<8x384xf32> to vector<8x128xf32>
    %19 = vector.extract_strided_slice %17 {offsets = [0, 128], sizes = [8, 128], strides = [1, 1]} : vector<8x384xf32> to vector<8x128xf32>
    %20 = vector.extract_strided_slice %17 {offsets = [0, 256], sizes = [8, 128], strides = [1, 1]} : vector<8x384xf32> to vector<8x128xf32>
    %21 = vector.extract_strided_slice %11 {offsets = [0, 384], sizes = [8, 128], strides = [1, 1]} : vector<8x512xf32> to vector<8x128xf32>
    %22 = math.tanh %21 : vector<8x128xf32>
    %23 = arith.mulf %19, %4 : vector<8x128xf32>
    %24 = arith.mulf %18, %22 : vector<8x128xf32>
    %25 = arith.addf %23, %24 : vector<8x128xf32>
    %26 = math.tanh %25 : vector<8x128xf32>
    %27 = arith.mulf %20, %26 : vector<8x128xf32>
    %c0_10 = arith.constant 0 : index
    %c0_11 = arith.constant 0 : index
    %28 = vector.load %arg5[%c0_10, %c0_11] : memref<8x128xf32, #tpu.memory_space<vmem>>, vector<8x128xf32>
    tpu.vector_store %arg5[%c0_10, %c0_11], %27 {strides = array<i32>} : memref<8x128xf32, #tpu.memory_space<vmem>>, vector<8x128xf32>,
    %c0_12 = arith.constant 0 : index
    %c0_13 = arith.constant 0 : index
    %29 = vector.load %arg6[%c0_12, %c0_13] : memref<8x128xf32, #tpu.memory_space<vmem>>, vector<8x128xf32>
    tpu.vector_store %arg6[%c0_12, %c0_13], %25 {strides = array<i32>} : memref<8x128xf32, #tpu.memory_space<vmem>>, vector<8x128xf32>,
    %30 = arith.index_cast %c0_i32_1 : i32 to index
    %c0_14 = arith.constant 0 : index
    %c0_15 = arith.constant 0 : index
    %31 = vector.load %arg4[%30, %c0_14, %c0_15] : memref<8x8x128xf32, #tpu.memory_space<vmem>>, vector<1x8x128xf32>
    %32 = vector.shape_cast %31 : vector<1x8x128xf32> to vector<8x128xf32>
    %33 = vector.shape_cast %27 : vector<8x128xf32> to vector<1x8x128xf32>
    tpu.vector_store %arg4[%30, %c0_14, %c0_15], %33 {strides = array<i32>} : memref<8x8x128xf32, #tpu.memory_space<vmem>>, vector<1x8x128xf32>,
    %c1_i32 = arith.constant 1 : i32
    %c0_16 = arith.constant 0 : index
    %c0_17 = arith.constant 0 : index
    %34 = vector.load %arg5[%c0_16, %c0_17] : memref<8x128xf32, #tpu.memory_space<vmem>>, vector<8x128xf32>
    %c0_18 = arith.constant 0 : index
    %c0_19 = arith.constant 0 : index
    %35 = vector.load %arg6[%c0_18, %c0_19] : memref<8x128xf32, #tpu.memory_space<vmem>>, vector<8x128xf32>
    %36 = arith.index_cast %c1_i32 : i32 to index
    %c0_20 = arith.constant 0 : index
    %c0_21 = arith.constant 0 : index
    %37 = vector.load %arg2[%36, %c0_20, %c0_21] : memref<8x8x512xf32, #tpu.memory_space<vmem>>, vector<1x8x512xf32>
    %38 = vector.shape_cast %37 : vector<1x8x512xf32> to vector<8x512xf32>
    %39 = arith.truncf %34 : vector<8x128xf32> to vector<8x128xbf16>
    %c0_22 = arith.constant 0 : index
    %c0_23 = arith.constant 0 : index
    %40 = vector.load %arg3[%c0_22, %c0_23] : memref<128x512xbf16, #tpu.memory_space<vmem>>, vector<128x512xbf16>
    %cst_24 = arith.constant dense<0.000000e+00> : vector<8x512xf32>
    %41 = tpu.matmul %39, %40, %cst_24 {dimension_numbers = #tpu.dot_dimension_numbers<[1], [0], [0], [1], [0, 0, 1, 1], [], []>} : vector<8x128xbf16>, vector<128x512xbf16>, vector<8x512xf32> -> vector<8x512xf32>
    %42 = arith.addf %38, %41 : vector<8x512xf32>
    %43 = vector.extract_strided_slice %42 {offsets = [0, 0], sizes = [8, 384], strides = [1, 1]} : vector<8x512xf32> to vector<8x384xf32>
    %44 = arith.negf %43 : vector<8x384xf32>
    %45 = math.exp %44 : vector<8x384xf32>
    %cst_25 = arith.constant 1.000000e+00 : f32
    %46 = vector.broadcast %cst_25 : f32 to vector<8x384xf32>
    %47 = arith.addf %46, %45 : vector<8x384xf32>
    %48 = arith.divf %46, %47 : vector<8x384xf32>
    %49 = vector.extract_strided_slice %48 {offsets = [0, 0], sizes = [8, 128], strides = [1, 1]} : vector<8x384xf32> to vector<8x128xf32>
    %50 = vector.extract_strided_slice %48 {offsets = [0, 128], sizes = [8, 128], strides = [1, 1]} : vector<8x384xf32> to vector<8x128xf32>
    %51 = vector.extract_strided_slice %48 {offsets = [0, 256], sizes = [8, 128], strides = [1, 1]} : vector<8x384xf32> to vector<8x128xf32>
    %52 = vector.extract_strided_slice %42 {offsets = [0, 384], sizes = [8, 128], strides = [1, 1]} : vector<8x512xf32> to vector<8x128xf32>
    %53 = math.tanh %52 : vector<8x128xf32>
    %54 = arith.mulf %50, %35 : vector<8x128xf32>
    %55 = arith.mulf %49, %53 : vector<8x128xf32>
    %56 = arith.addf %54, %55 : vector<8x128xf32>
    %57 = math.tanh %56 : vector<8x128xf32>
    %58 = arith.mulf %51, %57 : vector<8x128xf32>
    %c0_26 = arith.constant 0 : index
    %c0_27 = arith.constant 0 : index
    %59 = vector.load %arg5[%c0_26, %c0_27] : memref<8x128xf32, #tpu.memory_space<vmem>>, vector<8x128xf32>
    tpu.vector_store %arg5[%c0_26, %c0_27], %58 {strides = array<i32>} : memref<8x128xf32, #tpu.memory_space<vmem>>, vector<8x128xf32>,
    %c0_28 = arith.constant 0 : index
    %c0_29 = arith.constant 0 : index
    %60 = vector.load %arg6[%c0_28, %c0_29] : memref<8x128xf32, #tpu.memory_space<vmem>>, vector<8x128xf32>
    tpu.vector_store %arg6[%c0_28, %c0_29], %56 {strides = array<i32>} : memref<8x128xf32, #tpu.memory_space<vmem>>, vector<8x128xf32>,
    %61 = arith.index_cast %c1_i32 : i32 to index
    %c0_30 = arith.constant 0 : index
    %c0_31 = arith.constant 0 : index
    %62 = vector.load %arg4[%61, %c0_30, %c0_31] : memref<8x8x128xf32, #tpu.memory_space<vmem>>, vector<1x8x128xf32>
    %63 = vector.shape_cast %62 : vector<1x8x128xf32> to vector<8x128xf32>
    %64 = vector.shape_cast %58 : vector<8x128xf32> to vector<1x8x128xf32>
    tpu.vector_store %arg4[%61, %c0_30, %c0_31], %64 {strides = array<i32>} : memref<8x8x128xf32, #tpu.memory_space<vmem>>, vector<1x8x128xf32>,
    %c2_i32 = arith.constant 2 : i32
    %c0_32 = arith.constant 0 : index
    %c0_33 = arith.constant 0 : index
    %65 = vector.load %arg5[%c0_32, %c0_33] : memref<8x128xf32, #tpu.memory_space<vmem>>, vector<8x128xf32>
    %c0_34 = arith.constant 0 : index
    %c0_35 = arith.constant 0 : index
    %66 = vector.load %arg6[%c0_34, %c0_35] : memref<8x128xf32, #tpu.memory_space<vmem>>, vector<8x128xf32>
    %67 = arith.index_cast %c2_i32 : i32 to index
    %c0_36 = arith.constant 0 : index
    %c0_37 = arith.constant 0 : index
    %68 = vector.load %arg2[%67, %c0_36, %c0_37] : memref<8x8x512xf32, #tpu.memory_space<vmem>>, vector<1x8x512xf32>
    %69 = vector.shape_cast %68 : vector<1x8x512xf32> to vector<8x512xf32>
    %70 = arith.truncf %65 : vector<8x128xf32> to vector<8x128xbf16>
    %c0_38 = arith.constant 0 : index
    %c0_39 = arith.constant 0 : index
    %71 = vector.load %arg3[%c0_38, %c0_39] : memref<128x512xbf16, #tpu.memory_space<vmem>>, vector<128x512xbf16>
    %cst_40 = arith.constant dense<0.000000e+00> : vector<8x512xf32>
    %72 = tpu.matmul %70, %71, %cst_40 {dimension_numbers = #tpu.dot_dimension_numbers<[1], [0], [0], [1], [0, 0, 1, 1], [], []>} : vector<8x128xbf16>, vector<128x512xbf16>, vector<8x512xf32> -> vector<8x512xf32>
    %73 = arith.addf %69, %72 : vector<8x512xf32>
    %74 = vector.extract_strided_slice %73 {offsets = [0, 0], sizes = [8, 384], strides = [1, 1]} : vector<8x512xf32> to vector<8x384xf32>
    %75 = arith.negf %74 : vector<8x384xf32>
    %76 = math.exp %75 : vector<8x384xf32>
    %cst_41 = arith.constant 1.000000e+00 : f32
    %77 = vector.broadcast %cst_41 : f32 to vector<8x384xf32>
    %78 = arith.addf %77, %76 : vector<8x384xf32>
    %79 = arith.divf %77, %78 : vector<8x384xf32>
    %80 = vector.extract_strided_slice %79 {offsets = [0, 0], sizes = [8, 128], strides = [1, 1]} : vector<8x384xf32> to vector<8x128xf32>
    %81 = vector.extract_strided_slice %79 {offsets = [0, 128], sizes = [8, 128], strides = [1, 1]} : vector<8x384xf32> to vector<8x128xf32>
    %82 = vector.extract_strided_slice %79 {offsets = [0, 256], sizes = [8, 128], strides = [1, 1]} : vector<8x384xf32> to vector<8x128xf32>
    %83 = vector.extract_strided_slice %73 {offsets = [0, 384], sizes = [8, 128], strides = [1, 1]} : vector<8x512xf32> to vector<8x128xf32>
    %84 = math.tanh %83 : vector<8x128xf32>
    %85 = arith.mulf %81, %66 : vector<8x128xf32>
    %86 = arith.mulf %80, %84 : vector<8x128xf32>
    %87 = arith.addf %85, %86 : vector<8x128xf32>
    %88 = math.tanh %87 : vector<8x128xf32>
    %89 = arith.mulf %82, %88 : vector<8x128xf32>
    %c0_42 = arith.constant 0 : index
    %c0_43 = arith.constant 0 : index
    %90 = vector.load %arg5[%c0_42, %c0_43] : memref<8x128xf32, #tpu.memory_space<vmem>>, vector<8x128xf32>
    tpu.vector_store %arg5[%c0_42, %c0_43], %89 {strides = array<i32>} : memref<8x128xf32, #tpu.memory_space<vmem>>, vector<8x128xf32>,
    %c0_44 = arith.constant 0 : index
    %c0_45 = arith.constant 0 : index
    %91 = vector.load %arg6[%c0_44, %c0_45] : memref<8x128xf32, #tpu.memory_space<vmem>>, vector<8x128xf32>
    tpu.vector_store %arg6[%c0_44, %c0_45], %87 {strides = array<i32>} : memref<8x128xf32, #tpu.memory_space<vmem>>, vector<8x128xf32>,
    %92 = arith.index_cast %c2_i32 : i32 to index
    %c0_46 = arith.constant 0 : index
    %c0_47 = arith.constant 0 : index
    %93 = vector.load %arg4[%92, %c0_46, %c0_47] : memref<8x8x128xf32, #tpu.memory_space<vmem>>, vector<1x8x128xf32>
    %94 = vector.shape_cast %93 : vector<1x8x128xf32> to vector<8x128xf32>
    %95 = vector.shape_cast %89 : vector<8x128xf32> to vector<1x8x128xf32>
    tpu.vector_store %arg4[%92, %c0_46, %c0_47], %95 {strides = array<i32>} : memref<8x8x128xf32, #tpu.memory_space<vmem>>, vector<1x8x128xf32>,
    %c3_i32 = arith.constant 3 : i32
    %c0_48 = arith.constant 0 : index
    %c0_49 = arith.constant 0 : index
    %96 = vector.load %arg5[%c0_48, %c0_49] : memref<8x128xf32, #tpu.memory_space<vmem>>, vector<8x128xf32>
    %c0_50 = arith.constant 0 : index
    %c0_51 = arith.constant 0 : index
    %97 = vector.load %arg6[%c0_50, %c0_51] : memref<8x128xf32, #tpu.memory_space<vmem>>, vector<8x128xf32>
    %98 = arith.index_cast %c3_i32 : i32 to index
    %c0_52 = arith.constant 0 : index
    %c0_53 = arith.constant 0 : index
    %99 = vector.load %arg2[%98, %c0_52, %c0_53] : memref<8x8x512xf32, #tpu.memory_space<vmem>>, vector<1x8x512xf32>
    %100 = vector.shape_cast %99 : vector<1x8x512xf32> to vector<8x512xf32>
    %101 = arith.truncf %96 : vector<8x128xf32> to vector<8x128xbf16>
    %c0_54 = arith.constant 0 : index
    %c0_55 = arith.constant 0 : index
    %102 = vector.load %arg3[%c0_54, %c0_55] : memref<128x512xbf16, #tpu.memory_space<vmem>>, vector<128x512xbf16>
    %cst_56 = arith.constant dense<0.000000e+00> : vector<8x512xf32>
    %103 = tpu.matmul %101, %102, %cst_56 {dimension_numbers = #tpu.dot_dimension_numbers<[1], [0], [0], [1], [0, 0, 1, 1], [], []>} : vector<8x128xbf16>, vector<128x512xbf16>, vector<8x512xf32> -> vector<8x512xf32>
    %104 = arith.addf %100, %103 : vector<8x512xf32>
    %105 = vector.extract_strided_slice %104 {offsets = [0, 0], sizes = [8, 384], strides = [1, 1]} : vector<8x512xf32> to vector<8x384xf32>
    %106 = arith.negf %105 : vector<8x384xf32>
    %107 = math.exp %106 : vector<8x384xf32>
    %cst_57 = arith.constant 1.000000e+00 : f32
    %108 = vector.broadcast %cst_57 : f32 to vector<8x384xf32>
    %109 = arith.addf %108, %107 : vector<8x384xf32>
    %110 = arith.divf %108, %109 : vector<8x384xf32>
    %111 = vector.extract_strided_slice %110 {offsets = [0, 0], sizes = [8, 128], strides = [1, 1]} : vector<8x384xf32> to vector<8x128xf32>
    %112 = vector.extract_strided_slice %110 {offsets = [0, 128], sizes = [8, 128], strides = [1, 1]} : vector<8x384xf32> to vector<8x128xf32>
    %113 = vector.extract_strided_slice %110 {offsets = [0, 256], sizes = [8, 128], strides = [1, 1]} : vector<8x384xf32> to vector<8x128xf32>
    %114 = vector.extract_strided_slice %104 {offsets = [0, 384], sizes = [8, 128], strides = [1, 1]} : vector<8x512xf32> to vector<8x128xf32>
    %115 = math.tanh %114 : vector<8x128xf32>
    %116 = arith.mulf %112, %97 : vector<8x128xf32>
    %117 = arith.mulf %111, %115 : vector<8x128xf32>
    %118 = arith.addf %116, %117 : vector<8x128xf32>
    %119 = math.tanh %118 : vector<8x128xf32>
    %120 = arith.mulf %113, %119 : vector<8x128xf32>
    %c0_58 = arith.constant 0 : index
    %c0_59 = arith.constant 0 : index
    %121 = vector.load %arg5[%c0_58, %c0_59] : memref<8x128xf32, #tpu.memory_space<vmem>>, vector<8x128xf32>
    tpu.vector_store %arg5[%c0_58, %c0_59], %120 {strides = array<i32>} : memref<8x128xf32, #tpu.memory_space<vmem>>, vector<8x128xf32>,
    %c0_60 = arith.constant 0 : index
    %c0_61 = arith.constant 0 : index
    %122 = vector.load %arg6[%c0_60, %c0_61] : memref<8x128xf32, #tpu.memory_space<vmem>>, vector<8x128xf32>
    tpu.vector_store %arg6[%c0_60, %c0_61], %118 {strides = array<i32>} : memref<8x128xf32, #tpu.memory_space<vmem>>, vector<8x128xf32>,
    %123 = arith.index_cast %c3_i32 : i32 to index
    %c0_62 = arith.constant 0 : index
    %c0_63 = arith.constant 0 : index
    %124 = vector.load %arg4[%123, %c0_62, %c0_63] : memref<8x8x128xf32, #tpu.memory_space<vmem>>, vector<1x8x128xf32>
    %125 = vector.shape_cast %124 : vector<1x8x128xf32> to vector<8x128xf32>
    %126 = vector.shape_cast %120 : vector<8x128xf32> to vector<1x8x128xf32>
    tpu.vector_store %arg4[%123, %c0_62, %c0_63], %126 {strides = array<i32>} : memref<8x8x128xf32, #tpu.memory_space<vmem>>, vector<1x8x128xf32>,
    %c4_i32 = arith.constant 4 : i32
    %c0_64 = arith.constant 0 : index
    %c0_65 = arith.constant 0 : index
    %127 = vector.load %arg5[%c0_64, %c0_65] : memref<8x128xf32, #tpu.memory_space<vmem>>, vector<8x128xf32>
    %c0_66 = arith.constant 0 : index
    %c0_67 = arith.constant 0 : index
    %128 = vector.load %arg6[%c0_66, %c0_67] : memref<8x128xf32, #tpu.memory_space<vmem>>, vector<8x128xf32>
    %129 = arith.index_cast %c4_i32 : i32 to index
    %c0_68 = arith.constant 0 : index
    %c0_69 = arith.constant 0 : index
    %130 = vector.load %arg2[%129, %c0_68, %c0_69] : memref<8x8x512xf32, #tpu.memory_space<vmem>>, vector<1x8x512xf32>
    %131 = vector.shape_cast %130 : vector<1x8x512xf32> to vector<8x512xf32>
    %132 = arith.truncf %127 : vector<8x128xf32> to vector<8x128xbf16>
    %c0_70 = arith.constant 0 : index
    %c0_71 = arith.constant 0 : index
    %133 = vector.load %arg3[%c0_70, %c0_71] : memref<128x512xbf16, #tpu.memory_space<vmem>>, vector<128x512xbf16>
    %cst_72 = arith.constant dense<0.000000e+00> : vector<8x512xf32>
    %134 = tpu.matmul %132, %133, %cst_72 {dimension_numbers = #tpu.dot_dimension_numbers<[1], [0], [0], [1], [0, 0, 1, 1], [], []>} : vector<8x128xbf16>, vector<128x512xbf16>, vector<8x512xf32> -> vector<8x512xf32>
    %135 = arith.addf %131, %134 : vector<8x512xf32>
    %136 = vector.extract_strided_slice %135 {offsets = [0, 0], sizes = [8, 384], strides = [1, 1]} : vector<8x512xf32> to vector<8x384xf32>
    %137 = arith.negf %136 : vector<8x384xf32>
    %138 = math.exp %137 : vector<8x384xf32>
    %cst_73 = arith.constant 1.000000e+00 : f32
    %139 = vector.broadcast %cst_73 : f32 to vector<8x384xf32>
    %140 = arith.addf %139, %138 : vector<8x384xf32>
    %141 = arith.divf %139, %140 : vector<8x384xf32>
    %142 = vector.extract_strided_slice %141 {offsets = [0, 0], sizes = [8, 128], strides = [1, 1]} : vector<8x384xf32> to vector<8x128xf32>
    %143 = vector.extract_strided_slice %141 {offsets = [0, 128], sizes = [8, 128], strides = [1, 1]} : vector<8x384xf32> to vector<8x128xf32>
    %144 = vector.extract_strided_slice %141 {offsets = [0, 256], sizes = [8, 128], strides = [1, 1]} : vector<8x384xf32> to vector<8x128xf32>
    %145 = vector.extract_strided_slice %135 {offsets = [0, 384], sizes = [8, 128], strides = [1, 1]} : vector<8x512xf32> to vector<8x128xf32>
    %146 = math.tanh %145 : vector<8x128xf32>
    %147 = arith.mulf %143, %128 : vector<8x128xf32>
    %148 = arith.mulf %142, %146 : vector<8x128xf32>
    %149 = arith.addf %147, %148 : vector<8x128xf32>
    %150 = math.tanh %149 : vector<8x128xf32>
    %151 = arith.mulf %144, %150 : vector<8x128xf32>
    %c0_74 = arith.constant 0 : index
    %c0_75 = arith.constant 0 : index
    %152 = vector.load %arg5[%c0_74, %c0_75] : memref<8x128xf32, #tpu.memory_space<vmem>>, vector<8x128xf32>
    tpu.vector_store %arg5[%c0_74, %c0_75], %151 {strides = array<i32>} : memref<8x128xf32, #tpu.memory_space<vmem>>, vector<8x128xf32>,
    %c0_76 = arith.constant 0 : index
    %c0_77 = arith.constant 0 : index
    %153 = vector.load %arg6[%c0_76, %c0_77] : memref<8x128xf32, #tpu.memory_space<vmem>>, vector<8x128xf32>
    tpu.vector_store %arg6[%c0_76, %c0_77], %149 {strides = array<i32>} : memref<8x128xf32, #tpu.memory_space<vmem>>, vector<8x128xf32>,
    %154 = arith.index_cast %c4_i32 : i32 to index
    %c0_78 = arith.constant 0 : index
    %c0_79 = arith.constant 0 : index
    %155 = vector.load %arg4[%154, %c0_78, %c0_79] : memref<8x8x128xf32, #tpu.memory_space<vmem>>, vector<1x8x128xf32>
    %156 = vector.shape_cast %155 : vector<1x8x128xf32> to vector<8x128xf32>
    %157 = vector.shape_cast %151 : vector<8x128xf32> to vector<1x8x128xf32>
    tpu.vector_store %arg4[%154, %c0_78, %c0_79], %157 {strides = array<i32>} : memref<8x8x128xf32, #tpu.memory_space<vmem>>, vector<1x8x128xf32>,
    %c5_i32 = arith.constant 5 : i32
    %c0_80 = arith.constant 0 : index
    %c0_81 = arith.constant 0 : index
    %158 = vector.load %arg5[%c0_80, %c0_81] : memref<8x128xf32, #tpu.memory_space<vmem>>, vector<8x128xf32>
    %c0_82 = arith.constant 0 : index
    %c0_83 = arith.constant 0 : index
    %159 = vector.load %arg6[%c0_82, %c0_83] : memref<8x128xf32, #tpu.memory_space<vmem>>, vector<8x128xf32>
    %160 = arith.index_cast %c5_i32 : i32 to index
    %c0_84 = arith.constant 0 : index
    %c0_85 = arith.constant 0 : index
    %161 = vector.load %arg2[%160, %c0_84, %c0_85] : memref<8x8x512xf32, #tpu.memory_space<vmem>>, vector<1x8x512xf32>
    %162 = vector.shape_cast %161 : vector<1x8x512xf32> to vector<8x512xf32>
    %163 = arith.truncf %158 : vector<8x128xf32> to vector<8x128xbf16>
    %c0_86 = arith.constant 0 : index
    %c0_87 = arith.constant 0 : index
    %164 = vector.load %arg3[%c0_86, %c0_87] : memref<128x512xbf16, #tpu.memory_space<vmem>>, vector<128x512xbf16>
    %cst_88 = arith.constant dense<0.000000e+00> : vector<8x512xf32>
    %165 = tpu.matmul %163, %164, %cst_88 {dimension_numbers = #tpu.dot_dimension_numbers<[1], [0], [0], [1], [0, 0, 1, 1], [], []>} : vector<8x128xbf16>, vector<128x512xbf16>, vector<8x512xf32> -> vector<8x512xf32>
    %166 = arith.addf %162, %165 : vector<8x512xf32>
    %167 = vector.extract_strided_slice %166 {offsets = [0, 0], sizes = [8, 384], strides = [1, 1]} : vector<8x512xf32> to vector<8x384xf32>
    %168 = arith.negf %167 : vector<8x384xf32>
    %169 = math.exp %168 : vector<8x384xf32>
    %cst_89 = arith.constant 1.000000e+00 : f32
    %170 = vector.broadcast %cst_89 : f32 to vector<8x384xf32>
    %171 = arith.addf %170, %169 : vector<8x384xf32>
    %172 = arith.divf %170, %171 : vector<8x384xf32>
    %173 = vector.extract_strided_slice %172 {offsets = [0, 0], sizes = [8, 128], strides = [1, 1]} : vector<8x384xf32> to vector<8x128xf32>
    %174 = vector.extract_strided_slice %172 {offsets = [0, 128], sizes = [8, 128], strides = [1, 1]} : vector<8x384xf32> to vector<8x128xf32>
    %175 = vector.extract_strided_slice %172 {offsets = [0, 256], sizes = [8, 128], strides = [1, 1]} : vector<8x384xf32> to vector<8x128xf32>
    %176 = vector.extract_strided_slice %166 {offsets = [0, 384], sizes = [8, 128], strides = [1, 1]} : vector<8x512xf32> to vector<8x128xf32>
    %177 = math.tanh %176 : vector<8x128xf32>
    %178 = arith.mulf %174, %159 : vector<8x128xf32>
    %179 = arith.mulf %173, %177 : vector<8x128xf32>
    %180 = arith.addf %178, %179 : vector<8x128xf32>
    %181 = math.tanh %180 : vector<8x128xf32>
    %182 = arith.mulf %175, %181 : vector<8x128xf32>
    %c0_90 = arith.constant 0 : index
    %c0_91 = arith.constant 0 : index
    %183 = vector.load %arg5[%c0_90, %c0_91] : memref<8x128xf32, #tpu.memory_space<vmem>>, vector<8x128xf32>
    tpu.vector_store %arg5[%c0_90, %c0_91], %182 {strides = array<i32>} : memref<8x128xf32, #tpu.memory_space<vmem>>, vector<8x128xf32>,
    %c0_92 = arith.constant 0 : index
    %c0_93 = arith.constant 0 : index
    %184 = vector.load %arg6[%c0_92, %c0_93] : memref<8x128xf32, #tpu.memory_space<vmem>>, vector<8x128xf32>
    tpu.vector_store %arg6[%c0_92, %c0_93], %180 {strides = array<i32>} : memref<8x128xf32, #tpu.memory_space<vmem>>, vector<8x128xf32>,
    %185 = arith.index_cast %c5_i32 : i32 to index
    %c0_94 = arith.constant 0 : index
    %c0_95 = arith.constant 0 : index
    %186 = vector.load %arg4[%185, %c0_94, %c0_95] : memref<8x8x128xf32, #tpu.memory_space<vmem>>, vector<1x8x128xf32>
    %187 = vector.shape_cast %186 : vector<1x8x128xf32> to vector<8x128xf32>
    %188 = vector.shape_cast %182 : vector<8x128xf32> to vector<1x8x128xf32>
    tpu.vector_store %arg4[%185, %c0_94, %c0_95], %188 {strides = array<i32>} : memref<8x8x128xf32, #tpu.memory_space<vmem>>, vector<1x8x128xf32>,
    %c6_i32 = arith.constant 6 : i32
    %c0_96 = arith.constant 0 : index
    %c0_97 = arith.constant 0 : index
    %189 = vector.load %arg5[%c0_96, %c0_97] : memref<8x128xf32, #tpu.memory_space<vmem>>, vector<8x128xf32>
    %c0_98 = arith.constant 0 : index
    %c0_99 = arith.constant 0 : index
    %190 = vector.load %arg6[%c0_98, %c0_99] : memref<8x128xf32, #tpu.memory_space<vmem>>, vector<8x128xf32>
    %191 = arith.index_cast %c6_i32 : i32 to index
    %c0_100 = arith.constant 0 : index
    %c0_101 = arith.constant 0 : index
    %192 = vector.load %arg2[%191, %c0_100, %c0_101] : memref<8x8x512xf32, #tpu.memory_space<vmem>>, vector<1x8x512xf32>
    %193 = vector.shape_cast %192 : vector<1x8x512xf32> to vector<8x512xf32>
    %194 = arith.truncf %189 : vector<8x128xf32> to vector<8x128xbf16>
    %c0_102 = arith.constant 0 : index
    %c0_103 = arith.constant 0 : index
    %195 = vector.load %arg3[%c0_102, %c0_103] : memref<128x512xbf16, #tpu.memory_space<vmem>>, vector<128x512xbf16>
    %cst_104 = arith.constant dense<0.000000e+00> : vector<8x512xf32>
    %196 = tpu.matmul %194, %195, %cst_104 {dimension_numbers = #tpu.dot_dimension_numbers<[1], [0], [0], [1], [0, 0, 1, 1], [], []>} : vector<8x128xbf16>, vector<128x512xbf16>, vector<8x512xf32> -> vector<8x512xf32>
    %197 = arith.addf %193, %196 : vector<8x512xf32>
    %198 = vector.extract_strided_slice %197 {offsets = [0, 0], sizes = [8, 384], strides = [1, 1]} : vector<8x512xf32> to vector<8x384xf32>
    %199 = arith.negf %198 : vector<8x384xf32>
    %200 = math.exp %199 : vector<8x384xf32>
    %cst_105 = arith.constant 1.000000e+00 : f32
    %201 = vector.broadcast %cst_105 : f32 to vector<8x384xf32>
    %202 = arith.addf %201, %200 : vector<8x384xf32>
    %203 = arith.divf %201, %202 : vector<8x384xf32>
    %204 = vector.extract_strided_slice %203 {offsets = [0, 0], sizes = [8, 128], strides = [1, 1]} : vector<8x384xf32> to vector<8x128xf32>
    %205 = vector.extract_strided_slice %203 {offsets = [0, 128], sizes = [8, 128], strides = [1, 1]} : vector<8x384xf32> to vector<8x128xf32>
    %206 = vector.extract_strided_slice %203 {offsets = [0, 256], sizes = [8, 128], strides = [1, 1]} : vector<8x384xf32> to vector<8x128xf32>
    %207 = vector.extract_strided_slice %197 {offsets = [0, 384], sizes = [8, 128], strides = [1, 1]} : vector<8x512xf32> to vector<8x128xf32>
    %208 = math.tanh %207 : vector<8x128xf32>
    %209 = arith.mulf %205, %190 : vector<8x128xf32>
    %210 = arith.mulf %204, %208 : vector<8x128xf32>
    %211 = arith.addf %209, %210 : vector<8x128xf32>
    %212 = math.tanh %211 : vector<8x128xf32>
    %213 = arith.mulf %206, %212 : vector<8x128xf32>
    %c0_106 = arith.constant 0 : index
    %c0_107 = arith.constant 0 : index
    %214 = vector.load %arg5[%c0_106, %c0_107] : memref<8x128xf32, #tpu.memory_space<vmem>>, vector<8x128xf32>
    tpu.vector_store %arg5[%c0_106, %c0_107], %213 {strides = array<i32>} : memref<8x128xf32, #tpu.memory_space<vmem>>, vector<8x128xf32>,
    %c0_108 = arith.constant 0 : index
    %c0_109 = arith.constant 0 : index
    %215 = vector.load %arg6[%c0_108, %c0_109] : memref<8x128xf32, #tpu.memory_space<vmem>>, vector<8x128xf32>
    tpu.vector_store %arg6[%c0_108, %c0_109], %211 {strides = array<i32>} : memref<8x128xf32, #tpu.memory_space<vmem>>, vector<8x128xf32>,
    %216 = arith.index_cast %c6_i32 : i32 to index
    %c0_110 = arith.constant 0 : index
    %c0_111 = arith.constant 0 : index
    %217 = vector.load %arg4[%216, %c0_110, %c0_111] : memref<8x8x128xf32, #tpu.memory_space<vmem>>, vector<1x8x128xf32>
    %218 = vector.shape_cast %217 : vector<1x8x128xf32> to vector<8x128xf32>
    %219 = vector.shape_cast %213 : vector<8x128xf32> to vector<1x8x128xf32>
    tpu.vector_store %arg4[%216, %c0_110, %c0_111], %219 {strides = array<i32>} : memref<8x8x128xf32, #tpu.memory_space<vmem>>, vector<1x8x128xf32>,
    %c7_i32 = arith.constant 7 : i32
    %c0_112 = arith.constant 0 : index
    %c0_113 = arith.constant 0 : index
    %220 = vector.load %arg5[%c0_112, %c0_113] : memref<8x128xf32, #tpu.memory_space<vmem>>, vector<8x128xf32>
    %c0_114 = arith.constant 0 : index
    %c0_115 = arith.constant 0 : index
    %221 = vector.load %arg6[%c0_114, %c0_115] : memref<8x128xf32, #tpu.memory_space<vmem>>, vector<8x128xf32>
    %222 = arith.index_cast %c7_i32 : i32 to index
    %c0_116 = arith.constant 0 : index
    %c0_117 = arith.constant 0 : index
    %223 = vector.load %arg2[%222, %c0_116, %c0_117] : memref<8x8x512xf32, #tpu.memory_space<vmem>>, vector<1x8x512xf32>
    %224 = vector.shape_cast %223 : vector<1x8x512xf32> to vector<8x512xf32>
    %225 = arith.truncf %220 : vector<8x128xf32> to vector<8x128xbf16>
    %c0_118 = arith.constant 0 : index
    %c0_119 = arith.constant 0 : index
    %226 = vector.load %arg3[%c0_118, %c0_119] : memref<128x512xbf16, #tpu.memory_space<vmem>>, vector<128x512xbf16>
    %cst_120 = arith.constant dense<0.000000e+00> : vector<8x512xf32>
    %227 = tpu.matmul %225, %226, %cst_120 {dimension_numbers = #tpu.dot_dimension_numbers<[1], [0], [0], [1], [0, 0, 1, 1], [], []>} : vector<8x128xbf16>, vector<128x512xbf16>, vector<8x512xf32> -> vector<8x512xf32>
    %228 = arith.addf %224, %227 : vector<8x512xf32>
    %229 = vector.extract_strided_slice %228 {offsets = [0, 0], sizes = [8, 384], strides = [1, 1]} : vector<8x512xf32> to vector<8x384xf32>
    %230 = arith.negf %229 : vector<8x384xf32>
    %231 = math.exp %230 : vector<8x384xf32>
    %cst_121 = arith.constant 1.000000e+00 : f32
    %232 = vector.broadcast %cst_121 : f32 to vector<8x384xf32>
    %233 = arith.addf %232, %231 : vector<8x384xf32>
    %234 = arith.divf %232, %233 : vector<8x384xf32>
    %235 = vector.extract_strided_slice %234 {offsets = [0, 0], sizes = [8, 128], strides = [1, 1]} : vector<8x384xf32> to vector<8x128xf32>
    %236 = vector.extract_strided_slice %234 {offsets = [0, 128], sizes = [8, 128], strides = [1, 1]} : vector<8x384xf32> to vector<8x128xf32>
    %237 = vector.extract_strided_slice %234 {offsets = [0, 256], sizes = [8, 128], strides = [1, 1]} : vector<8x384xf32> to vector<8x128xf32>
    %238 = vector.extract_strided_slice %228 {offsets = [0, 384], sizes = [8, 128], strides = [1, 1]} : vector<8x512xf32> to vector<8x128xf32>
    %239 = math.tanh %238 : vector<8x128xf32>
    %240 = arith.mulf %236, %221 : vector<8x128xf32>
    %241 = arith.mulf %235, %239 : vector<8x128xf32>
    %242 = arith.addf %240, %241 : vector<8x128xf32>
    %243 = math.tanh %242 : vector<8x128xf32>
    %244 = arith.mulf %237, %243 : vector<8x128xf32>
    %c0_122 = arith.constant 0 : index
    %c0_123 = arith.constant 0 : index
    %245 = vector.load %arg5[%c0_122, %c0_123] : memref<8x128xf32, #tpu.memory_space<vmem>>, vector<8x128xf32>
    tpu.vector_store %arg5[%c0_122, %c0_123], %244 {strides = array<i32>} : memref<8x128xf32, #tpu.memory_space<vmem>>, vector<8x128xf32>,
    %c0_124 = arith.constant 0 : index
    %c0_125 = arith.constant 0 : index
    %246 = vector.load %arg6[%c0_124, %c0_125] : memref<8x128xf32, #tpu.memory_space<vmem>>, vector<8x128xf32>
    tpu.vector_store %arg6[%c0_124, %c0_125], %242 {strides = array<i32>} : memref<8x128xf32, #tpu.memory_space<vmem>>, vector<8x128xf32>,
    %247 = arith.index_cast %c7_i32 : i32 to index
    %c0_126 = arith.constant 0 : index
    %c0_127 = arith.constant 0 : index
    %248 = vector.load %arg4[%247, %c0_126, %c0_127] : memref<8x8x128xf32, #tpu.memory_space<vmem>>, vector<1x8x128xf32>
    %249 = vector.shape_cast %248 : vector<1x8x128xf32> to vector<8x128xf32>
    %250 = vector.shape_cast %244 : vector<8x128xf32> to vector<1x8x128xf32>
    tpu.vector_store %arg4[%247, %c0_126, %c0_127], %250 {strides = array<i32>} : memref<8x8x128xf32, #tpu.memory_space<vmem>>, vector<1x8x128xf32>,
    %c8_i32 = arith.constant 8 : i32
    return
  }
  func.func @transform_0(%arg0: i32, %arg1: i32) -> (i32, i32, i32) {
    %c0_i32 = arith.constant 0 : i32
    %c0_i32_0 = arith.constant 0 : i32
    return %arg1, %arg0, %c0_i32 : i32, i32, i32
  }
  func.func @transform_1(%arg0: i32, %arg1: i32) -> (i32, i32) {
    %c0_i32 = arith.constant 0 : i32
    %c0_i32_0 = arith.constant 0 : i32
    %c0_i32_1 = arith.constant 0 : i32
    return %c0_i32, %c0_i32_0 : i32, i32
  }
  func.func @transform_2(%arg0: i32, %arg1: i32) -> (i32, i32, i32) {
    %c0_i32 = arith.constant 0 : i32
    %c0_i32_0 = arith.constant 0 : i32
    return %arg1, %arg0, %c0_i32 : i32, i32, i32
  }
}

module attributes {stable_mosaic.version = 11 : i64} {
  func.func @_fc_logits_kernel(%arg0: i32, %arg1: i32, %arg2: memref<16x128xf32, #tpu.memory_space<vmem>>, %arg3: memref<16x128xf32, #tpu.memory_space<vmem>>, %arg4: memref<128x128xbf16, #tpu.memory_space<vmem>>, %arg5: memref<128x128xbf16, #tpu.memory_space<vmem>>, %arg6: memref<1x128xf32, #tpu.memory_space<vmem>>, %arg7: memref<16x128xf32, #tpu.memory_space<vmem>>, %arg8: memref<16x1xf32, #tpu.memory_space<vmem>>, %arg9: memref<16x1xf32, #tpu.memory_space<vmem>>, %arg10: memref<16x1xf32, #tpu.memory_space<vmem>>) attributes {dimension_semantics = [#tpu.dimension_semantics<parallel>, #tpu.dimension_semantics<arbitrary>], iteration_bounds = array<i64: 1, 1>, scalar_prefetch = 0 : i64, scratch_operands = 2 : i64, tpu.core_type = #tpu.core_type<tc>, window_params = [{transform_indices = @transform_0, window_bounds = array<i64: 16, 128>}, {transform_indices = @transform_1, window_bounds = array<i64: 16, 128>}, {transform_indices = @transform_2, window_bounds = array<i64: 128, 128>}, {transform_indices = @transform_3, window_bounds = array<i64: 128, 128>}, {transform_indices = @transform_4, window_bounds = array<i64: 1, 128>}, {transform_indices = @transform_5, window_bounds = array<i64: 16, 128>}, {transform_indices = @transform_6, window_bounds = array<i64: 16, 1>}]} {
    %c0_i32 = arith.constant 0 : i32
    %0 = arith.cmpi eq, %arg1, %c0_i32 : i32
    %1 = arith.extui %0 : i1 to i32
    %c0_i32_0 = arith.constant 0 : i32
    %2 = arith.cmpi ne, %1, %c0_i32_0 : i32
    scf.if %2 {
      %cst_25 = arith.constant -1.000000e+30 : f32
      %35 = vector.broadcast %cst_25 : f32 to vector<16x1xf32>
      %c0_26 = arith.constant 0 : index
      %c0_27 = arith.constant 0 : index
      %36 = vector.load %arg9[%c0_26, %c0_27] : memref<16x1xf32, #tpu.memory_space<vmem>>, vector<16x1xf32>
      tpu.vector_store %arg9[%c0_26, %c0_27], %35 {strides = array<i32>} : memref<16x1xf32, #tpu.memory_space<vmem>>, vector<16x1xf32>,
      %cst_28 = arith.constant 0.000000e+00 : f32
      %37 = vector.broadcast %cst_28 : f32 to vector<16x1xf32>
      %c0_29 = arith.constant 0 : index
      %c0_30 = arith.constant 0 : index
      %38 = vector.load %arg10[%c0_29, %c0_30] : memref<16x1xf32, #tpu.memory_space<vmem>>, vector<16x1xf32>
      tpu.vector_store %arg10[%c0_29, %c0_30], %37 {strides = array<i32>} : memref<16x1xf32, #tpu.memory_space<vmem>>, vector<16x1xf32>,
    } else {
    }
    %c0 = arith.constant 0 : index
    %c0_1 = arith.constant 0 : index
    %3 = vector.load %arg2[%c0, %c0_1] : memref<16x128xf32, #tpu.memory_space<vmem>>, vector<16x128xf32>
    %4 = arith.truncf %3 : vector<16x128xf32> to vector<16x128xbf16>
    %c0_2 = arith.constant 0 : index
    %c0_3 = arith.constant 0 : index
    %5 = vector.load %arg4[%c0_2, %c0_3] : memref<128x128xbf16, #tpu.memory_space<vmem>>, vector<128x128xbf16>
    %cst = arith.constant dense<0.000000e+00> : vector<16x128xf32>
    %6 = tpu.matmul %4, %5, %cst {dimension_numbers = #tpu.dot_dimension_numbers<[1], [0], [0], [1], [0, 0, 1, 1], [], []>} : vector<16x128xbf16>, vector<128x128xbf16>, vector<16x128xf32> -> vector<16x128xf32>
    %c0_4 = arith.constant 0 : index
    %c0_5 = arith.constant 0 : index
    %7 = vector.load %arg3[%c0_4, %c0_5] : memref<16x128xf32, #tpu.memory_space<vmem>>, vector<16x128xf32>
    %8 = arith.truncf %7 : vector<16x128xf32> to vector<16x128xbf16>
    %c0_6 = arith.constant 0 : index
    %c0_7 = arith.constant 0 : index
    %9 = vector.load %arg5[%c0_6, %c0_7] : memref<128x128xbf16, #tpu.memory_space<vmem>>, vector<128x128xbf16>
    %cst_8 = arith.constant dense<0.000000e+00> : vector<16x128xf32>
    %10 = tpu.matmul %8, %9, %cst_8 {dimension_numbers = #tpu.dot_dimension_numbers<[1], [0], [0], [1], [0, 0, 1, 1], [], []>} : vector<16x128xbf16>, vector<128x128xbf16>, vector<16x128xf32> -> vector<16x128xf32>
    %11 = arith.addf %6, %10 : vector<16x128xf32>
    %c0_9 = arith.constant 0 : index
    %c0_10 = arith.constant 0 : index
    %12 = vector.load %arg6[%c0_9, %c0_10] : memref<1x128xf32, #tpu.memory_space<vmem>>, vector<1x128xf32>
    %13 = vector.broadcast %12 : vector<1x128xf32> to vector<16x128xf32>
    %14 = arith.addf %11, %13 : vector<16x128xf32>
    %c0_11 = arith.constant 0 : index
    %c0_12 = arith.constant 0 : index
    %15 = vector.load %arg7[%c0_11, %c0_12] : memref<16x128xf32, #tpu.memory_space<vmem>>, vector<16x128xf32>
    tpu.vector_store %arg7[%c0_11, %c0_12], %14 {strides = array<i32>} : memref<16x128xf32, #tpu.memory_space<vmem>>, vector<16x128xf32>,
    %c0_13 = arith.constant 0 : index
    %c0_14 = arith.constant 0 : index
    %16 = vector.load %arg9[%c0_13, %c0_14] : memref<16x1xf32, #tpu.memory_space<vmem>>, vector<16x1xf32>
    %cst_15 = arith.constant dense<0xFF800000> : vector<16xf32>
    %17 = vector.multi_reduction <maximumf>, %14, %cst_15 [1] : vector<16x128xf32> to vector<16xf32>
    %18 = vector.shape_cast %17 : vector<16xf32> to vector<16x1xf32>
    %19 = arith.maximumf %16, %18 : vector<16x1xf32>
    %c0_16 = arith.constant 0 : index
    %c0_17 = arith.constant 0 : index
    %20 = vector.load %arg10[%c0_16, %c0_17] : memref<16x1xf32, #tpu.memory_space<vmem>>, vector<16x1xf32>
    %21 = arith.subf %16, %19 : vector<16x1xf32>
    %22 = math.exp %21 : vector<16x1xf32>
    %23 = arith.mulf %20, %22 : vector<16x1xf32>
    %24 = vector.broadcast %19 : vector<16x1xf32> to vector<16x128xf32>
    %25 = arith.subf %14, %24 : vector<16x128xf32>
    %26 = math.exp %25 : vector<16x128xf32>
    %cst_18 = arith.constant dense<0.000000e+00> : vector<16xf32>
    %27 = vector.multi_reduction <add>, %26, %cst_18 [1] : vector<16x128xf32> to vector<16xf32>
    %28 = vector.shape_cast %27 : vector<16xf32> to vector<16x1xf32>
    %29 = arith.addf %23, %28 : vector<16x1xf32>
    %c0_19 = arith.constant 0 : index
    %c0_20 = arith.constant 0 : index
    %30 = vector.load %arg10[%c0_19, %c0_20] : memref<16x1xf32, #tpu.memory_space<vmem>>, vector<16x1xf32>
    tpu.vector_store %arg10[%c0_19, %c0_20], %29 {strides = array<i32>} : memref<16x1xf32, #tpu.memory_space<vmem>>, vector<16x1xf32>,
    %c0_21 = arith.constant 0 : index
    %c0_22 = arith.constant 0 : index
    %31 = vector.load %arg9[%c0_21, %c0_22] : memref<16x1xf32, #tpu.memory_space<vmem>>, vector<16x1xf32>
    tpu.vector_store %arg9[%c0_21, %c0_22], %19 {strides = array<i32>} : memref<16x1xf32, #tpu.memory_space<vmem>>, vector<16x1xf32>,
    %c0_i32_23 = arith.constant 0 : i32
    %32 = arith.cmpi eq, %arg1, %c0_i32_23 : i32
    %33 = arith.extui %32 : i1 to i32
    %c0_i32_24 = arith.constant 0 : i32
    %34 = arith.cmpi ne, %33, %c0_i32_24 : i32
    scf.if %34 {
      %c0_25 = arith.constant 0 : index
      %c0_26 = arith.constant 0 : index
      %35 = vector.load %arg9[%c0_25, %c0_26] : memref<16x1xf32, #tpu.memory_space<vmem>>, vector<16x1xf32>
      %c0_27 = arith.constant 0 : index
      %c0_28 = arith.constant 0 : index
      %36 = vector.load %arg10[%c0_27, %c0_28] : memref<16x1xf32, #tpu.memory_space<vmem>>, vector<16x1xf32>
      %37 = math.log %36 : vector<16x1xf32>
      %38 = arith.addf %35, %37 : vector<16x1xf32>
      %c0_29 = arith.constant 0 : index
      %c0_30 = arith.constant 0 : index
      %39 = vector.load %arg8[%c0_29, %c0_30] : memref<16x1xf32, #tpu.memory_space<vmem>>, vector<16x1xf32>
      tpu.vector_store %arg8[%c0_29, %c0_30], %38 {strides = array<i32>} : memref<16x1xf32, #tpu.memory_space<vmem>>, vector<16x1xf32>,
    } else {
    }
    return
  }
  func.func @transform_0(%arg0: i32, %arg1: i32) -> (i32, i32) {
    %c0_i32 = arith.constant 0 : i32
    %c0_i32_0 = arith.constant 0 : i32
    return %arg0, %c0_i32 : i32, i32
  }
  func.func @transform_1(%arg0: i32, %arg1: i32) -> (i32, i32) {
    %c0_i32 = arith.constant 0 : i32
    %c0_i32_0 = arith.constant 0 : i32
    return %arg0, %c0_i32 : i32, i32
  }
  func.func @transform_2(%arg0: i32, %arg1: i32) -> (i32, i32) {
    %c0_i32 = arith.constant 0 : i32
    %c0_i32_0 = arith.constant 0 : i32
    return %c0_i32, %arg1 : i32, i32
  }
  func.func @transform_3(%arg0: i32, %arg1: i32) -> (i32, i32) {
    %c0_i32 = arith.constant 0 : i32
    %c0_i32_0 = arith.constant 0 : i32
    return %c0_i32, %arg1 : i32, i32
  }
  func.func @transform_4(%arg0: i32, %arg1: i32) -> (i32, i32) {
    %c0_i32 = arith.constant 0 : i32
    %c0_i32_0 = arith.constant 0 : i32
    return %c0_i32, %arg1 : i32, i32
  }
  func.func @transform_5(%arg0: i32, %arg1: i32) -> (i32, i32) {
    %c0_i32 = arith.constant 0 : i32
    return %arg0, %arg1 : i32, i32
  }
  func.func @transform_6(%arg0: i32, %arg1: i32) -> (i32, i32) {
    %c0_i32 = arith.constant 0 : i32
    %c0_i32_0 = arith.constant 0 : i32
    return %arg0, %c0_i32 : i32, i32
  }
}

module attributes {stable_mosaic.version = 11 : i64} {
  func.func @_logsub_kernel(%arg0: i32, %arg1: i32, %arg2: memref<16x128xf32, #tpu.memory_space<vmem>>, %arg3: memref<16x1xf32, #tpu.memory_space<vmem>>, %arg4: memref<16x128xf32, #tpu.memory_space<vmem>>) attributes {dimension_semantics = [#tpu.dimension_semantics<parallel>, #tpu.dimension_semantics<parallel>], iteration_bounds = array<i64: 1, 1>, scalar_prefetch = 0 : i64, scratch_operands = 0 : i64, tpu.core_type = #tpu.core_type<tc>, window_params = [{transform_indices = @transform_0, window_bounds = array<i64: 16, 128>}, {transform_indices = @transform_1, window_bounds = array<i64: 16, 1>}, {transform_indices = @transform_2, window_bounds = array<i64: 16, 128>}]} {
    %c0 = arith.constant 0 : index
    %c0_0 = arith.constant 0 : index
    %0 = vector.load %arg2[%c0, %c0_0] : memref<16x128xf32, #tpu.memory_space<vmem>>, vector<16x128xf32>
    %c0_1 = arith.constant 0 : index
    %c0_2 = arith.constant 0 : index
    %1 = vector.load %arg3[%c0_1, %c0_2] : memref<16x1xf32, #tpu.memory_space<vmem>>, vector<16x1xf32>
    %2 = vector.broadcast %1 : vector<16x1xf32> to vector<16x128xf32>
    %3 = arith.subf %0, %2 : vector<16x128xf32>
    %c0_3 = arith.constant 0 : index
    %c0_4 = arith.constant 0 : index
    %4 = vector.load %arg4[%c0_3, %c0_4] : memref<16x128xf32, #tpu.memory_space<vmem>>, vector<16x128xf32>
    tpu.vector_store %arg4[%c0_3, %c0_4], %3 {strides = array<i32>} : memref<16x128xf32, #tpu.memory_space<vmem>>, vector<16x128xf32>,
    return
  }
  func.func @transform_0(%arg0: i32, %arg1: i32) -> (i32, i32) {
    %c0_i32 = arith.constant 0 : i32
    return %arg0, %arg1 : i32, i32
  }
  func.func @transform_1(%arg0: i32, %arg1: i32) -> (i32, i32) {
    %c0_i32 = arith.constant 0 : i32
    %c0_i32_0 = arith.constant 0 : i32
    return %arg0, %c0_i32 : i32, i32
  }
  func.func @transform_2(%arg0: i32, %arg1: i32) -> (i32, i32) {
    %c0_i32 = arith.constant 0 : i32
    return %arg0, %arg1 : i32, i32
  }
}

module attributes {stable_mosaic.version = 11 : i64} {
  func.func @kernel(%arg0: i32, %arg1: memref<1x8x128xbf16, #tpu.memory_space<vmem>>, %arg2: memref<1x16x128xbf16, #tpu.memory_space<vmem>>, %arg3: memref<1x16x128xbf16, #tpu.memory_space<vmem>>, %arg4: memref<1x8x128xf32, #tpu.memory_space<vmem>>) attributes {dimension_semantics = [#tpu.dimension_semantics<parallel>], iteration_bounds = array<i64: 2>, scalar_prefetch = 0 : i64, scratch_operands = 0 : i64, tpu.core_type = #tpu.core_type<tc>, window_params = [{transform_indices = @transform_0, window_bounds = array<i64: 1, 8, 128>}, {transform_indices = @transform_1, window_bounds = array<i64: 1, 16, 128>}, {transform_indices = @transform_2, window_bounds = array<i64: 1, 16, 128>}, {transform_indices = @transform_3, window_bounds = array<i64: 1, 8, 128>}]} {
    %c0 = arith.constant 0 : index
    %c0_0 = arith.constant 0 : index
    %c0_1 = arith.constant 0 : index
    %0 = vector.load %arg1[%c0, %c0_0, %c0_1] : memref<1x8x128xbf16, #tpu.memory_space<vmem>>, vector<1x8x128xbf16>
    %1 = vector.shape_cast %0 : vector<1x8x128xbf16> to vector<8x128xbf16>
    %c0_2 = arith.constant 0 : index
    %c0_3 = arith.constant 0 : index
    %c0_4 = arith.constant 0 : index
    %2 = vector.load %arg2[%c0_2, %c0_3, %c0_4] : memref<1x16x128xbf16, #tpu.memory_space<vmem>>, vector<1x16x128xbf16>
    %3 = vector.shape_cast %2 : vector<1x16x128xbf16> to vector<16x128xbf16>
    %c0_5 = arith.constant 0 : index
    %c0_6 = arith.constant 0 : index
    %c0_7 = arith.constant 0 : index
    %4 = vector.load %arg3[%c0_5, %c0_6, %c0_7] : memref<1x16x128xbf16, #tpu.memory_space<vmem>>, vector<1x16x128xbf16>
    %5 = vector.shape_cast %4 : vector<1x16x128xbf16> to vector<16x128xbf16>
    %6 = vector.extract_strided_slice %1 {offsets = [0, 0], sizes = [8, 32], strides = [1, 1]} : vector<8x128xbf16> to vector<8x32xbf16>
    %7 = vector.extract_strided_slice %3 {offsets = [0, 0], sizes = [16, 32], strides = [1, 1]} : vector<16x128xbf16> to vector<16x32xbf16>
    %8 = vector.extract_strided_slice %5 {offsets = [0, 0], sizes = [16, 32], strides = [1, 1]} : vector<16x128xbf16> to vector<16x32xbf16>
    %cst = arith.constant dense<0.000000e+00> : vector<8x16xf32>
    %9 = tpu.matmul %6, %7, %cst {dimension_numbers = #tpu.dot_dimension_numbers<[1], [1], [0], [0], [0, 0, 1, 0], [], []>} : vector<8x32xbf16>, vector<16x32xbf16>, vector<8x16xf32> -> vector<8x16xf32>
    %cst_8 = arith.constant 0.0883883461 : f32
    %10 = vector.broadcast %cst_8 : f32 to vector<8x16xf32>
    %11 = arith.mulf %9, %10 : vector<8x16xf32>
    %cst_9 = arith.constant dense<0xFF800000> : vector<8xf32>
    %12 = vector.multi_reduction <maximumf>, %11, %cst_9 [1] : vector<8x16xf32> to vector<8xf32>
    %13 = vector.shape_cast %12 : vector<8xf32> to vector<8x1xf32>
    %14 = vector.broadcast %13 : vector<8x1xf32> to vector<8x16xf32>
    %15 = arith.subf %11, %14 : vector<8x16xf32>
    %16 = math.exp %15 : vector<8x16xf32>
    %cst_10 = arith.constant dense<0.000000e+00> : vector<8xf32>
    %17 = vector.multi_reduction <add>, %16, %cst_10 [1] : vector<8x16xf32> to vector<8xf32>
    %18 = vector.shape_cast %17 : vector<8xf32> to vector<8x1xf32>
    %19 = tpu.reciprocal %18 {approx = true} : vector<8x1xf32> -> vector<8x1xf32>
    %20 = vector.broadcast %19 : vector<8x1xf32> to vector<8x16xf32>
    %21 = arith.mulf %16, %20 : vector<8x16xf32>
    %22 = arith.truncf %21 : vector<8x16xf32> to vector<8x16xbf16>
    %cst_11 = arith.constant dense<0.000000e+00> : vector<8x32xf32>
    %23 = tpu.matmul %22, %8, %cst_11 {dimension_numbers = #tpu.dot_dimension_numbers<[1], [0], [0], [1], [0, 0, 1, 1], [], []>} : vector<8x16xbf16>, vector<16x32xbf16>, vector<8x32xf32> -> vector<8x32xf32>
    %24 = vector.extract_strided_slice %1 {offsets = [0, 32], sizes = [8, 32], strides = [1, 1]} : vector<8x128xbf16> to vector<8x32xbf16>
    %25 = vector.extract_strided_slice %3 {offsets = [0, 32], sizes = [16, 32], strides = [1, 1]} : vector<16x128xbf16> to vector<16x32xbf16>
    %26 = vector.extract_strided_slice %5 {offsets = [0, 32], sizes = [16, 32], strides = [1, 1]} : vector<16x128xbf16> to vector<16x32xbf16>
    %cst_12 = arith.constant dense<0.000000e+00> : vector<8x16xf32>
    %27 = tpu.matmul %24, %25, %cst_12 {dimension_numbers = #tpu.dot_dimension_numbers<[1], [1], [0], [0], [0, 0, 1, 0], [], []>} : vector<8x32xbf16>, vector<16x32xbf16>, vector<8x16xf32> -> vector<8x16xf32>
    %cst_13 = arith.constant 0.0883883461 : f32
    %28 = vector.broadcast %cst_13 : f32 to vector<8x16xf32>
    %29 = arith.mulf %27, %28 : vector<8x16xf32>
    %cst_14 = arith.constant dense<0xFF800000> : vector<8xf32>
    %30 = vector.multi_reduction <maximumf>, %29, %cst_14 [1] : vector<8x16xf32> to vector<8xf32>
    %31 = vector.shape_cast %30 : vector<8xf32> to vector<8x1xf32>
    %32 = vector.broadcast %31 : vector<8x1xf32> to vector<8x16xf32>
    %33 = arith.subf %29, %32 : vector<8x16xf32>
    %34 = math.exp %33 : vector<8x16xf32>
    %cst_15 = arith.constant dense<0.000000e+00> : vector<8xf32>
    %35 = vector.multi_reduction <add>, %34, %cst_15 [1] : vector<8x16xf32> to vector<8xf32>
    %36 = vector.shape_cast %35 : vector<8xf32> to vector<8x1xf32>
    %37 = tpu.reciprocal %36 {approx = true} : vector<8x1xf32> -> vector<8x1xf32>
    %38 = vector.broadcast %37 : vector<8x1xf32> to vector<8x16xf32>
    %39 = arith.mulf %34, %38 : vector<8x16xf32>
    %40 = arith.truncf %39 : vector<8x16xf32> to vector<8x16xbf16>
    %cst_16 = arith.constant dense<0.000000e+00> : vector<8x32xf32>
    %41 = tpu.matmul %40, %26, %cst_16 {dimension_numbers = #tpu.dot_dimension_numbers<[1], [0], [0], [1], [0, 0, 1, 1], [], []>} : vector<8x16xbf16>, vector<16x32xbf16>, vector<8x32xf32> -> vector<8x32xf32>
    %42 = vector.extract_strided_slice %1 {offsets = [0, 64], sizes = [8, 32], strides = [1, 1]} : vector<8x128xbf16> to vector<8x32xbf16>
    %43 = vector.extract_strided_slice %3 {offsets = [0, 64], sizes = [16, 32], strides = [1, 1]} : vector<16x128xbf16> to vector<16x32xbf16>
    %44 = vector.extract_strided_slice %5 {offsets = [0, 64], sizes = [16, 32], strides = [1, 1]} : vector<16x128xbf16> to vector<16x32xbf16>
    %cst_17 = arith.constant dense<0.000000e+00> : vector<8x16xf32>
    %45 = tpu.matmul %42, %43, %cst_17 {dimension_numbers = #tpu.dot_dimension_numbers<[1], [1], [0], [0], [0, 0, 1, 0], [], []>} : vector<8x32xbf16>, vector<16x32xbf16>, vector<8x16xf32> -> vector<8x16xf32>
    %cst_18 = arith.constant 0.0883883461 : f32
    %46 = vector.broadcast %cst_18 : f32 to vector<8x16xf32>
    %47 = arith.mulf %45, %46 : vector<8x16xf32>
    %cst_19 = arith.constant dense<0xFF800000> : vector<8xf32>
    %48 = vector.multi_reduction <maximumf>, %47, %cst_19 [1] : vector<8x16xf32> to vector<8xf32>
    %49 = vector.shape_cast %48 : vector<8xf32> to vector<8x1xf32>
    %50 = vector.broadcast %49 : vector<8x1xf32> to vector<8x16xf32>
    %51 = arith.subf %47, %50 : vector<8x16xf32>
    %52 = math.exp %51 : vector<8x16xf32>
    %cst_20 = arith.constant dense<0.000000e+00> : vector<8xf32>
    %53 = vector.multi_reduction <add>, %52, %cst_20 [1] : vector<8x16xf32> to vector<8xf32>
    %54 = vector.shape_cast %53 : vector<8xf32> to vector<8x1xf32>
    %55 = tpu.reciprocal %54 {approx = true} : vector<8x1xf32> -> vector<8x1xf32>
    %56 = vector.broadcast %55 : vector<8x1xf32> to vector<8x16xf32>
    %57 = arith.mulf %52, %56 : vector<8x16xf32>
    %58 = arith.truncf %57 : vector<8x16xf32> to vector<8x16xbf16>
    %cst_21 = arith.constant dense<0.000000e+00> : vector<8x32xf32>
    %59 = tpu.matmul %58, %44, %cst_21 {dimension_numbers = #tpu.dot_dimension_numbers<[1], [0], [0], [1], [0, 0, 1, 1], [], []>} : vector<8x16xbf16>, vector<16x32xbf16>, vector<8x32xf32> -> vector<8x32xf32>
    %60 = vector.extract_strided_slice %1 {offsets = [0, 96], sizes = [8, 32], strides = [1, 1]} : vector<8x128xbf16> to vector<8x32xbf16>
    %61 = vector.extract_strided_slice %3 {offsets = [0, 96], sizes = [16, 32], strides = [1, 1]} : vector<16x128xbf16> to vector<16x32xbf16>
    %62 = vector.extract_strided_slice %5 {offsets = [0, 96], sizes = [16, 32], strides = [1, 1]} : vector<16x128xbf16> to vector<16x32xbf16>
    %cst_22 = arith.constant dense<0.000000e+00> : vector<8x16xf32>
    %63 = tpu.matmul %60, %61, %cst_22 {dimension_numbers = #tpu.dot_dimension_numbers<[1], [1], [0], [0], [0, 0, 1, 0], [], []>} : vector<8x32xbf16>, vector<16x32xbf16>, vector<8x16xf32> -> vector<8x16xf32>
    %cst_23 = arith.constant 0.0883883461 : f32
    %64 = vector.broadcast %cst_23 : f32 to vector<8x16xf32>
    %65 = arith.mulf %63, %64 : vector<8x16xf32>
    %cst_24 = arith.constant dense<0xFF800000> : vector<8xf32>
    %66 = vector.multi_reduction <maximumf>, %65, %cst_24 [1] : vector<8x16xf32> to vector<8xf32>
    %67 = vector.shape_cast %66 : vector<8xf32> to vector<8x1xf32>
    %68 = vector.broadcast %67 : vector<8x1xf32> to vector<8x16xf32>
    %69 = arith.subf %65, %68 : vector<8x16xf32>
    %70 = math.exp %69 : vector<8x16xf32>
    %cst_25 = arith.constant dense<0.000000e+00> : vector<8xf32>
    %71 = vector.multi_reduction <add>, %70, %cst_25 [1] : vector<8x16xf32> to vector<8xf32>
    %72 = vector.shape_cast %71 : vector<8xf32> to vector<8x1xf32>
    %73 = tpu.reciprocal %72 {approx = true} : vector<8x1xf32> -> vector<8x1xf32>
    %74 = vector.broadcast %73 : vector<8x1xf32> to vector<8x16xf32>
    %75 = arith.mulf %70, %74 : vector<8x16xf32>
    %76 = arith.truncf %75 : vector<8x16xf32> to vector<8x16xbf16>
    %cst_26 = arith.constant dense<0.000000e+00> : vector<8x32xf32>
    %77 = tpu.matmul %76, %62, %cst_26 {dimension_numbers = #tpu.dot_dimension_numbers<[1], [0], [0], [1], [0, 0, 1, 1], [], []>} : vector<8x16xbf16>, vector<16x32xbf16>, vector<8x32xf32> -> vector<8x32xf32>
    %78 = tpu.concatenate %23, %41, %59, %77 in 1 : vector<8x32xf32>, vector<8x32xf32>, vector<8x32xf32>, vector<8x32xf32> -> vector<8x128xf32>
    %c0_27 = arith.constant 0 : index
    %c0_28 = arith.constant 0 : index
    %c0_29 = arith.constant 0 : index
    %79 = vector.load %arg4[%c0_27, %c0_28, %c0_29] : memref<1x8x128xf32, #tpu.memory_space<vmem>>, vector<1x8x128xf32>
    %80 = vector.shape_cast %79 : vector<1x8x128xf32> to vector<8x128xf32>
    %81 = vector.shape_cast %78 : vector<8x128xf32> to vector<1x8x128xf32>
    tpu.vector_store %arg4[%c0_27, %c0_28, %c0_29], %81 {strides = array<i32>} : memref<1x8x128xf32, #tpu.memory_space<vmem>>, vector<1x8x128xf32>,
    return
  }
  func.func @transform_0(%arg0: i32) -> (i32, i32, i32) {
    %c0_i32 = arith.constant 0 : i32
    %c0_i32_0 = arith.constant 0 : i32
    %c0_i32_1 = arith.constant 0 : i32
    return %arg0, %c0_i32, %c0_i32_0 : i32, i32, i32
  }
  func.func @transform_1(%arg0: i32) -> (i32, i32, i32) {
    %c0_i32 = arith.constant 0 : i32
    %c0_i32_0 = arith.constant 0 : i32
    %c0_i32_1 = arith.constant 0 : i32
    return %arg0, %c0_i32, %c0_i32_0 : i32, i32, i32
  }
  func.func @transform_2(%arg0: i32) -> (i32, i32, i32) {
    %c0_i32 = arith.constant 0 : i32
    %c0_i32_0 = arith.constant 0 : i32
    %c0_i32_1 = arith.constant 0 : i32
    return %arg0, %c0_i32, %c0_i32_0 : i32, i32, i32
  }
  func.func @transform_3(%arg0: i32) -> (i32, i32, i32) {
    %c0_i32 = arith.constant 0 : i32
    %c0_i32_0 = arith.constant 0 : i32
    %c0_i32_1 = arith.constant 0 : i32
    return %arg0, %c0_i32, %c0_i32_0 : i32, i32, i32
  }
}

</mosaic_0001>

<llo_original>
// kernel: speller_forward.9
$region0: #{speller_forward.9}
  #allocation0 [shape = 'u32[]', space=smem, size = 0x4, offset = 0x4, fixed_abs, tag = 'smem constant byte address 0x4 - core index']
  #allocation1 [shape = 'u32[144,128]{1,0:T(1,128)}', space=vmem, size = 0x12000, scoped, tag = 'internal scratch']
  %s0 = inlined_call_operand.vmem [shape: f32[16,128], index: 0, kind: input, shape index: {}]
  %s1 = inlined_call_operand.vmem [shape: f32[16,1], index: 1, kind: input, shape index: {}]
  %s2 = inlined_call_operand.hbm [shape: f32[16,128], index: 2, kind: output, shape index: {}]
  %s3 = sld [smem:[#allocation0]]
  $region18: #{speller_forward.9} parent=0
    _
  %s5 = ssub.s32 1, %s3
  %s6 = scalar_select 0, %s5, %s3
  $region1: #{speller_forward.9} parent=0
    #allocation2 [shape = 'u8[8192]{0}', space=vmem, size = 0x2000, scoped, tag = 'output window, operand 0, single buffered']
    #allocation3 [shape = 's32[1]{0}', space=sflag, size = 0x4, scoped, tag = 'scoped memory for speller_forward.9']
    %7 = vsyncpa [#allocation3], 0
    // Predicated region
    $region2: #{speller_forward.9} parent=1 // pred_check
      _
    $region3: #{speller_forward.9} parent=1 // pred_check_branch
      %9 = sbr.rel (0) target = $region5
    $region4: #{speller_forward.9} parent=1 // pred_region
      _
    $region5: #{speller_forward.9} parent=1 // pred_fallthru
      _
    // Predicated region
    $region6: #{speller_forward.9} parent=1 // pred_check
      _
    $region7: #{speller_forward.9} parent=1 // pred_check_branch
      %11 = sbr.rel (0) target = $region9
    $region8: #{speller_forward.9} parent=1 // pred_region
      _
    $region9: #{speller_forward.9} parent=1 // pred_fallthru
      _
    %v12 = vld [vmem:[%s0] sm:$0xff]
    %v13 = vld [vmem:[%s0 + $0x8] sm:$0xff]
    %v14 = vld [vmem:[%s1] sm:$0xff]
    %v15 = vld [vmem:[%s1 + $0x8] sm:$0xff]
    %17 = vset.pattern.permute.xlu0 0
    %18 = vperm.xlu0 %17, %v14
    %v19 = vpop.permute.xlu0 %18
    %22 = vset.pattern.permute.xlu0 0
    %23 = vperm.xlu0 %22, %v15
    %v24 = vpop.permute.xlu0 %23
    %v26 = vsub.f32 %v12, %v19
    %v27 = vsub.f32 %v13, %v24
    %28 = vst [vmem:[#allocation2] sm:$0xff] %v26
    %29 = vst [vmem:[#allocation2 + $0x8] sm:$0xff] %v27
    // Predicated region
    $region10: #{speller_forward.9} parent=1 // pred_check
      _
    $region11: #{speller_forward.9} parent=1 // pred_check_branch
      %31 = sbr.rel (0) target = $region13
    $region12: #{speller_forward.9} parent=1 // pred_region
      %s33 = ssub.s32 256, 256
      %34 = vsyncadd [#allocation3], %s33
      %s35 = sshll.u32 [#allocation2], 4
      %s36 = int_to_ptr.vmem [resolvable:$true] %s35
      %41 = dma.vmem_to_hbm [thread:$0]  %s36, 256, %s2, [#allocation3], 128, 128, 8
    $region13: #{speller_forward.9} parent=1 // pred_fallthru
      _
    // Predicated region
    $region14: #{speller_forward.9} parent=1 // pred_check
      _
    $region15: #{speller_forward.9} parent=1 // pred_check_branch
      %43 = sbr.rel (0) target = $region17
    $region16: #{speller_forward.9} parent=1 // pred_region
      %44 = dma.done [#allocation3], 256
    $region17: #{speller_forward.9} parent=1 // pred_fallthru
      _
    %45 = vsyncpa [#allocation3], 1

// kernel: speller_forward.8
$region0: #{speller_forward.8}
  #allocation0 [shape = 'u32[]', space=smem, size = 0x4, offset = 0x4, fixed_abs, tag = 'smem constant byte address 0x4 - core index']
  #allocation1 [shape = 'u32[144,128]{1,0:T(1,128)}', space=vmem, size = 0x12000, scoped, tag = 'internal scratch']
  #allocation2 [shape = 'f32[16,1]{1,0:T(8,128)}', space=vmem, size = 0x2000, scoped, tag = 'scratch operand']
  #allocation3 [shape = 'f32[16,1]{1,0:T(8,128)}', space=vmem, size = 0x2000, scoped, tag = 'scratch operand']
  %s0 = inlined_call_operand.vmem [shape: f32[16,128], index: 0, kind: input, shape index: {}]
  %s1 = inlined_call_operand.vmem [shape: f32[16,128], index: 1, kind: input, shape index: {}]
  %s2 = inlined_call_operand.vmem [shape: bf16[128,128], index: 2, kind: input, shape index: {}]
  %s3 = inlined_call_operand.vmem [shape: bf16[128,128], index: 3, kind: input, shape index: {}]
  %s4 = inlined_call_operand.vmem [shape: f32[1,128], index: 4, kind: input, shape index: {}]
  %s5 = inlined_call_operand.vmem [shape: f32[16,128], index: 5, kind: output, shape index: {0}]
  %s6 = inlined_call_operand.vmem [shape: f32[16,1], index: 6, kind: output, shape index: {1}]
  %7 = xla_tuple %s5, %s6
  %s8 = sld [smem:[#allocation0]]
  $region46: #{speller_forward.8} parent=0
    _
  %s10 = ssub.s32 1, %s8
  %s11 = scalar_select 0, %s10, %s8
  // Predicated region
  $region2: #{speller_forward.8} parent=0 // pred_check
    _
  $region3: #{speller_forward.8} parent=0 // pred_check_branch
    %13 = sbr.rel (0) target = $region5
  $region4: #{speller_forward.8} parent=0 // pred_region
    _
  $region5: #{speller_forward.8} parent=0 // pred_fallthru
    _
  // Predicated region
  $region6: #{speller_forward.8} parent=0 // pred_check
    _
  $region7: #{speller_forward.8} parent=0 // pred_check_branch
    %15 = sbr.rel (0) target = $region9
  $region8: #{speller_forward.8} parent=0 // pred_region
    _
  $region9: #{speller_forward.8} parent=0 // pred_fallthru
    _
  // Predicated region
  $region10: #{speller_forward.8} parent=0 // pred_check
    _
  $region11: #{speller_forward.8} parent=0 // pred_check_branch
    %17 = sbr.rel (0) target = $region13
  $region12: #{speller_forward.8} parent=0 // pred_region
    _
  $region13: #{speller_forward.8} parent=0 // pred_fallthru
    _
  // Predicated region
  $region14: #{speller_forward.8} parent=0 // pred_check
    _
  $region15: #{speller_forward.8} parent=0 // pred_check_branch
    %19 = sbr.rel (0) target = $region17
  $region16: #{speller_forward.8} parent=0 // pred_region
    _
  $region17: #{speller_forward.8} parent=0 // pred_fallthru
    _
  // Predicated region
  $region18: #{speller_forward.8} parent=0 // pred_check
    _
  $region19: #{speller_forward.8} parent=0 // pred_check_branch
    %21 = sbr.rel (0) target = $region21
  $region20: #{speller_forward.8} parent=0 // pred_region
    _
  $region21: #{speller_forward.8} parent=0 // pred_fallthru
    _
  %p23 = scmp.eq.s32.totalorder 0, 0
  // Predicated region
  $region22: #{speller_forward.8} parent=0 // pred_check
    %p24 = pneg %p23
  $region23: #{speller_forward.8} parent=0 // pred_check_branch
    %26 = sbr.rel (%p24) target = $region25
  $region24: #{speller_forward.8} parent=0 // pred_region
    %vm27 = vcmask 7168
    %28 = vst.msk [vmem:[#allocation2] sm:$0xff] %vm27, -1e+30
    %29 = vst.msk [vmem:[#allocation2 + $0x8] sm:$0xff] %vm27, -1e+30
    %30 = vst.msk [vmem:[#allocation3] sm:$0xff] %vm27, 0.0
    %31 = vst.msk [vmem:[#allocation3 + $0x8] sm:$0xff] %vm27, 0.0
  $region25: #{speller_forward.8} parent=0 // pred_fallthru
    _
  %v32 = vld [vmem:[%s0] sm:$0xff]
  %v33 = vld [vmem:[%s0 + $0x8] sm:$0xff]
  %v34 = vpack.c.bf16 %v33, %v32
  %v35 = vld [vmem:[%s2] sm:$0xf]
  %v36 = vld [vmem:[%s2 + $0x4] sm:$0xf]
  %v37 = vld [vmem:[%s2 + $0x8] sm:$0xf]
  %v38 = vld [vmem:[%s2 + $0xc] sm:$0xf]
  %v39 = vld [vmem:[%s2 + $0x10] sm:$0xf]
  %v40 = vld [vmem:[%s2 + $0x14] sm:$0xf]
  %v41 = vld [vmem:[%s2 + $0x18] sm:$0xf]
  %v42 = vld [vmem:[%s2 + $0x1c] sm:$0xf]
  %v43 = vld [vmem:[%s2 + $0x20] sm:$0xf]
  %v44 = vld [vmem:[%s2 + $0x24] sm:$0xf]
  %v45 = vld [vmem:[%s2 + $0x28] sm:$0xf]
  %v46 = vld [vmem:[%s2 + $0x2c] sm:$0xf]
  %v47 = vld [vmem:[%s2 + $0x30] sm:$0xf]
  %v48 = vld [vmem:[%s2 + $0x34] sm:$0xf]
  %v49 = vld [vmem:[%s2 + $0x38] sm:$0xf]
  %v50 = vld [vmem:[%s2 + $0x3c] sm:$0xf]
  %v51 = vld [vmem:[%s1] sm:$0xff]
  %v52 = vld [vmem:[%s1 + $0x8] sm:$0xff]
  %v53 = vpack.c.bf16 %v52, %v51
  %v54 = vld [vmem:[%s3] sm:$0xf]
  %v55 = vld [vmem:[%s3 + $0x4] sm:$0xf]
  %v56 = vld [vmem:[%s3 + $0x8] sm:$0xf]
  %v57 = vld [vmem:[%s3 + $0xc] sm:$0xf]
  %v58 = vld [vmem:[%s3 + $0x10] sm:$0xf]
  %v59 = vld [vmem:[%s3 + $0x14] sm:$0xf]
  %v60 = vld [vmem:[%s3 + $0x18] sm:$0xf]
  %v61 = vld [vmem:[%s3 + $0x1c] sm:$0xf]
  %v62 = vld [vmem:[%s3 + $0x20] sm:$0xf]
  %v63 = vld [vmem:[%s3 + $0x24] sm:$0xf]
  %v64 = vld [vmem:[%s3 + $0x28] sm:$0xf]
  %v65 = vld [vmem:[%s3 + $0x2c] sm:$0xf]
  %v66 = vld [vmem:[%s3 + $0x30] sm:$0xf]
  %v67 = vld [vmem:[%s3 + $0x34] sm:$0xf]
  %v68 = vld [vmem:[%s3 + $0x38] sm:$0xf]
  %v69 = vld [vmem:[%s3 + $0x3c] sm:$0xf]
  %v86 = vunpack.c.l.b16 %v54
  %v87 = vunpack.c.l.b16 %v55
  %v88 = vunpack.c.l.b16 %v56
  %v89 = vunpack.c.l.b16 %v57
  %v90 = vunpack.c.l.b16 %v58
  %v91 = vunpack.c.l.b16 %v59
  %v92 = vunpack.c.l.b16 %v60
  %v93 = vunpack.c.l.b16 %v61
  %v94 = vunpack.c.l.b16 %v62
  %v95 = vunpack.c.l.b16 %v63
  %v96 = vunpack.c.l.b16 %v64
  %v97 = vunpack.c.l.b16 %v65
  %v98 = vunpack.c.l.b16 %v66
  %v99 = vunpack.c.l.b16 %v67
  %v100 = vunpack.c.l.b16 %v68
  %v101 = vunpack.c.l.b16 %v69
  %v102 = vpack.c.b16 %v87, %v86
  %v103 = vpack.c.b16 %v89, %v88
  %v104 = vpack.c.b16 %v91, %v90
  %v105 = vpack.c.b16 %v93, %v92
  %v106 = vpack.c.b16 %v95, %v94
  %v107 = vpack.c.b16 %v97, %v96
  %v108 = vpack.c.b16 %v99, %v98
  %v109 = vpack.c.b16 %v101, %v100
  %118 = vmatprep.subr.bf16.mxu0 0
  %119 = vmatpush1.bf16.msra.mxu0 %v102
  %120 = vmatprep.subr.bf16.mxu0 0
  %121 = vmatpush1.bf16.msra.mxu0 %v103
  %122 = vmatprep.subr.bf16.mxu0 0
  %123 = vmatpush1.bf16.msra.mxu0 %v104
  %124 = vmatprep.subr.bf16.mxu0 0
  %125 = vmatpush1.bf16.msra.mxu0 %v105
  %126 = vmatprep.subr.bf16.mxu0 0
  %127 = vmatpush1.bf16.msra.mxu0 %v106
  %128 = vmatprep.subr.bf16.mxu0 0
  %129 = vmatpush1.bf16.msra.mxu0 %v107
  %130 = vmatprep.subr.bf16.mxu0 0
  %131 = vmatpush1.bf16.msra.mxu0 %v108
  %132 = vmatprep.subr.bf16.mxu0 0
  %133 = vmatpush1.bf16.msra.mxu0 %v109
  %134 = vmatprep.subr.bf16.mxu0 0
  %135 = vmatpush1.bf16.msra.mxu0 0
  %136 = vmatprep.subr.bf16.mxu0 0
  %137 = vmatpush1.bf16.msra.mxu0 0
  %138 = vmatprep.subr.bf16.mxu0 0
  %139 = vmatpush1.bf16.msra.mxu0 0
  %140 = vmatprep.subr.bf16.mxu0 0
  %141 = vmatpush1.bf16.msra.mxu0 0
  %142 = vmatprep.subr.bf16.mxu0 0
  %143 = vmatpush1.bf16.msra.mxu0 0
  %144 = vmatprep.subr.bf16.mxu0 0
  %145 = vmatpush1.bf16.msra.mxu0 0
  %146 = vmatprep.subr.bf16.mxu0 0
  %147 = vmatpush1.bf16.msra.mxu0 0
  %148 = vmatprep.subr.bf16.mxu0 0
  %149 = vmatpush1.bf16.msra.mxu0 0
  %150 = vmatprep.mubr.bf16.mxu0 0
  %151 = vmatmul.mubr.bf16.gmra.mrb[0].mxu0 %v53
  %v152 = vpop.f32.mrb[0].mxu0
  %v153 = vadd.f32 0.0, %v152
  %v154 = vpop.f32.mrb[0].mxu0
  %v155 = vpop.f32.mrb[0].mxu0
  %v156 = vadd.f32 0.0, %v155
  %v157 = vpop.f32.mrb[0].mxu0
  %158 = vdwg.mxu0
  %v175 = vunpack.c.l.b16 %v35
  %v176 = vunpack.c.l.b16 %v36
  %v177 = vunpack.c.l.b16 %v37
  %v178 = vunpack.c.l.b16 %v38
  %v179 = vunpack.c.l.b16 %v39
  %v180 = vunpack.c.l.b16 %v40
  %v181 = vunpack.c.l.b16 %v41
  %v182 = vunpack.c.l.b16 %v42
  %v183 = vunpack.c.l.b16 %v43
  %v184 = vunpack.c.l.b16 %v44
  %v185 = vunpack.c.l.b16 %v45
  %v186 = vunpack.c.l.b16 %v46
  %v187 = vunpack.c.l.b16 %v47
  %v188 = vunpack.c.l.b16 %v48
  %v189 = vunpack.c.l.b16 %v49
  %v190 = vunpack.c.l.b16 %v50
  %v191 = vpack.c.b16 %v176, %v175
  %v192 = vpack.c.b16 %v178, %v177
  %v193 = vpack.c.b16 %v180, %v179
  %v194 = vpack.c.b16 %v182, %v181
  %v195 = vpack.c.b16 %v184, %v183
  %v196 = vpack.c.b16 %v186, %v185
  %v197 = vpack.c.b16 %v188, %v187
  %v198 = vpack.c.b16 %v190, %v189
  %207 = vmatprep.subr.bf16.mxu0 0
  %208 = vmatpush1.bf16.msra.mxu0 %v191
  %209 = vmatprep.subr.bf16.mxu0 0
  %210 = vmatpush1.bf16.msra.mxu0 %v192
  %211 = vmatprep.subr.bf16.mxu0 0
  %212 = vmatpush1.bf16.msra.mxu0 %v193
  %213 = vmatprep.subr.bf16.mxu0 0
  %214 = vmatpush1.bf16.msra.mxu0 %v194
  %215 = vmatprep.subr.bf16.mxu0 0
  %216 = vmatpush1.bf16.msra.mxu0 %v195
  %217 = vmatprep.subr.bf16.mxu0 0
  %218 = vmatpush1.bf16.msra.mxu0 %v196
  %219 = vmatprep.subr.bf16.mxu0 0
  %220 = vmatpush1.bf16.msra.mxu0 %v197
  %221 = vmatprep.subr.bf16.mxu0 0
  %222 = vmatpush1.bf16.msra.mxu0 %v198
  %223 = vmatprep.subr.bf16.mxu0 0
  %224 = vmatpush1.bf16.msra.mxu0 0
  %225 = vmatprep.subr.bf16.mxu0 0
  %226 = vmatpush1.bf16.msra.mxu0 0
  %227 = vmatprep.subr.bf16.mxu0 0
  %228 = vmatpush1.bf16.msra.mxu0 0
  %229 = vmatprep.subr.bf16.mxu0 0
  %230 = vmatpush1.bf16.msra.mxu0 0
  %231 = vmatprep.subr.bf16.mxu0 0
  %232 = vmatpush1.bf16.msra.mxu0 0
  %233 = vmatprep.subr.bf16.mxu0 0
  %234 = vmatpush1.bf16.msra.mxu0 0
  %235 = vmatprep.subr.bf16.mxu0 0
  %236 = vmatpush1.bf16.msra.mxu0 0
  %237 = vmatprep.subr.bf16.mxu0 0
  %238 = vmatpush1.bf16.msra.mxu0 0
  %239 = vmatprep.mubr.bf16.mxu0 0
  %240 = vmatmul.mubr.bf16.gmra.mrb[0].mxu0 %v34
  %v241 = vpop.f32.mrb[0].mxu0
  %v242 = vadd.f32 %v153, %v241
  %v243 = vpop.f32.mrb[0].mxu0
  %v244 = vpop.f32.mrb[0].mxu0
  %v245 = vadd.f32 %v156, %v244
  %v246 = vpop.f32.mrb[0].mxu0
  %247 = vdwg.mxu0
  %v248 = vld [vmem:[%s4] sm:$0x1]
  %v250 = vlaneseq
  %v251 = vshrl.u32 %v250, 7
  %v252 = vsub.s32 0, %v251
  %v253 = vrot.slane %v248, %v252
  %v255 = vadd.f32 %v242, %v253
  %v256 = vadd.f32 %v245, %v253
  %257 = vst [vmem:[%s5] sm:$0xff] %v255
  %258 = vst [vmem:[%s5 + $0x8] sm:$0xff] %v256
  %v259 = vld [vmem:[#allocation2] sm:$0xff]
  %v260 = vld [vmem:[#allocation2 + $0x8] sm:$0xff]
  %261 = vmax.xlane.f32.xlu0 %v255
  %v262 = vpop.xlane.xlu0 %261
  %263 = vmax.xlane.f32.xlu0 %v256
  %v264 = vpop.xlane.xlu0 %263
  %v265 = vmax.f32 %v259, %v262
  %v266 = vmax.f32 %v260, %v264
  %v267 = vld [vmem:[#allocation3] sm:$0xff]
  %v268 = vld [vmem:[#allocation3 + $0x8] sm:$0xff]
  %v269 = vsub.f32 %v259, %v265
  %v270 = vsub.f32 %v260, %v266
  %v271 = vmul.f32 %v269, 1.442695
  %v272 = vpow.pop %v271
  %v273 = vmul.f32 %v270, 1.442695
  %v274 = vpow.pop %v273
  %v275 = vmul.f32 %v267, %v272
  %v276 = vmul.f32 %v268, %v274
  %278 = vset.pattern.permute.xlu0 0
  %279 = vperm.xlu0 %278, %v265
  %v280 = vpop.permute.xlu0 %279
  %283 = vset.pattern.permute.xlu0 0
  %284 = vperm.xlu0 %283, %v266
  %v285 = vpop.permute.xlu0 %284
  %v287 = vsub.f32 %v255, %v280
  %v288 = vsub.f32 %v256, %v285
  %v289 = vmul.f32 %v287, 1.442695
  %v290 = vpow.pop %v289
  %v291 = vmul.f32 %v288, 1.442695
  %v292 = vpow.pop %v291
  %293 = vadd.xlane.f32.xlu0 %v290
  %v294 = vpop.xlane.xlu0 %293
  %295 = vadd.xlane.f32.xlu0 %v292
  %v296 = vpop.xlane.xlu0 %295
  %v297 = vadd.f32 %v275, %v294
  %v298 = vadd.f32 %v276, %v296
  %vm299 = vcmask 7168
  %300 = vst.msk [vmem:[#allocation3] sm:$0xff] %vm299, %v297
  %301 = vst.msk [vmem:[#allocation3 + $0x8] sm:$0xff] %vm299, %v298
  %302 = vst.msk [vmem:[#allocation2] sm:$0xff] %vm299, %v265
  %303 = vst.msk [vmem:[#allocation2 + $0x8] sm:$0xff] %vm299, %v266
  // Predicated region
  $region26: #{speller_forward.8} parent=0 // pred_check
    %p304 = pneg %p23
  $region27: #{speller_forward.8} parent=0 // pred_check_branch
    %306 = sbr.rel (%p304) target = $region29
  $region28: #{speller_forward.8} parent=0 // pred_region
    %v307 = vld [vmem:[#allocation2] sm:$0xff]
    %v308 = vld [vmem:[#allocation2 + $0x8] sm:$0xff]
    %v309 = vld [vmem:[#allocation3] sm:$0xff]
    %v310 = vld [vmem:[#allocation3 + $0x8] sm:$0xff]
    %v311 = vlog2.pop %v309
    %v312 = vmul.f32 %v311, 0.6931472
    %v313 = vlog2.pop %v310
    %v314 = vmul.f32 %v313, 0.6931472
    %v315 = vadd.f32 %v307, %v312
    %v316 = vadd.f32 %v308, %v314
    %317 = vst.msk [vmem:[%s6] sm:$0xff] %vm299, %v315
    %318 = vst.msk [vmem:[%s6 + $0x8] sm:$0xff] %vm299, %v316
  $region29: #{speller_forward.8} parent=0 // pred_fallthru
    _
  // Predicated region
  $region30: #{speller_forward.8} parent=0 // pred_check
    _
  $region31: #{speller_forward.8} parent=0 // pred_check_branch
    %320 = sbr.rel (0) target = $region33
  $region32: #{speller_forward.8} parent=0 // pred_region
    _
  $region33: #{speller_forward.8} parent=0 // pred_fallthru
    _
  // Predicated region
  $region34: #{speller_forward.8} parent=0 // pred_check
    _
  $region35: #{speller_forward.8} parent=0 // pred_check_branch
    %322 = sbr.rel (0) target = $region37
  $region36: #{speller_forward.8} parent=0 // pred_region
    _
  $region37: #{speller_forward.8} parent=0 // pred_fallthru
    _
  // Predicated region
  $region38: #{speller_forward.8} parent=0 // pred_check
    _
  $region39: #{speller_forward.8} parent=0 // pred_check_branch
    %324 = sbr.rel (0) target = $region41
  $region40: #{speller_forward.8} parent=0 // pred_region
    _
  $region41: #{speller_forward.8} parent=0 // pred_fallthru
    _
  // Predicated region
  $region42: #{speller_forward.8} parent=0 // pred_check
    _
  $region43: #{speller_forward.8} parent=0 // pred_check_branch
    %326 = sbr.rel (0) target = $region45
  $region44: #{speller_forward.8} parent=0 // pred_region
    _
  $region45: #{speller_forward.8} parent=0 // pred_fallthru
    _

// kernel: speller_forward.7
$region0: #{speller_forward.7}
  #allocation0 [shape = 'u32[]', space=smem, size = 0x4, offset = 0x4, fixed_abs, tag = 'smem constant byte address 0x4 - core index']
  #allocation1 [shape = 'u32[144,128]{1,0:T(1,128)}', space=vmem, size = 0x12000, scoped, tag = 'internal scratch']
  %s0 = inlined_call_operand.vmem [shape: bf16[2,8,128], index: 0, kind: input, shape index: {}]
  %s1 = inlined_call_operand.vmem [shape: bf16[2,16,128], index: 1, kind: input, shape index: {}]
  %s2 = inlined_call_operand.vmem [shape: bf16[2,16,128], index: 2, kind: input, shape index: {}]
  %s3 = inlined_call_operand.vmem [shape: f32[2,8,128], index: 3, kind: output, shape index: {}]
  %s4 = sld [smem:[#allocation0]]
  $region45: #{speller_forward.7} parent=0
    _
  %s6 = ssub.s32 1, %s4
  %s7 = scalar_select 0, %s6, %s4
  loop: start=0, step=1, limit=4
  $region2: #{speller_forward.7} parent=0 // loop_pre_header
    _
  $region3: #{speller_forward.7} parent=0 // loop_header
    %s9 = sphi 0, %s13
    %p10 = scmp.ge.s32.totalorder %s9, 4
    %s19 = sphi 0, %s21
    %s22 = sphi 0, %s19
    %s23 = sphi 0, %s22
    %s39 = sphi 0, %s23
    %s45 = sphi 0, %s47
    %s48 = sphi 0, %s45
    %s49 = sphi 0, %s48
    %s65 = sphi 0, %s49
    %s71 = sphi 0, %s73
    %s74 = sphi 0, %s71
    %s75 = sphi 0, %s74
    %s91 = sphi 0, %s75
    %s97 = sphi 0, %s99
    %s100 = sphi 0, %s97
    %s101 = sphi 0, %s100
    %s117 = sphi 0, %s101
  $region4: #{speller_forward.7} parent=0 // loop_header_branch
    %12 = sbr.rel (%p10) target = $region8
  $region5: #{speller_forward.7} parent=0 // loop_body
    %s14 = ssub.s32 %s9, 1
    %s15 = ssub.s32 %s9, 2
    %s16 = sadd.s32 %s9, 1
    %s17 = ssub.s32 %s9, %s16
    %p18 = scmp.eq.s32.totalorder %s17, 0
    %s20 = sadd.s32 %s19, 1
    %s21 = scalar_select %p18, %s19, %s20
    %p24 = pneg %p18
    %p25 = scmp.eq.s32.totalorder %s9, 1
    %p26 = por %p24, %p25
    %p27 = scmp.ne.s32.totalorder %s19, %s22
    %p28 = scmp.eq.s32.totalorder %s9, 0
    %p29 = por %p27, %p28
    %p30 = scmp.ne.s32.totalorder %s19, %s22
    %p31 = scmp.eq.s32.totalorder %s14, 1
    %p32 = por %p30, %p31
    %p33 = scmp.ne.s32.totalorder %s22, %s23
    %p34 = scmp.eq.s32.totalorder %s14, 0
    %p35 = por %p33, %p34
    %p36 = scmp.ne.s32.totalorder %s22, %s23
    %p37 = scmp.eq.s32.totalorder %s15, 1
    %p38 = por %p36, %p37
    %p40 = scmp.ne.s32.totalorder %s23, %s39
    %p41 = scmp.eq.s32.totalorder %s15, 0
    %p42 = por %p40, %p41
    %s43 = ssub.s32 %s9, %s16
    %p44 = scmp.eq.s32.totalorder %s43, 0
    %s46 = sadd.s32 %s45, 1
    %s47 = scalar_select %p44, %s45, %s46
    %p50 = pneg %p44
    %p51 = scmp.eq.s32.totalorder %s9, 1
    %p52 = por %p50, %p51
    %p53 = scmp.ne.s32.totalorder %s45, %s48
    %p54 = scmp.eq.s32.totalorder %s9, 0
    %p55 = por %p53, %p54
    %p56 = scmp.ne.s32.totalorder %s45, %s48
    %p57 = scmp.eq.s32.totalorder %s14, 1
    %p58 = por %p56, %p57
    %p59 = scmp.ne.s32.totalorder %s48, %s49
    %p60 = scmp.eq.s32.totalorder %s14, 0
    %p61 = por %p59, %p60
    %p62 = scmp.ne.s32.totalorder %s48, %s49
    %p63 = scmp.eq.s32.totalorder %s15, 1
    %p64 = por %p62, %p63
    %p66 = scmp.ne.s32.totalorder %s49, %s65
    %p67 = scmp.eq.s32.totalorder %s15, 0
    %p68 = por %p66, %p67
    %s69 = ssub.s32 %s9, %s16
    %p70 = scmp.eq.s32.totalorder %s69, 0
    %s72 = sadd.s32 %s71, 1
    %s73 = scalar_select %p70, %s71, %s72
    %p76 = pneg %p70
    %p77 = scmp.eq.s32.totalorder %s9, 1
    %p78 = por %p76, %p77
    %p79 = scmp.ne.s32.totalorder %s71, %s74
    %p80 = scmp.eq.s32.totalorder %s9, 0
    %p81 = por %p79, %p80
    %p82 = scmp.ne.s32.totalorder %s71, %s74
    %p83 = scmp.eq.s32.totalorder %s14, 1
    %p84 = por %p82, %p83
    %p85 = scmp.ne.s32.totalorder %s74, %s75
    %p86 = scmp.eq.s32.totalorder %s14, 0
    %p87 = por %p85, %p86
    %p88 = scmp.ne.s32.totalorder %s74, %s75
    %p89 = scmp.eq.s32.totalorder %s15, 1
    %p90 = por %p88, %p89
    %p92 = scmp.ne.s32.totalorder %s75, %s91
    %p93 = scmp.eq.s32.totalorder %s15, 0
    %p94 = por %p92, %p93
    %s95 = ssub.s32 %s9, %s16
    %p96 = scmp.eq.s32.totalorder %s95, 0
    %s98 = sadd.s32 %s97, 1
    %s99 = scalar_select %p96, %s97, %s98
    %p102 = pneg %p96
    %p103 = scmp.eq.s32.totalorder %s9, 1
    %p104 = por %p102, %p103
    %p105 = scmp.ne.s32.totalorder %s97, %s100
    %p106 = scmp.eq.s32.totalorder %s9, 0
    %p107 = por %p105, %p106
    %p108 = scmp.ne.s32.totalorder %s97, %s100
    %p109 = scmp.eq.s32.totalorder %s14, 1
    %p110 = por %p108, %p109
    %p111 = scmp.ne.s32.totalorder %s100, %s101
    %p112 = scmp.eq.s32.totalorder %s14, 0
    %p113 = por %p111, %p112
    %p114 = scmp.ne.s32.totalorder %s100, %s101
    %p115 = scmp.eq.s32.totalorder %s15, 1
    %p116 = por %p114, %p115
    %p118 = scmp.ne.s32.totalorder %s101, %s117
    %p119 = scmp.eq.s32.totalorder %s15, 0
    %p120 = por %p118, %p119
    %p121 = scmp.le.s32.totalorder 1, %s9
    %p122 = scmp.lt.s32.totalorder %s9, 3
    %p123 = pnand %p121, %p122
    %p124 = pneg %p123
    // Predicated region
    $region9: #{speller_forward.7} parent=5 // pred_check
      _
    $region10: #{speller_forward.7} parent=5 // pred_check_branch
      %126 = sbr.rel (%p123) target = $region12
    $region11: #{speller_forward.7} parent=5 // pred_region
      %s127 = ssub.s32 %s9, 1
    $region12: #{speller_forward.7} parent=5 // pred_fallthru
      _
    %p128 = scmp.lt.s32.totalorder %s9, 2
    // Predicated region
    $region13: #{speller_forward.7} parent=5 // pred_check
      %p129 = pneg %p128
    $region14: #{speller_forward.7} parent=5 // pred_check_branch
      %131 = sbr.rel (%p129) target = $region16
    $region15: #{speller_forward.7} parent=5 // pred_region
      // Predicated region
      $region17: #{speller_forward.7} parent=15 // pred_check
        %p132 = pneg %p29
      $region18: #{speller_forward.7} parent=15 // pred_check_branch
        %134 = sbr.rel (%p132) target = $region20
      $region19: #{speller_forward.7} parent=15 // pred_region
        %p135 = scmp.lt.s32.totalorder %s9, 1
        %s136 = scalar_select %p135, %s9, 1
        %s137 = smul.addr %s136, 4
        %s138 = scalar_lea.vmem %s0, %s137
      $region20: #{speller_forward.7} parent=15 // pred_fallthru
        _
      // Predicated region
      $region21: #{speller_forward.7} parent=15 // pred_check
        %p139 = pneg %p55
      $region22: #{speller_forward.7} parent=15 // pred_check_branch
        %141 = sbr.rel (%p139) target = $region24
      $region23: #{speller_forward.7} parent=15 // pred_region
        %p142 = scmp.lt.s32.totalorder %s9, 1
        %s143 = scalar_select %p142, %s9, 1
        %s144 = smul.addr %s143, 2
        %s145 = smul.addr %s144, 4
        %s146 = scalar_lea.vmem %s1, %s145
      $region24: #{speller_forward.7} parent=15 // pred_fallthru
        _
      // Predicated region
      $region25: #{speller_forward.7} parent=15 // pred_check
        %p147 = pneg %p81
      $region26: #{speller_forward.7} parent=15 // pred_check_branch
        %149 = sbr.rel (%p147) target = $region28
      $region27: #{speller_forward.7} parent=15 // pred_region
        %p150 = scmp.lt.s32.totalorder %s9, 1
        %s151 = scalar_select %p150, %s9, 1
        %s152 = smul.addr %s151, 2
        %s153 = smul.addr %s152, 4
        %s154 = scalar_lea.vmem %s2, %s153
      $region28: #{speller_forward.7} parent=15 // pred_fallthru
        _
    $region16: #{speller_forward.7} parent=5 // pred_fallthru
      _
    %p155 = scmp.le.s32.totalorder 1, %s9
    %p156 = scmp.lt.s32.totalorder %s9, 3
    %p157 = pnand %p155, %p156
    %p158 = pneg %p157
    // Predicated region
    $region29: #{speller_forward.7} parent=5 // pred_check
      _
    $region30: #{speller_forward.7} parent=5 // pred_check_branch
      %160 = sbr.rel (%p157) target = $region32
    $region31: #{speller_forward.7} parent=5 // pred_region
      %s161 = ssub.s32 %s9, 1
      %p162 = scmp.lt.s32.totalorder %s14, 1
      %s163 = scalar_select %p162, %s14, 1
      %s164 = smul.addr %s163, 4
      %s165 = scalar_lea.vmem %s0, %s164
      %p166 = pneg %p35
      %p167 = pneg %p32
      %p168 = scmp.lt.s32.totalorder %s14, 1
      %s169 = scalar_select %p168, %s14, 1
      %s170 = smul.addr %s169, 2
      %s171 = smul.addr %s170, 4
      %s172 = scalar_lea.vmem %s1, %s171
      %p173 = pneg %p61
      %p174 = pneg %p58
      %p175 = scmp.lt.s32.totalorder %s14, 1
      %s176 = scalar_select %p175, %s14, 1
      %s177 = smul.addr %s176, 2
      %s178 = smul.addr %s177, 4
      %s179 = scalar_lea.vmem %s2, %s178
      %p180 = pneg %p87
      %p181 = pneg %p84
      %p182 = pneg %p113
      %p183 = pneg %p110
      %p184 = scmp.lt.s32.totalorder %s14, 1
      %s185 = scalar_select %p184, %s14, 1
      %s186 = smul.addr %s185, 8
      %s187 = scalar_lea.vmem %s3, %s186
      %p188 = scmp.lt.s32.totalorder %s14, 1
      %s189 = scalar_select %p188, %s14, 1
      %s190 = smul.addr %s189, 4
      %s191 = scalar_lea.vmem %s0, %s190
      %p192 = scmp.lt.s32.totalorder %s14, 1
      %s193 = scalar_select %p192, %s14, 1
      %s194 = smul.addr %s193, 2
      %s195 = smul.addr %s194, 4
      %s196 = scalar_lea.vmem %s1, %s195
      %p197 = scmp.lt.s32.totalorder %s14, 1
      %s198 = scalar_select %p197, %s14, 1
      %s199 = smul.addr %s198, 2
      %s200 = smul.addr %s199, 4
      %s201 = scalar_lea.vmem %s2, %s200
      %p202 = scmp.lt.s32.totalorder %s14, 1
      %s203 = scalar_select %p202, %s14, 1
      %s204 = smul.addr %s203, 8
      %s205 = scalar_lea.vmem %s3, %s204
      %v207 = vld [vmem:[%s191] sm:$0xf]
      %v208 = vld [vmem:[%s196] sm:$0xf]
      %v209 = vld [vmem:[%s196 + $0x4] sm:$0xf]
      %v210 = vld [vmem:[%s201] sm:$0xf]
      %v211 = vld [vmem:[%s201 + $0x4] sm:$0xf]
      %v214 = vunpack.c.l.b16 %v208
      %v215 = vunpack.c.l.b16 %v209
      %v216 = vpack.c.b16 %v215, %v214
      %vm217 = vcmask 261120
      %v219 = vsel %vm217, %v207, 0
      %v222 = vsel %vm217, %v216, 0
      %224 = vmatprep.subr.bf16.mxu0 0
      %225 = vmatpush1.bf16.xpose.msra.mxu0 %v222
      %226 = vmatprep.subr.bf16.mxu0 0
      %227 = vmatpush1.bf16.xpose.msra.mxu0 0
      %228 = vmatprep.subr.bf16.mxu0 0
      %229 = vmatpush1.bf16.xpose.msra.mxu0 0
      %230 = vmatprep.subr.bf16.mxu0 0
      %231 = vmatpush1.bf16.xpose.msra.mxu0 0
      %232 = vmatprep.subr.bf16.mxu0 0
      %233 = vmatpush1.bf16.xpose.msra.mxu0 0
      %234 = vmatprep.subr.bf16.mxu0 0
      %235 = vmatpush1.bf16.xpose.msra.mxu0 0
      %236 = vmatprep.subr.bf16.mxu0 0
      %237 = vmatpush1.bf16.xpose.msra.mxu0 0
      %238 = vmatprep.subr.bf16.mxu0 0
      %239 = vmatpush1.bf16.xpose.msra.mxu0 0
      %240 = vmatprep.subr.bf16.mxu0 0
      %241 = vmatpush1.bf16.xpose.msra.mxu0 0
      %242 = vmatprep.subr.bf16.mxu0 0
      %243 = vmatpush1.bf16.xpose.msra.mxu0 0
      %244 = vmatprep.subr.bf16.mxu0 0
      %245 = vmatpush1.bf16.xpose.msra.mxu0 0
      %246 = vmatprep.subr.bf16.mxu0 0
      %247 = vmatpush1.bf16.xpose.msra.mxu0 0
      %248 = vmatprep.subr.bf16.mxu0 0
      %249 = vmatpush1.bf16.xpose.msra.mxu0 0
      %250 = vmatprep.subr.bf16.mxu0 0
      %251 = vmatpush1.bf16.xpose.msra.mxu0 0
      %252 = vmatprep.subr.bf16.mxu0 0
      %253 = vmatpush1.bf16.xpose.msra.mxu0 0
      %254 = vmatprep.subr.bf16.mxu0 0
      %255 = vmatpush1.bf16.xpose.msra.mxu0 0
      %256 = vmatprep.mubr.bf16.mxu0 0
      %257 = vmatmul.mubr.bf16.gmra.mrb[0].mxu0 %v219
      %v258 = vpop.f32.mrb[0].mxu0
      %v259 = vadd.f32 0.0, %v258
      %v260 = vpop.f32.mrb[0].mxu0
      %v261 = vpop.f32.mrb[0].mxu0
      %v262 = vpop.f32.mrb[0].mxu0
      %263 = vdwg.mxu0
      %v264 = vmul.f32 %v259, 0.088388346
      %vm265 = vcmask 130048
      %v266 = vsel %vm265, %v264, -inf
      %267 = vmax.xlane.f32.xlu0 %v266
      %v268 = vpop.xlane.xlu0 %267
      %v269 = vsub.f32 %v264, %v268
      %v270 = vmul.f32 %v269, 1.442695
      %v271 = vpow.pop %v270
      %v272 = vsel %vm265, %v271, 0.0
      %273 = vadd.xlane.f32.xlu0 %v272
      %v274 = vpop.xlane.xlu0 %273
      %v275 = vrcp.pop %v274
      %v276 = vmul.f32 %v271, %v275
      %v277 = vpack.c.bf16 %v276, %v276
      %v280 = vunpack.c.l.b16 %v210
      %v281 = vunpack.c.l.b16 %v211
      %v282 = vpack.c.b16 %v281, %v280
      %v285 = vsel %vm265, %v277, 0
      %287 = vmatprep.subr.bf16.mxu0 0
      %288 = vmatpush1.bf16.msra.mxu0 %v282
      %289 = vmatprep.subr.bf16.mxu0 0
      %290 = vmatpush1.bf16.msra.mxu0 0
      %291 = vmatprep.subr.bf16.mxu0 0
      %292 = vmatpush1.bf16.msra.mxu0 0
      %293 = vmatprep.subr.bf16.mxu0 0
      %294 = vmatpush1.bf16.msra.mxu0 0
      %295 = vmatprep.subr.bf16.mxu0 0
      %296 = vmatpush1.bf16.msra.mxu0 0
      %297 = vmatprep.subr.bf16.mxu0 0
      %298 = vmatpush1.bf16.msra.mxu0 0
      %299 = vmatprep.subr.bf16.mxu0 0
      %300 = vmatpush1.bf16.msra.mxu0 0
      %301 = vmatprep.subr.bf16.mxu0 0
      %302 = vmatpush1.bf16.msra.mxu0 0
      %303 = vmatprep.subr.bf16.mxu0 0
      %304 = vmatpush1.bf16.msra.mxu0 0
      %305 = vmatprep.subr.bf16.mxu0 0
      %306 = vmatpush1.bf16.msra.mxu0 0
      %307 = vmatprep.subr.bf16.mxu0 0
      %308 = vmatpush1.bf16.msra.mxu0 0
      %309 = vmatprep.subr.bf16.mxu0 0
      %310 = vmatpush1.bf16.msra.mxu0 0
      %311 = vmatprep.subr.bf16.mxu0 0
      %312 = vmatpush1.bf16.msra.mxu0 0
      %313 = vmatprep.subr.bf16.mxu0 0
      %314 = vmatpush1.bf16.msra.mxu0 0
      %315 = vmatprep.subr.bf16.mxu0 0
      %316 = vmatpush1.bf16.msra.mxu0 0
      %317 = vmatprep.subr.bf16.mxu0 0
      %318 = vmatpush1.bf16.msra.mxu0 0
      %319 = vmatprep.mubr.bf16.mxu0 0
      %320 = vmatmul.mubr.bf16.gmra.mrb[0].mxu0 %v285
      %v321 = vpop.f32.mrb[0].mxu0
      %v322 = vadd.f32 0.0, %v321
      %v323 = vpop.f32.mrb[0].mxu0
      %v324 = vpop.f32.mrb[0].mxu0
      %v325 = vpop.f32.mrb[0].mxu0
      %326 = vdwg.mxu0
      %v328 = vunpack.c.l.b16 %v207
      %v329 = vpack.c.b16 %v328, %v328
      %330 = vrot.lane.b32.xlu0 %v329, 96
      %v331 = vpop.permute.xlu0 %330
      %332 = vrot.lane.b32.xlu0 %v216, 96
      %v333 = vpop.permute.xlu0 %332
      %v335 = vsel %vm217, %v331, 0
      %v338 = vsel %vm217, %v333, 0
      %340 = vmatprep.subr.bf16.mxu0 0
      %341 = vmatpush1.bf16.xpose.msra.mxu0 %v338
      %342 = vmatprep.subr.bf16.mxu0 0
      %343 = vmatpush1.bf16.xpose.msra.mxu0 0
      %344 = vmatprep.subr.bf16.mxu0 0
      %345 = vmatpush1.bf16.xpose.msra.mxu0 0
      %346 = vmatprep.subr.bf16.mxu0 0
      %347 = vmatpush1.bf16.xpose.msra.mxu0 0
      %348 = vmatprep.subr.bf16.mxu0 0
      %349 = vmatpush1.bf16.xpose.msra.mxu0 0
      %350 = vmatprep.subr.bf16.mxu0 0
      %351 = vmatpush1.bf16.xpose.msra.mxu0 0
      %352 = vmatprep.subr.bf16.mxu0 0
      %353 = vmatpush1.bf16.xpose.msra.mxu0 0
      %354 = vmatprep.subr.bf16.mxu0 0
      %355 = vmatpush1.bf16.xpose.msra.mxu0 0
      %356 = vmatprep.subr.bf16.mxu0 0
      %357 = vmatpush1.bf16.xpose.msra.mxu0 0
      %358 = vmatprep.subr.bf16.mxu0 0
      %359 = vmatpush1.bf16.xpose.msra.mxu0 0
      %360 = vmatprep.subr.bf16.mxu0 0
      %361 = vmatpush1.bf16.xpose.msra.mxu0 0
      %362 = vmatprep.subr.bf16.mxu0 0
      %363 = vmatpush1.bf16.xpose.msra.mxu0 0
      %364 = vmatprep.subr.bf16.mxu0 0
      %365 = vmatpush1.bf16.xpose.msra.mxu0 0
      %366 = vmatprep.subr.bf16.mxu0 0
      %367 = vmatpush1.bf16.xpose.msra.mxu0 0
      %368 = vmatprep.subr.bf16.mxu0 0
      %369 = vmatpush1.bf16.xpose.msra.mxu0 0
      %370 = vmatprep.subr.bf16.mxu0 0
      %371 = vmatpush1.bf16.xpose.msra.mxu0 0
      %372 = vmatprep.mubr.bf16.mxu0 0
      %373 = vmatmul.mubr.bf16.gmra.mrb[0].mxu0 %v335
      %v374 = vpop.f32.mrb[0].mxu0
      %v375 = vadd.f32 0.0, %v374
      %v376 = vpop.f32.mrb[0].mxu0
      %v377 = vpop.f32.mrb[0].mxu0
      %v378 = vpop.f32.mrb[0].mxu0
      %379 = vdwg.mxu0
      %v380 = vmul.f32 %v375, 0.088388346
      %v381 = vsel %vm265, %v380, -inf
      %382 = vmax.xlane.f32.xlu0 %v381
      %v383 = vpop.xlane.xlu0 %382
      %v384 = vsub.f32 %v380, %v383
      %v385 = vmul.f32 %v384, 1.442695
      %v386 = vpow.pop %v385
      %v387 = vsel %vm265, %v386, 0.0
      %388 = vadd.xlane.f32.xlu0 %v387
      %v389 = vpop.xlane.xlu0 %388
      %v390 = vrcp.pop %v389
      %v391 = vmul.f32 %v386, %v390
      %v392 = vpack.c.bf16 %v391, %v391
      %393 = vrot.lane.b32.xlu0 %v282, 96
      %v394 = vpop.permute.xlu0 %393
      %v397 = vsel %vm265, %v392, 0
      %399 = vmatprep.subr.bf16.mxu0 0
      %400 = vmatpush1.bf16.msra.mxu0 %v394
      %401 = vmatprep.subr.bf16.mxu0 0
      %402 = vmatpush1.bf16.msra.mxu0 0
      %403 = vmatprep.subr.bf16.mxu0 0
      %404 = vmatpush1.bf16.msra.mxu0 0
      %405 = vmatprep.subr.bf16.mxu0 0
      %406 = vmatpush1.bf16.msra.mxu0 0
      %407 = vmatprep.subr.bf16.mxu0 0
      %408 = vmatpush1.bf16.msra.mxu0 0
      %409 = vmatprep.subr.bf16.mxu0 0
      %410 = vmatpush1.bf16.msra.mxu0 0
      %411 = vmatprep.subr.bf16.mxu0 0
      %412 = vmatpush1.bf16.msra.mxu0 0
      %413 = vmatprep.subr.bf16.mxu0 0
      %414 = vmatpush1.bf16.msra.mxu0 0
      %415 = vmatprep.subr.bf16.mxu0 0
      %416 = vmatpush1.bf16.msra.mxu0 0
      %417 = vmatprep.subr.bf16.mxu0 0
      %418 = vmatpush1.bf16.msra.mxu0 0
      %419 = vmatprep.subr.bf16.mxu0 0
      %420 = vmatpush1.bf16.msra.mxu0 0
      %421 = vmatprep.subr.bf16.mxu0 0
      %422 = vmatpush1.bf16.msra.mxu0 0
      %423 = vmatprep.subr.bf16.mxu0 0
      %424 = vmatpush1.bf16.msra.mxu0 0
      %425 = vmatprep.subr.bf16.mxu0 0
      %426 = vmatpush1.bf16.msra.mxu0 0
      %427 = vmatprep.subr.bf16.mxu0 0
      %428 = vmatpush1.bf16.msra.mxu0 0
      %429 = vmatprep.subr.bf16.mxu0 0
      %430 = vmatpush1.bf16.msra.mxu0 0
      %431 = vmatprep.mubr.bf16.mxu0 0
      %432 = vmatmul.mubr.bf16.gmra.mrb[0].mxu0 %v397
      %v433 = vpop.f32.mrb[0].mxu0
      %v434 = vadd.f32 0.0, %v433
      %v435 = vpop.f32.mrb[0].mxu0
      %v436 = vpop.f32.mrb[0].mxu0
      %v437 = vpop.f32.mrb[0].mxu0
      %438 = vdwg.mxu0
      %439 = vrot.lane.b32.xlu0 %v329, 64
      %v440 = vpop.permute.xlu0 %439
      %441 = vrot.lane.b32.xlu0 %v216, 64
      %v442 = vpop.permute.xlu0 %441
      %v444 = vsel %vm217, %v440, 0
      %v447 = vsel %vm217, %v442, 0
      %449 = vmatprep.subr.bf16.mxu0 0
      %450 = vmatpush1.bf16.xpose.msra.mxu0 %v447
      %451 = vmatprep.subr.bf16.mxu0 0
      %452 = vmatpush1.bf16.xpose.msra.mxu0 0
      %453 = vmatprep.subr.bf16.mxu0 0
      %454 = vmatpush1.bf16.xpose.msra.mxu0 0
      %455 = vmatprep.subr.bf16.mxu0 0
      %456 = vmatpush1.bf16.xpose.msra.mxu0 0
      %457 = vmatprep.subr.bf16.mxu0 0
      %458 = vmatpush1.bf16.xpose.msra.mxu0 0
      %459 = vmatprep.subr.bf16.mxu0 0
      %460 = vmatpush1.bf16.xpose.msra.mxu0 0
      %461 = vmatprep.subr.bf16.mxu0 0
      %462 = vmatpush1.bf16.xpose.msra.mxu0 0
      %463 = vmatprep.subr.bf16.mxu0 0
      %464 = vmatpush1.bf16.xpose.msra.mxu0 0
      %465 = vmatprep.subr.bf16.mxu0 0
      %466 = vmatpush1.bf16.xpose.msra.mxu0 0
      %467 = vmatprep.subr.bf16.mxu0 0
      %468 = vmatpush1.bf16.xpose.msra.mxu0 0
      %469 = vmatprep.subr.bf16.mxu0 0
      %470 = vmatpush1.bf16.xpose.msra.mxu0 0
      %471 = vmatprep.subr.bf16.mxu0 0
      %472 = vmatpush1.bf16.xpose.msra.mxu0 0
      %473 = vmatprep.subr.bf16.mxu0 0
      %474 = vmatpush1.bf16.xpose.msra.mxu0 0
      %475 = vmatprep.subr.bf16.mxu0 0
      %476 = vmatpush1.bf16.xpose.msra.mxu0 0
      %477 = vmatprep.subr.bf16.mxu0 0
      %478 = vmatpush1.bf16.xpose.msra.mxu0 0
      %479 = vmatprep.subr.bf16.mxu0 0
      %480 = vmatpush1.bf16.xpose.msra.mxu0 0
      %481 = vmatprep.mubr.bf16.mxu0 0
      %482 = vmatmul.mubr.bf16.gmra.mrb[0].mxu0 %v444
      %v483 = vpop.f32.mrb[0].mxu0
      %v484 = vadd.f32 0.0, %v483
      %v485 = vpop.f32.mrb[0].mxu0
      %v486 = vpop.f32.mrb[0].mxu0
      %v487 = vpop.f32.mrb[0].mxu0
      %488 = vdwg.mxu0
      %v489 = vmul.f32 %v484, 0.088388346
      %v490 = vsel %vm265, %v489, -inf
      %491 = vmax.xlane.f32.xlu0 %v490
      %v492 = vpop.xlane.xlu0 %491
      %v493 = vsub.f32 %v489, %v492
      %v494 = vmul.f32 %v493, 1.442695
      %v495 = vpow.pop %v494
      %v496 = vsel %vm265, %v495, 0.0
      %497 = vadd.xlane.f32.xlu0 %v496
      %v498 = vpop.xlane.xlu0 %497
      %v499 = vrcp.pop %v498
      %v500 = vmul.f32 %v495, %v499
      %v501 = vpack.c.bf16 %v500, %v500
      %502 = vrot.lane.b32.xlu0 %v282, 64
      %v503 = vpop.permute.xlu0 %502
      %v506 = vsel %vm265, %v501, 0
      %508 = vmatprep.subr.bf16.mxu0 0
      %509 = vmatpush1.bf16.msra.mxu0 %v503
      %510 = vmatprep.subr.bf16.mxu0 0
      %511 = vmatpush1.bf16.msra.mxu0 0
      %512 = vmatprep.subr.bf16.mxu0 0
      %513 = vmatpush1.bf16.msra.mxu0 0
      %514 = vmatprep.subr.bf16.mxu0 0
      %515 = vmatpush1.bf16.msra.mxu0 0
      %516 = vmatprep.subr.bf16.mxu0 0
      %517 = vmatpush1.bf16.msra.mxu0 0
      %518 = vmatprep.subr.bf16.mxu0 0
      %519 = vmatpush1.bf16.msra.mxu0 0
      %520 = vmatprep.subr.bf16.mxu0 0
      %521 = vmatpush1.bf16.msra.mxu0 0
      %522 = vmatprep.subr.bf16.mxu0 0
      %523 = vmatpush1.bf16.msra.mxu0 0
      %524 = vmatprep.subr.bf16.mxu0 0
      %525 = vmatpush1.bf16.msra.mxu0 0
      %526 = vmatprep.subr.bf16.mxu0 0
      %527 = vmatpush1.bf16.msra.mxu0 0
      %528 = vmatprep.subr.bf16.mxu0 0
      %529 = vmatpush1.bf16.msra.mxu0 0
      %530 = vmatprep.subr.bf16.mxu0 0
      %531 = vmatpush1.bf16.msra.mxu0 0
      %532 = vmatprep.subr.bf16.mxu0 0
      %533 = vmatpush1.bf16.msra.mxu0 0
      %534 = vmatprep.subr.bf16.mxu0 0
      %535 = vmatpush1.bf16.msra.mxu0 0
      %536 = vmatprep.subr.bf16.mxu0 0
      %537 = vmatpush1.bf16.msra.mxu0 0
      %538 = vmatprep.subr.bf16.mxu0 0
      %539 = vmatpush1.bf16.msra.mxu0 0
      %540 = vmatprep.mubr.bf16.mxu0 0
      %541 = vmatmul.mubr.bf16.gmra.mrb[0].mxu0 %v506
      %v542 = vpop.f32.mrb[0].mxu0
      %v543 = vadd.f32 0.0, %v542
      %v544 = vpop.f32.mrb[0].mxu0
      %v545 = vpop.f32.mrb[0].mxu0
      %v546 = vpop.f32.mrb[0].mxu0
      %547 = vdwg.mxu0
      %548 = vrot.lane.b32.xlu0 %v329, 32
      %v549 = vpop.permute.xlu0 %548
      %550 = vrot.lane.b32.xlu0 %v216, 32
      %v551 = vpop.permute.xlu0 %550
      %v553 = vsel %vm217, %v549, 0
      %v556 = vsel %vm217, %v551, 0
      %558 = vmatprep.subr.bf16.mxu0 0
      %559 = vmatpush1.bf16.xpose.msra.mxu0 %v556
      %560 = vmatprep.subr.bf16.mxu0 0
      %561 = vmatpush1.bf16.xpose.msra.mxu0 0
      %562 = vmatprep.subr.bf16.mxu0 0
      %563 = vmatpush1.bf16.xpose.msra.mxu0 0
      %564 = vmatprep.subr.bf16.mxu0 0
      %565 = vmatpush1.bf16.xpose.msra.mxu0 0
      %566 = vmatprep.subr.bf16.mxu0 0
      %567 = vmatpush1.bf16.xpose.msra.mxu0 0
      %568 = vmatprep.subr.bf16.mxu0 0
      %569 = vmatpush1.bf16.xpose.msra.mxu0 0
      %570 = vmatprep.subr.bf16.mxu0 0
      %571 = vmatpush1.bf16.xpose.msra.mxu0 0
      %572 = vmatprep.subr.bf16.mxu0 0
      %573 = vmatpush1.bf16.xpose.msra.mxu0 0
      %574 = vmatprep.subr.bf16.mxu0 0
      %575 = vmatpush1.bf16.xpose.msra.mxu0 0
      %576 = vmatprep.subr.bf16.mxu0 0
      %577 = vmatpush1.bf16.xpose.msra.mxu0 0
      %578 = vmatprep.subr.bf16.mxu0 0
      %579 = vmatpush1.bf16.xpose.msra.mxu0 0
      %580 = vmatprep.subr.bf16.mxu0 0
      %581 = vmatpush1.bf16.xpose.msra.mxu0 0
      %582 = vmatprep.subr.bf16.mxu0 0
      %583 = vmatpush1.bf16.xpose.msra.mxu0 0
      %584 = vmatprep.subr.bf16.mxu0 0
      %585 = vmatpush1.bf16.xpose.msra.mxu0 0
      %586 = vmatprep.subr.bf16.mxu0 0
      %587 = vmatpush1.bf16.xpose.msra.mxu0 0
      %588 = vmatprep.subr.bf16.mxu0 0
      %589 = vmatpush1.bf16.xpose.msra.mxu0 0
      %590 = vmatprep.mubr.bf16.mxu0 0
      %591 = vmatmul.mubr.bf16.gmra.mrb[0].mxu0 %v553
      %v592 = vpop.f32.mrb[0].mxu0
      %v593 = vadd.f32 0.0, %v592
      %v594 = vpop.f32.mrb[0].mxu0
      %v595 = vpop.f32.mrb[0].mxu0
      %v596 = vpop.f32.mrb[0].mxu0
      %597 = vdwg.mxu0
      %v598 = vmul.f32 %v593, 0.088388346
      %v599 = vsel %vm265, %v598, -inf
      %600 = vmax.xlane.f32.xlu0 %v599
      %v601 = vpop.xlane.xlu0 %600
      %v602 = vsub.f32 %v598, %v601
      %v603 = vmul.f32 %v602, 1.442695
      %v604 = vpow.pop %v603
      %v605 = vsel %vm265, %v604, 0.0
      %606 = vadd.xlane.f32.xlu0 %v605
      %v607 = vpop.xlane.xlu0 %606
      %v608 = vrcp.pop %v607
      %v609 = vmul.f32 %v604, %v608
      %v610 = vpack.c.bf16 %v609, %v609
      %611 = vrot.lane.b32.xlu0 %v282, 32
      %v612 = vpop.permute.xlu0 %611
      %v615 = vsel %vm265, %v610, 0
      %617 = vmatprep.subr.bf16.mxu0 0
      %618 = vmatpush1.bf16.msra.mxu0 %v612
      %619 = vmatprep.subr.bf16.mxu0 0
      %620 = vmatpush1.bf16.msra.mxu0 0
      %621 = vmatprep.subr.bf16.mxu0 0
      %622 = vmatpush1.bf16.msra.mxu0 0
      %623 = vmatprep.subr.bf16.mxu0 0
      %624 = vmatpush1.bf16.msra.mxu0 0
      %625 = vmatprep.subr.bf16.mxu0 0
      %626 = vmatpush1.bf16.msra.mxu0 0
      %627 = vmatprep.subr.bf16.mxu0 0
      %628 = vmatpush1.bf16.msra.mxu0 0
      %629 = vmatprep.subr.bf16.mxu0 0
      %630 = vmatpush1.bf16.msra.mxu0 0
      %631 = vmatprep.subr.bf16.mxu0 0
      %632 = vmatpush1.bf16.msra.mxu0 0
      %633 = vmatprep.subr.bf16.mxu0 0
      %634 = vmatpush1.bf16.msra.mxu0 0
      %635 = vmatprep.subr.bf16.mxu0 0
      %636 = vmatpush1.bf16.msra.mxu0 0
      %637 = vmatprep.subr.bf16.mxu0 0
      %638 = vmatpush1.bf16.msra.mxu0 0
      %639 = vmatprep.subr.bf16.mxu0 0
      %640 = vmatpush1.bf16.msra.mxu0 0
      %641 = vmatprep.subr.bf16.mxu0 0
      %642 = vmatpush1.bf16.msra.mxu0 0
      %643 = vmatprep.subr.bf16.mxu0 0
      %644 = vmatpush1.bf16.msra.mxu0 0
      %645 = vmatprep.subr.bf16.mxu0 0
      %646 = vmatpush1.bf16.msra.mxu0 0
      %647 = vmatprep.subr.bf16.mxu0 0
      %648 = vmatpush1.bf16.msra.mxu0 0
      %649 = vmatprep.mubr.bf16.mxu0 0
      %650 = vmatmul.mubr.bf16.gmra.mrb[0].mxu0 %v615
      %v651 = vpop.f32.mrb[0].mxu0
      %v652 = vadd.f32 0.0, %v651
      %v653 = vpop.f32.mrb[0].mxu0
      %v654 = vpop.f32.mrb[0].mxu0
      %v655 = vpop.f32.mrb[0].mxu0
      %656 = vdwg.mxu0
      %658 = vrot.lane.b32.xlu0 %v434, 32
      %v659 = vpop.permute.xlu0 %658
      %662 = vrot.lane.b32.xlu0 %v543, 64
      %v663 = vpop.permute.xlu0 %662
      %666 = vrot.lane.b32.xlu0 %v652, 96
      %v667 = vpop.permute.xlu0 %666
      %v669 = vsel %vm217, %v322, %v659
      %vm670 = vcmask 523264
      %v671 = vsel %vm670, %v669, %v663
      %vm672 = vcmask 785408
      %v673 = vsel %vm672, %v671, %v667
      %674 = vst [vmem:[%s205] sm:$0xff] %v673
      %p675 = scmp.lt.s32.totalorder %s14, 1
      %s676 = scalar_select %p675, %s14, 1
      %s677 = smul.addr %s676, 8
      %s678 = scalar_lea.vmem %s3, %s677
      // Predicated region
      $region33: #{speller_forward.7} parent=31 // pred_check
        %p679 = pneg %p110
      $region34: #{speller_forward.7} parent=31 // pred_check_branch
        %681 = sbr.rel (%p679) target = $region36
      $region35: #{speller_forward.7} parent=31 // pred_region
        _
      $region36: #{speller_forward.7} parent=31 // pred_fallthru
        _
    $region32: #{speller_forward.7} parent=5 // pred_fallthru
      _
    %p682 = scmp.le.s32.totalorder 2, %s9
    // Predicated region
    $region37: #{speller_forward.7} parent=5 // pred_check
      %p683 = pneg %p682
    $region38: #{speller_forward.7} parent=5 // pred_check_branch
      %685 = sbr.rel (%p683) target = $region40
    $region39: #{speller_forward.7} parent=5 // pred_region
      %s686 = ssub.s32 %s9, 2
      // Predicated region
      $region41: #{speller_forward.7} parent=39 // pred_check
        %p687 = pneg %p116
      $region42: #{speller_forward.7} parent=39 // pred_check_branch
        %689 = sbr.rel (%p687) target = $region44
      $region43: #{speller_forward.7} parent=39 // pred_region
        %p690 = scmp.lt.s32.totalorder %s15, 1
        %s691 = scalar_select %p690, %s15, 1
        %s692 = smul.addr %s691, 8
        %s693 = scalar_lea.vmem %s3, %s692
      $region44: #{speller_forward.7} parent=39 // pred_fallthru
        _
    $region40: #{speller_forward.7} parent=5 // pred_fallthru
      _
  $region6: #{speller_forward.7} parent=0 // loop_footer
    %s13 = sadd.s32 1, %s9
  $region7: #{speller_forward.7} parent=0 // loop_footer_branch
    %8 = sbr.rel target = $region3
  $region8: #{speller_forward.7} parent=0 // loop_exit
    _

// kernel: speller_forward.5
$region0: #{speller_forward.5}
  #allocation0 [shape = 'u32[]', space=smem, size = 0x4, offset = 0x4, fixed_abs, tag = 'smem constant byte address 0x4 - core index']
  #allocation1 [shape = 'u32[144,128]{1,0:T(1,128)}', space=vmem, size = 0x12000, scoped, tag = 'internal scratch']
  #allocation2 [shape = 'f32[8,128]{1,0:T(8,128)}', space=vmem, size = 0x1000, scoped, tag = 'scratch operand']
  #allocation3 [shape = 'f32[8,128]{1,0:T(8,128)}', space=vmem, size = 0x1000, scoped, tag = 'scratch operand']
  %s0 = inlined_call_operand.vmem [shape: f32[8,8,512], index: 0, kind: input, shape index: {}]
  %s1 = inlined_call_operand.vmem [shape: bf16[128,512], index: 1, kind: input, shape index: {}]
  %s2 = inlined_call_operand.vmem [shape: f32[8,8,128], index: 2, kind: output, shape index: {}]
  %s3 = sld [smem:[#allocation0]]
  $region22: #{speller_forward.5} parent=0
    _
  %s5 = ssub.s32 1, %s3
  %s6 = scalar_select 0, %s5, %s3
  // Predicated region
  $region2: #{speller_forward.5} parent=0 // pred_check
    _
  $region3: #{speller_forward.5} parent=0 // pred_check_branch
    %8 = sbr.rel (0) target = $region5
  $region4: #{speller_forward.5} parent=0 // pred_region
    _
  $region5: #{speller_forward.5} parent=0 // pred_fallthru
    _
  // Predicated region
  $region6: #{speller_forward.5} parent=0 // pred_check
    _
  $region7: #{speller_forward.5} parent=0 // pred_check_branch
    %10 = sbr.rel (0) target = $region9
  $region8: #{speller_forward.5} parent=0 // pred_region
    _
  $region9: #{speller_forward.5} parent=0 // pred_fallthru
    _
  %p12 = scmp.eq.s32.totalorder 0, 0
  // Predicated region
  $region10: #{speller_forward.5} parent=0 // pred_check
    %p13 = pneg %p12
  $region11: #{speller_forward.5} parent=0 // pred_check_branch
    %15 = sbr.rel (%p13) target = $region13
  $region12: #{speller_forward.5} parent=0 // pred_region
    %16 = vst [vmem:[#allocation2] sm:$0xff] 0.0
    %17 = vst [vmem:[#allocation3] sm:$0xff] 0.0
  $region13: #{speller_forward.5} parent=0 // pred_fallthru
    _
  %v18 = vld [vmem:[#allocation2] sm:$0xff]
  %v19 = vld [vmem:[#allocation3] sm:$0xff]
  %v20 = vld [vmem:[%s0] sm:$0xff]
  %v21 = vld [vmem:[%s0 + $0x8] sm:$0xff]
  %v22 = vld [vmem:[%s0 + $0x10] sm:$0xff]
  %v23 = vld [vmem:[%s0 + $0x18] sm:$0xff]
  %v24 = vpack.c.bf16 %v18, %v18
  %v25 = vld [vmem:[%s1] sm:$0xff]
  %v26 = vld [vmem:[%s1 + $0x8] sm:$0xff]
  %v27 = vld [vmem:[%s1 + $0x10] sm:$0xff]
  %v28 = vld [vmem:[%s1 + $0x18] sm:$0xff]
  %v29 = vld [vmem:[%s1 + $0x20] sm:$0xff]
  %v30 = vld [vmem:[%s1 + $0x28] sm:$0xff]
  %v31 = vld [vmem:[%s1 + $0x30] sm:$0xff]
  %v32 = vld [vmem:[%s1 + $0x38] sm:$0xff]
  %v33 = vld [vmem:[%s1 + $0x40] sm:$0xff]
  %v34 = vld [vmem:[%s1 + $0x48] sm:$0xff]
  %v35 = vld [vmem:[%s1 + $0x50] sm:$0xff]
  %v36 = vld [vmem:[%s1 + $0x58] sm:$0xff]
  %v37 = vld [vmem:[%s1 + $0x60] sm:$0xff]
  %v38 = vld [vmem:[%s1 + $0x68] sm:$0xff]
  %v39 = vld [vmem:[%s1 + $0x70] sm:$0xff]
  %v40 = vld [vmem:[%s1 + $0x78] sm:$0xff]
  %v41 = vld [vmem:[%s1 + $0x80] sm:$0xff]
  %v42 = vld [vmem:[%s1 + $0x88] sm:$0xff]
  %v43 = vld [vmem:[%s1 + $0x90] sm:$0xff]
  %v44 = vld [vmem:[%s1 + $0x98] sm:$0xff]
  %v45 = vld [vmem:[%s1 + $0xa0] sm:$0xff]
  %v46 = vld [vmem:[%s1 + $0xa8] sm:$0xff]
  %v47 = vld [vmem:[%s1 + $0xb0] sm:$0xff]
  %v48 = vld [vmem:[%s1 + $0xb8] sm:$0xff]
  %v49 = vld [vmem:[%s1 + $0xc0] sm:$0xff]
  %v50 = vld [vmem:[%s1 + $0xc8] sm:$0xff]
  %v51 = vld [vmem:[%s1 + $0xd0] sm:$0xff]
  %v52 = vld [vmem:[%s1 + $0xd8] sm:$0xff]
  %v53 = vld [vmem:[%s1 + $0xe0] sm:$0xff]
  %v54 = vld [vmem:[%s1 + $0xe8] sm:$0xff]
  %v55 = vld [vmem:[%s1 + $0xf0] sm:$0xff]
  %v56 = vld [vmem:[%s1 + $0xf8] sm:$0xff]
  %v89 = vunpack.c.l.b16 %v25
  %v90 = vunpack.c.h.b16 %v25
  %v91 = vunpack.c.l.b16 %v26
  %v92 = vunpack.c.h.b16 %v26
  %v93 = vunpack.c.l.b16 %v27
  %v94 = vunpack.c.h.b16 %v27
  %v95 = vunpack.c.l.b16 %v28
  %v96 = vunpack.c.h.b16 %v28
  %v97 = vunpack.c.l.b16 %v29
  %v98 = vunpack.c.h.b16 %v29
  %v99 = vunpack.c.l.b16 %v30
  %v100 = vunpack.c.h.b16 %v30
  %v101 = vunpack.c.l.b16 %v31
  %v102 = vunpack.c.h.b16 %v31
  %v103 = vunpack.c.l.b16 %v32
  %v104 = vunpack.c.h.b16 %v32
  %v105 = vunpack.c.l.b16 %v33
  %v106 = vunpack.c.h.b16 %v33
  %v107 = vunpack.c.l.b16 %v34
  %v108 = vunpack.c.h.b16 %v34
  %v109 = vunpack.c.l.b16 %v35
  %v110 = vunpack.c.h.b16 %v35
  %v111 = vunpack.c.l.b16 %v36
  %v112 = vunpack.c.h.b16 %v36
  %v113 = vunpack.c.l.b16 %v37
  %v114 = vunpack.c.h.b16 %v37
  %v115 = vunpack.c.l.b16 %v38
  %v116 = vunpack.c.h.b16 %v38
  %v117 = vunpack.c.l.b16 %v39
  %v118 = vunpack.c.h.b16 %v39
  %v119 = vunpack.c.l.b16 %v40
  %v120 = vunpack.c.h.b16 %v40
  %v121 = vunpack.c.l.b16 %v41
  %v122 = vunpack.c.h.b16 %v41
  %v123 = vunpack.c.l.b16 %v42
  %v124 = vunpack.c.h.b16 %v42
  %v125 = vunpack.c.l.b16 %v43
  %v126 = vunpack.c.h.b16 %v43
  %v127 = vunpack.c.l.b16 %v44
  %v128 = vunpack.c.h.b16 %v44
  %v129 = vunpack.c.l.b16 %v45
  %v130 = vunpack.c.h.b16 %v45
  %v131 = vunpack.c.l.b16 %v46
  %v132 = vunpack.c.h.b16 %v46
  %v133 = vunpack.c.l.b16 %v47
  %v134 = vunpack.c.h.b16 %v47
  %v135 = vunpack.c.l.b16 %v48
  %v136 = vunpack.c.h.b16 %v48
  %v137 = vunpack.c.l.b16 %v49
  %v138 = vunpack.c.h.b16 %v49
  %v139 = vunpack.c.l.b16 %v50
  %v140 = vunpack.c.h.b16 %v50
  %v141 = vunpack.c.l.b16 %v51
  %v142 = vunpack.c.h.b16 %v51
  %v143 = vunpack.c.l.b16 %v52
  %v144 = vunpack.c.h.b16 %v52
  %v145 = vunpack.c.l.b16 %v53
  %v146 = vunpack.c.h.b16 %v53
  %v147 = vunpack.c.l.b16 %v54
  %v148 = vunpack.c.h.b16 %v54
  %v149 = vunpack.c.l.b16 %v55
  %v150 = vunpack.c.h.b16 %v55
  %v151 = vunpack.c.l.b16 %v56
  %v152 = vunpack.c.h.b16 %v56
  %v153 = vpack.c.b16 %v93, %v89
  %v154 = vpack.c.b16 %v94, %v90
  %v155 = vpack.c.b16 %v95, %v91
  %v156 = vpack.c.b16 %v96, %v92
  %v157 = vpack.c.b16 %v101, %v97
  %v158 = vpack.c.b16 %v102, %v98
  %v159 = vpack.c.b16 %v103, %v99
  %v160 = vpack.c.b16 %v104, %v100
  %v161 = vpack.c.b16 %v109, %v105
  %v162 = vpack.c.b16 %v110, %v106
  %v163 = vpack.c.b16 %v111, %v107
  %v164 = vpack.c.b16 %v112, %v108
  %v165 = vpack.c.b16 %v117, %v113
  %v166 = vpack.c.b16 %v118, %v114
  %v167 = vpack.c.b16 %v119, %v115
  %v168 = vpack.c.b16 %v120, %v116
  %v169 = vpack.c.b16 %v125, %v121
  %v170 = vpack.c.b16 %v126, %v122
  %v171 = vpack.c.b16 %v127, %v123
  %v172 = vpack.c.b16 %v128, %v124
  %v173 = vpack.c.b16 %v133, %v129
  %v174 = vpack.c.b16 %v134, %v130
  %v175 = vpack.c.b16 %v135, %v131
  %v176 = vpack.c.b16 %v136, %v132
  %v177 = vpack.c.b16 %v141, %v137
  %v178 = vpack.c.b16 %v142, %v138
  %v179 = vpack.c.b16 %v143, %v139
  %v180 = vpack.c.b16 %v144, %v140
  %v181 = vpack.c.b16 %v149, %v145
  %v182 = vpack.c.b16 %v150, %v146
  %v183 = vpack.c.b16 %v151, %v147
  %v184 = vpack.c.b16 %v152, %v148
  %217 = vmatprep.subr.bf16.mxu0 %v154
  %218 = vmatpush1.bf16.msra.mxu0 %v153
  %219 = vmatprep.subr.bf16.mxu0 %v158
  %220 = vmatpush1.bf16.msra.mxu0 %v157
  %221 = vmatprep.subr.bf16.mxu0 %v162
  %222 = vmatpush1.bf16.msra.mxu0 %v161
  %223 = vmatprep.subr.bf16.mxu0 %v166
  %224 = vmatpush1.bf16.msra.mxu0 %v165
  %225 = vmatprep.subr.bf16.mxu0 %v170
  %226 = vmatpush1.bf16.msra.mxu0 %v169
  %227 = vmatprep.subr.bf16.mxu0 %v174
  %228 = vmatpush1.bf16.msra.mxu0 %v173
  %229 = vmatprep.subr.bf16.mxu0 %v178
  %230 = vmatpush1.bf16.msra.mxu0 %v177
  %231 = vmatprep.subr.bf16.mxu0 %v182
  %232 = vmatpush1.bf16.msra.mxu0 %v181
  %233 = vmatprep.subr.bf16.mxu0 0
  %234 = vmatpush1.bf16.msra.mxu0 0
  %235 = vmatprep.subr.bf16.mxu0 0
  %236 = vmatpush1.bf16.msra.mxu0 0
  %237 = vmatprep.subr.bf16.mxu0 0
  %238 = vmatpush1.bf16.msra.mxu0 0
  %239 = vmatprep.subr.bf16.mxu0 0
  %240 = vmatpush1.bf16.msra.mxu0 0
  %241 = vmatprep.subr.bf16.mxu0 0
  %242 = vmatpush1.bf16.msra.mxu0 0
  %243 = vmatprep.subr.bf16.mxu0 0
  %244 = vmatpush1.bf16.msra.mxu0 0
  %245 = vmatprep.subr.bf16.mxu0 0
  %246 = vmatpush1.bf16.msra.mxu0 0
  %247 = vmatprep.subr.bf16.mxu0 0
  %248 = vmatpush1.bf16.msra.mxu0 0
  %249 = vmatprep.mubr.bf16.mxu0 0
  %250 = vmatmul.mubr.bf16.gmra.mrb[0].mxu0 %v24
  %v251 = vpop.f32.mrb[0].mxu0
  %v252 = vadd.f32 0.0, %v251
  %v253 = vpop.f32.mrb[0].mxu0
  %v254 = vadd.f32 0.0, %v253
  %v255 = vpop.f32.mrb[0].mxu0
  %v256 = vpop.f32.mrb[0].mxu0
  %257 = vdwg.mxu0
  %258 = vmatprep.subr.bf16.mxu0 %v156
  %259 = vmatpush1.bf16.msra.mxu0 %v155
  %260 = vmatprep.subr.bf16.mxu0 %v160
  %261 = vmatpush1.bf16.msra.mxu0 %v159
  %262 = vmatprep.subr.bf16.mxu0 %v164
  %263 = vmatpush1.bf16.msra.mxu0 %v163
  %264 = vmatprep.subr.bf16.mxu0 %v168
  %265 = vmatpush1.bf16.msra.mxu0 %v167
  %266 = vmatprep.subr.bf16.mxu0 %v172
  %267 = vmatpush1.bf16.msra.mxu0 %v171
  %268 = vmatprep.subr.bf16.mxu0 %v176
  %269 = vmatpush1.bf16.msra.mxu0 %v175
  %270 = vmatprep.subr.bf16.mxu0 %v180
  %271 = vmatpush1.bf16.msra.mxu0 %v179
  %272 = vmatprep.subr.bf16.mxu0 %v184
  %273 = vmatpush1.bf16.msra.mxu0 %v183
  %274 = vmatprep.subr.bf16.mxu0 0
  %275 = vmatpush1.bf16.msra.mxu0 0
  %276 = vmatprep.subr.bf16.mxu0 0
  %277 = vmatpush1.bf16.msra.mxu0 0
  %278 = vmatprep.subr.bf16.mxu0 0
  %279 = vmatpush1.bf16.msra.mxu0 0
  %280 = vmatprep.subr.bf16.mxu0 0
  %281 = vmatpush1.bf16.msra.mxu0 0
  %282 = vmatprep.subr.bf16.mxu0 0
  %283 = vmatpush1.bf16.msra.mxu0 0
  %284 = vmatprep.subr.bf16.mxu0 0
  %285 = vmatpush1.bf16.msra.mxu0 0
  %286 = vmatprep.subr.bf16.mxu0 0
  %287 = vmatpush1.bf16.msra.mxu0 0
  %288 = vmatprep.subr.bf16.mxu0 0
  %289 = vmatpush1.bf16.msra.mxu0 0
  %290 = vmatprep.mubr.bf16.mxu0 0
  %291 = vmatmul.mubr.bf16.gmra.mrb[0].mxu0 %v24
  %v292 = vpop.f32.mrb[0].mxu0
  %v293 = vadd.f32 0.0, %v292
  %v294 = vpop.f32.mrb[0].mxu0
  %v295 = vadd.f32 0.0, %v294
  %v296 = vpop.f32.mrb[0].mxu0
  %v297 = vpop.f32.mrb[0].mxu0
  %298 = vdwg.mxu0
  %v299 = vadd.f32 %v20, %v252
  %v300 = vadd.f32 %v21, %v254
  %v301 = vadd.f32 %v22, %v293
  %v302 = vadd.f32 %v23, %v295
  %v303 = vxor.u32 %v299, 2147483648
  %v304 = vxor.u32 %v300, 2147483648
  %v305 = vxor.u32 %v301, 2147483648
  %v306 = vmul.f32 %v303, 1.442695
  %v307 = vpow.pop %v306
  %v308 = vmul.f32 %v304, 1.442695
  %v309 = vpow.pop %v308
  %v310 = vmul.f32 %v305, 1.442695
  %v311 = vpow.pop %v310
  %v312 = vadd.f32 %v307, 1.0
  %v313 = vadd.f32 %v309, 1.0
  %v314 = vadd.f32 %v311, 1.0
  %v315 = vrcp.pop %v312
  %v316 = vmul.f32 1.0, %v315
  %v317 = vrcp.pop %v313
  %v318 = vmul.f32 1.0, %v317
  %v319 = vrcp.pop %v314
  %v320 = vmul.f32 1.0, %v319
  %v321 = vtanh.pop %v302
  %v322 = vmul.f32 %v318, %v19
  %v323 = vmul.f32 %v316, %v321
  %v324 = vadd.f32 %v322, %v323
  %v325 = vtanh.pop %v324
  %v326 = vmul.f32 %v320, %v325
  %327 = vst [vmem:[#allocation2] sm:$0xff] %v326
  %328 = vst [vmem:[#allocation3] sm:$0xff] %v324
  %329 = vst [vmem:[%s2] sm:$0xff] %v326
  %v330 = vld [vmem:[#allocation2] sm:$0xff]
  %v331 = vld [vmem:[#allocation3] sm:$0xff]
  %s332 = scalar_lea.vmem %s0, 32
  %v333 = vld [vmem:[%s332] sm:$0xff]
  %v334 = vld [vmem:[%s332 + $0x8] sm:$0xff]
  %v335 = vld [vmem:[%s332 + $0x10] sm:$0xff]
  %v336 = vld [vmem:[%s332 + $0x18] sm:$0xff]
  %v337 = vpack.c.bf16 %v330, %v330
  %v338 = vld [vmem:[%s1] sm:$0xff]
  %v339 = vld [vmem:[%s1 + $0x8] sm:$0xff]
  %v340 = vld [vmem:[%s1 + $0x10] sm:$0xff]
  %v341 = vld [vmem:[%s1 + $0x18] sm:$0xff]
  %v342 = vld [vmem:[%s1 + $0x20] sm:$0xff]
  %v343 = vld [vmem:[%s1 + $0x28] sm:$0xff]
  %v344 = vld [vmem:[%s1 + $0x30] sm:$0xff]
  %v345 = vld [vmem:[%s1 + $0x38] sm:$0xff]
  %v346 = vld [vmem:[%s1 + $0x40] sm:$0xff]
  %v347 = vld [vmem:[%s1 + $0x48] sm:$0xff]
  %v348 = vld [vmem:[%s1 + $0x50] sm:$0xff]
  %v349 = vld [vmem:[%s1 + $0x58] sm:$0xff]
  %v350 = vld [vmem:[%s1 + $0x60] sm:$0xff]
  %v351 = vld [vmem:[%s1 + $0x68] sm:$0xff]
  %v352 = vld [vmem:[%s1 + $0x70] sm:$0xff]
  %v353 = vld [vmem:[%s1 + $0x78] sm:$0xff]
  %v354 = vld [vmem:[%s1 + $0x80] sm:$0xff]
  %v355 = vld [vmem:[%s1 + $0x88] sm:$0xff]
  %v356 = vld [vmem:[%s1 + $0x90] sm:$0xff]
  %v357 = vld [vmem:[%s1 + $0x98] sm:$0xff]
  %v358 = vld [vmem:[%s1 + $0xa0] sm:$0xff]
  %v359 = vld [vmem:[%s1 + $0xa8] sm:$0xff]
  %v360 = vld [vmem:[%s1 + $0xb0] sm:$0xff]
  %v361 = vld [vmem:[%s1 + $0xb8] sm:$0xff]
  %v362 = vld [vmem:[%s1 + $0xc0] sm:$0xff]
  %v363 = vld [vmem:[%s1 + $0xc8] sm:$0xff]
  %v364 = vld [vmem:[%s1 + $0xd0] sm:$0xff]
  %v365 = vld [vmem:[%s1 + $0xd8] sm:$0xff]
  %v366 = vld [vmem:[%s1 + $0xe0] sm:$0xff]
  %v367 = vld [vmem:[%s1 + $0xe8] sm:$0xff]
  %v368 = vld [vmem:[%s1 + $0xf0] sm:$0xff]
  %v369 = vld [vmem:[%s1 + $0xf8] sm:$0xff]
  %v402 = vunpack.c.l.b16 %v338
  %v403 = vunpack.c.h.b16 %v338
  %v404 = vunpack.c.l.b16 %v339
  %v405 = vunpack.c.h.b16 %v339
  %v406 = vunpack.c.l.b16 %v340
  %v407 = vunpack.c.h.b16 %v340
  %v408 = vunpack.c.l.b16 %v341
  %v409 = vunpack.c.h.b16 %v341
  %v410 = vunpack.c.l.b16 %v342
  %v411 = vunpack.c.h.b16 %v342
  %v412 = vunpack.c.l.b16 %v343
  %v413 = vunpack.c.h.b16 %v343
  %v414 = vunpack.c.l.b16 %v344
  %v415 = vunpack.c.h.b16 %v344
  %v416 = vunpack.c.l.b16 %v345
  %v417 = vunpack.c.h.b16 %v345
  %v418 = vunpack.c.l.b16 %v346
  %v419 = vunpack.c.h.b16 %v346
  %v420 = vunpack.c.l.b16 %v347
  %v421 = vunpack.c.h.b16 %v347
  %v422 = vunpack.c.l.b16 %v348
  %v423 = vunpack.c.h.b16 %v348
  %v424 = vunpack.c.l.b16 %v349
  %v425 = vunpack.c.h.b16 %v349
  %v426 = vunpack.c.l.b16 %v350
  %v427 = vunpack.c.h.b16 %v350
  %v428 = vunpack.c.l.b16 %v351
  %v429 = vunpack.c.h.b16 %v351
  %v430 = vunpack.c.l.b16 %v352
  %v431 = vunpack.c.h.b16 %v352
  %v432 = vunpack.c.l.b16 %v353
  %v433 = vunpack.c.h.b16 %v353
  %v434 = vunpack.c.l.b16 %v354
  %v435 = vunpack.c.h.b16 %v354
  %v436 = vunpack.c.l.b16 %v355
  %v437 = vunpack.c.h.b16 %v355
  %v438 = vunpack.c.l.b16 %v356
  %v439 = vunpack.c.h.b16 %v356
  %v440 = vunpack.c.l.b16 %v357
  %v441 = vunpack.c.h.b16 %v357
  %v442 = vunpack.c.l.b16 %v358
  %v443 = vunpack.c.h.b16 %v358
  %v444 = vunpack.c.l.b16 %v359
  %v445 = vunpack.c.h.b16 %v359
  %v446 = vunpack.c.l.b16 %v360
  %v447 = vunpack.c.h.b16 %v360
  %v448 = vunpack.c.l.b16 %v361
  %v449 = vunpack.c.h.b16 %v361
  %v450 = vunpack.c.l.b16 %v362
  %v451 = vunpack.c.h.b16 %v362
  %v452 = vunpack.c.l.b16 %v363
  %v453 = vunpack.c.h.b16 %v363
  %v454 = vunpack.c.l.b16 %v364
  %v455 = vunpack.c.h.b16 %v364
  %v456 = vunpack.c.l.b16 %v365
  %v457 = vunpack.c.h.b16 %v365
  %v458 = vunpack.c.l.b16 %v366
  %v459 = vunpack.c.h.b16 %v366
  %v460 = vunpack.c.l.b16 %v367
  %v461 = vunpack.c.h.b16 %v367
  %v462 = vunpack.c.l.b16 %v368
  %v463 = vunpack.c.h.b16 %v368
  %v464 = vunpack.c.l.b16 %v369
  %v465 = vunpack.c.h.b16 %v369
  %v466 = vpack.c.b16 %v406, %v402
  %v467 = vpack.c.b16 %v407, %v403
  %v468 = vpack.c.b16 %v408, %v404
  %v469 = vpack.c.b16 %v409, %v405
  %v470 = vpack.c.b16 %v414, %v410
  %v471 = vpack.c.b16 %v415, %v411
  %v472 = vpack.c.b16 %v416, %v412
  %v473 = vpack.c.b16 %v417, %v413
  %v474 = vpack.c.b16 %v422, %v418
  %v475 = vpack.c.b16 %v423, %v419
  %v476 = vpack.c.b16 %v424, %v420
  %v477 = vpack.c.b16 %v425, %v421
  %v478 = vpack.c.b16 %v430, %v426
  %v479 = vpack.c.b16 %v431, %v427
  %v480 = vpack.c.b16 %v432, %v428
  %v481 = vpack.c.b16 %v433, %v429
  %v482 = vpack.c.b16 %v438, %v434
  %v483 = vpack.c.b16 %v439, %v435
  %v484 = vpack.c.b16 %v440, %v436
  %v485 = vpack.c.b16 %v441, %v437
  %v486 = vpack.c.b16 %v446, %v442
  %v487 = vpack.c.b16 %v447, %v443
  %v488 = vpack.c.b16 %v448, %v444
  %v489 = vpack.c.b16 %v449, %v445
  %v490 = vpack.c.b16 %v454, %v450
  %v491 = vpack.c.b16 %v455, %v451
  %v492 = vpack.c.b16 %v456, %v452
  %v493 = vpack.c.b16 %v457, %v453
  %v494 = vpack.c.b16 %v462, %v458
  %v495 = vpack.c.b16 %v463, %v459
  %v496 = vpack.c.b16 %v464, %v460
  %v497 = vpack.c.b16 %v465, %v461
  %530 = vmatprep.subr.bf16.mxu0 %v467
  %531 = vmatpush1.bf16.msra.mxu0 %v466
  %532 = vmatprep.subr.bf16.mxu0 %v471
  %533 = vmatpush1.bf16.msra.mxu0 %v470
  %534 = vmatprep.subr.bf16.mxu0 %v475
  %535 = vmatpush1.bf16.msra.mxu0 %v474
  %536 = vmatprep.subr.bf16.mxu0 %v479
  %537 = vmatpush1.bf16.msra.mxu0 %v478
  %538 = vmatprep.subr.bf16.mxu0 %v483
  %539 = vmatpush1.bf16.msra.mxu0 %v482
  %540 = vmatprep.subr.bf16.mxu0 %v487
  %541 = vmatpush1.bf16.msra.mxu0 %v486
  %542 = vmatprep.subr.bf16.mxu0 %v491
  %543 = vmatpush1.bf16.msra.mxu0 %v490
  %544 = vmatprep.subr.bf16.mxu0 %v495
  %545 = vmatpush1.bf16.msra.mxu0 %v494
  %546 = vmatprep.subr.bf16.mxu0 0
  %547 = vmatpush1.bf16.msra.mxu0 0
  %548 = vmatprep.subr.bf16.mxu0 0
  %549 = vmatpush1.bf16.msra.mxu0 0
  %550 = vmatprep.subr.bf16.mxu0 0
  %551 = vmatpush1.bf16.msra.mxu0 0
  %552 = vmatprep.subr.bf16.mxu0 0
  %553 = vmatpush1.bf16.msra.mxu0 0
  %554 = vmatprep.subr.bf16.mxu0 0
  %555 = vmatpush1.bf16.msra.mxu0 0
  %556 = vmatprep.subr.bf16.mxu0 0
  %557 = vmatpush1.bf16.msra.mxu0 0
  %558 = vmatprep.subr.bf16.mxu0 0
  %559 = vmatpush1.bf16.msra.mxu0 0
  %560 = vmatprep.subr.bf16.mxu0 0
  %561 = vmatpush1.bf16.msra.mxu0 0
  %562 = vmatprep.mubr.bf16.mxu0 0
  %563 = vmatmul.mubr.bf16.gmra.mrb[0].mxu0 %v337
  %v564 = vpop.f32.mrb[0].mxu0
  %v565 = vadd.f32 0.0, %v564
  %v566 = vpop.f32.mrb[0].mxu0
  %v567 = vadd.f32 0.0, %v566
  %v568 = vpop.f32.mrb[0].mxu0
  %v569 = vpop.f32.mrb[0].mxu0
  %570 = vdwg.mxu0
  %571 = vmatprep.subr.bf16.mxu0 %v469
  %572 = vmatpush1.bf16.msra.mxu0 %v468
  %573 = vmatprep.subr.bf16.mxu0 %v473
  %574 = vmatpush1.bf16.msra.mxu0 %v472
  %575 = vmatprep.subr.bf16.mxu0 %v477
  %576 = vmatpush1.bf16.msra.mxu0 %v476
  %577 = vmatprep.subr.bf16.mxu0 %v481
  %578 = vmatpush1.bf16.msra.mxu0 %v480
  %579 = vmatprep.subr.bf16.mxu0 %v485
  %580 = vmatpush1.bf16.msra.mxu0 %v484
  %581 = vmatprep.subr.bf16.mxu0 %v489
  %582 = vmatpush1.bf16.msra.mxu0 %v488
  %583 = vmatprep.subr.bf16.mxu0 %v493
  %584 = vmatpush1.bf16.msra.mxu0 %v492
  %585 = vmatprep.subr.bf16.mxu0 %v497
  %586 = vmatpush1.bf16.msra.mxu0 %v496
  %587 = vmatprep.subr.bf16.mxu0 0
  %588 = vmatpush1.bf16.msra.mxu0 0
  %589 = vmatprep.subr.bf16.mxu0 0
  %590 = vmatpush1.bf16.msra.mxu0 0
  %591 = vmatprep.subr.bf16.mxu0 0
  %592 = vmatpush1.bf16.msra.mxu0 0
  %593 = vmatprep.subr.bf16.mxu0 0
  %594 = vmatpush1.bf16.msra.mxu0 0
  %595 = vmatprep.subr.bf16.mxu0 0
  %596 = vmatpush1.bf16.msra.mxu0 0
  %597 = vmatprep.subr.bf16.mxu0 0
  %598 = vmatpush1.bf16.msra.mxu0 0
  %599 = vmatprep.subr.bf16.mxu0 0
  %600 = vmatpush1.bf16.msra.mxu0 0
  %601 = vmatprep.subr.bf16.mxu0 0
  %602 = vmatpush1.bf16.msra.mxu0 0
  %603 = vmatprep.mubr.bf16.mxu0 0
  %604 = vmatmul.mubr.bf16.gmra.mrb[0].mxu0 %v337
  %v605 = vpop.f32.mrb[0].mxu0
  %v606 = vadd.f32 0.0, %v605
  %v607 = vpop.f32.mrb[0].mxu0
  %v608 = vadd.f32 0.0, %v607
  %v609 = vpop.f32.mrb[0].mxu0
  %v610 = vpop.f32.mrb[0].mxu0
  %611 = vdwg.mxu0
  %v612 = vadd.f32 %v333, %v565
  %v613 = vadd.f32 %v334, %v567
  %v614 = vadd.f32 %v335, %v606
  %v615 = vadd.f32 %v336, %v608
  %v616 = vxor.u32 %v612, 2147483648
  %v617 = vxor.u32 %v613, 2147483648
  %v618 = vxor.u32 %v614, 2147483648
  %v619 = vmul.f32 %v616, 1.442695
  %v620 = vpow.pop %v619
  %v621 = vmul.f32 %v617, 1.442695
  %v622 = vpow.pop %v621
  %v623 = vmul.f32 %v618, 1.442695
  %v624 = vpow.pop %v623
  %v625 = vadd.f32 %v620, 1.0
  %v626 = vadd.f32 %v622, 1.0
  %v627 = vadd.f32 %v624, 1.0
  %v628 = vrcp.pop %v625
  %v629 = vmul.f32 1.0, %v628
  %v630 = vrcp.pop %v626
  %v631 = vmul.f32 1.0, %v630
  %v632 = vrcp.pop %v627
  %v633 = vmul.f32 1.0, %v632
  %v634 = vtanh.pop %v615
  %v635 = vmul.f32 %v631, %v331
  %v636 = vmul.f32 %v629, %v634
  %v637 = vadd.f32 %v635, %v636
  %v638 = vtanh.pop %v637
  %v639 = vmul.f32 %v633, %v638
  %640 = vst [vmem:[#allocation2] sm:$0xff] %v639
  %641 = vst [vmem:[#allocation3] sm:$0xff] %v637
  %s642 = scalar_lea.vmem %s2, 8
  %643 = vst [vmem:[%s642] sm:$0xff] %v639
  %v644 = vld [vmem:[#allocation2] sm:$0xff]
  %v645 = vld [vmem:[#allocation3] sm:$0xff]
  %s646 = scalar_lea.vmem %s0, 64
  %v647 = vld [vmem:[%s646] sm:$0xff]
  %v648 = vld [vmem:[%s646 + $0x8] sm:$0xff]
  %v649 = vld [vmem:[%s646 + $0x10] sm:$0xff]
  %v650 = vld [vmem:[%s646 + $0x18] sm:$0xff]
  %v651 = vpack.c.bf16 %v644, %v644
  %v652 = vld [vmem:[%s1] sm:$0xff]
  %v653 = vld [vmem:[%s1 + $0x8] sm:$0xff]
  %v654 = vld [vmem:[%s1 + $0x10] sm:$0xff]
  %v655 = vld [vmem:[%s1 + $0x18] sm:$0xff]
  %v656 = vld [vmem:[%s1 + $0x20] sm:$0xff]
  %v657 = vld [vmem:[%s1 + $0x28] sm:$0xff]
  %v658 = vld [vmem:[%s1 + $0x30] sm:$0xff]
  %v659 = vld [vmem:[%s1 + $0x38] sm:$0xff]
  %v660 = vld [vmem:[%s1 + $0x40] sm:$0xff]
  %v661 = vld [vmem:[%s1 + $0x48] sm:$0xff]
  %v662 = vld [vmem:[%s1 + $0x50] sm:$0xff]
  %v663 = vld [vmem:[%s1 + $0x58] sm:$0xff]
  %v664 = vld [vmem:[%s1 + $0x60] sm:$0xff]
  %v665 = vld [vmem:[%s1 + $0x68] sm:$0xff]
  %v666 = vld [vmem:[%s1 + $0x70] sm:$0xff]
  %v667 = vld [vmem:[%s1 + $0x78] sm:$0xff]
  %v668 = vld [vmem:[%s1 + $0x80] sm:$0xff]
  %v669 = vld [vmem:[%s1 + $0x88] sm:$0xff]
  %v670 = vld [vmem:[%s1 + $0x90] sm:$0xff]
  %v671 = vld [vmem:[%s1 + $0x98] sm:$0xff]
  %v672 = vld [vmem:[%s1 + $0xa0] sm:$0xff]
  %v673 = vld [vmem:[%s1 + $0xa8] sm:$0xff]
  %v674 = vld [vmem:[%s1 + $0xb0] sm:$0xff]
  %v675 = vld [vmem:[%s1 + $0xb8] sm:$0xff]
  %v676 = vld [vmem:[%s1 + $0xc0] sm:$0xff]
  %v677 = vld [vmem:[%s1 + $0xc8] sm:$0xff]
  %v678 = vld [vmem:[%s1 + $0xd0] sm:$0xff]
  %v679 = vld [vmem:[%s1 + $0xd8] sm:$0xff]
  %v680 = vld [vmem:[%s1 + $0xe0] sm:$0xff]
  %v681 = vld [vmem:[%s1 + $0xe8] sm:$0xff]
  %v682 = vld [vmem:[%s1 + $0xf0] sm:$0xff]
  %v683 = vld [vmem:[%s1 + $0xf8] sm:$0xff]
  %v716 = vunpack.c.l.b16 %v652
  %v717 = vunpack.c.h.b16 %v652
  %v718 = vunpack.c.l.b16 %v653
  %v719 = vunpack.c.h.b16 %v653
  %v720 = vunpack.c.l.b16 %v654
  %v721 = vunpack.c.h.b16 %v654
  %v722 = vunpack.c.l.b16 %v655
  %v723 = vunpack.c.h.b16 %v655
  %v724 = vunpack.c.l.b16 %v656
  %v725 = vunpack.c.h.b16 %v656
  %v726 = vunpack.c.l.b16 %v657
  %v727 = vunpack.c.h.b16 %v657
  %v728 = vunpack.c.l.b16 %v658
  %v729 = vunpack.c.h.b16 %v658
  %v730 = vunpack.c.l.b16 %v659
  %v731 = vunpack.c.h.b16 %v659
  %v732 = vunpack.c.l.b16 %v660
  %v733 = vunpack.c.h.b16 %v660
  %v734 = vunpack.c.l.b16 %v661
  %v735 = vunpack.c.h.b16 %v661
  %v736 = vunpack.c.l.b16 %v662
  %v737 = vunpack.c.h.b16 %v662
  %v738 = vunpack.c.l.b16 %v663
  %v739 = vunpack.c.h.b16 %v663
  %v740 = vunpack.c.l.b16 %v664
  %v741 = vunpack.c.h.b16 %v664
  %v742 = vunpack.c.l.b16 %v665
  %v743 = vunpack.c.h.b16 %v665
  %v744 = vunpack.c.l.b16 %v666
  %v745 = vunpack.c.h.b16 %v666
  %v746 = vunpack.c.l.b16 %v667
  %v747 = vunpack.c.h.b16 %v667
  %v748 = vunpack.c.l.b16 %v668
  %v749 = vunpack.c.h.b16 %v668
  %v750 = vunpack.c.l.b16 %v669
  %v751 = vunpack.c.h.b16 %v669
  %v752 = vunpack.c.l.b16 %v670
  %v753 = vunpack.c.h.b16 %v670
  %v754 = vunpack.c.l.b16 %v671
  %v755 = vunpack.c.h.b16 %v671
  %v756 = vunpack.c.l.b16 %v672
  %v757 = vunpack.c.h.b16 %v672
  %v758 = vunpack.c.l.b16 %v673
  %v759 = vunpack.c.h.b16 %v673
  %v760 = vunpack.c.l.b16 %v674
  %v761 = vunpack.c.h.b16 %v674
  %v762 = vunpack.c.l.b16 %v675
  %v763 = vunpack.c.h.b16 %v675
  %v764 = vunpack.c.l.b16 %v676
  %v765 = vunpack.c.h.b16 %v676
  %v766 = vunpack.c.l.b16 %v677
  %v767 = vunpack.c.h.b16 %v677
  %v768 = vunpack.c.l.b16 %v678
  %v769 = vunpack.c.h.b16 %v678
  %v770 = vunpack.c.l.b16 %v679
  %v771 = vunpack.c.h.b16 %v679
  %v772 = vunpack.c.l.b16 %v680
  %v773 = vunpack.c.h.b16 %v680
  %v774 = vunpack.c.l.b16 %v681
  %v775 = vunpack.c.h.b16 %v681
  %v776 = vunpack.c.l.b16 %v682
  %v777 = vunpack.c.h.b16 %v682
  %v778 = vunpack.c.l.b16 %v683
  %v779 = vunpack.c.h.b16 %v683
  %v780 = vpack.c.b16 %v720, %v716
  %v781 = vpack.c.b16 %v721, %v717
  %v782 = vpack.c.b16 %v722, %v718
  %v783 = vpack.c.b16 %v723, %v719
  %v784 = vpack.c.b16 %v728, %v724
  %v785 = vpack.c.b16 %v729, %v725
  %v786 = vpack.c.b16 %v730, %v726
  %v787 = vpack.c.b16 %v731, %v727
  %v788 = vpack.c.b16 %v736, %v732
  %v789 = vpack.c.b16 %v737, %v733
  %v790 = vpack.c.b16 %v738, %v734
  %v791 = vpack.c.b16 %v739, %v735
  %v792 = vpack.c.b16 %v744, %v740
  %v793 = vpack.c.b16 %v745, %v741
  %v794 = vpack.c.b16 %v746, %v742
  %v795 = vpack.c.b16 %v747, %v743
  %v796 = vpack.c.b16 %v752, %v748
  %v797 = vpack.c.b16 %v753, %v749
  %v798 = vpack.c.b16 %v754, %v750
  %v799 = vpack.c.b16 %v755, %v751
  %v800 = vpack.c.b16 %v760, %v756
  %v801 = vpack.c.b16 %v761, %v757
  %v802 = vpack.c.b16 %v762, %v758
  %v803 = vpack.c.b16 %v763, %v759
  %v804 = vpack.c.b16 %v768, %v764
  %v805 = vpack.c.b16 %v769, %v765
  %v806 = vpack.c.b16 %v770, %v766
  %v807 = vpack.c.b16 %v771, %v767
  %v808 = vpack.c.b16 %v776, %v772
  %v809 = vpack.c.b16 %v777, %v773
  %v810 = vpack.c.b16 %v778, %v774
  %v811 = vpack.c.b16 %v779, %v775
  %844 = vmatprep.subr.bf16.mxu0 %v781
  %845 = vmatpush1.bf16.msra.mxu0 %v780
  %846 = vmatprep.subr.bf16.mxu0 %v785
  %847 = vmatpush1.bf16.msra.mxu0 %v784
  %848 = vmatprep.subr.bf16.mxu0 %v789
  %849 = vmatpush1.bf16.msra.mxu0 %v788
  %850 = vmatprep.subr.bf16.mxu0 %v793
  %851 = vmatpush1.bf16.msra.mxu0 %v792
  %852 = vmatprep.subr.bf16.mxu0 %v797
  %853 = vmatpush1.bf16.msra.mxu0 %v796
  %854 = vmatprep.subr.bf16.mxu0 %v801
  %855 = vmatpush1.bf16.msra.mxu0 %v800
  %856 = vmatprep.subr.bf16.mxu0 %v805
  %857 = vmatpush1.bf16.msra.mxu0 %v804
  %858 = vmatprep.subr.bf16.mxu0 %v809
  %859 = vmatpush1.bf16.msra.mxu0 %v808
  %860 = vmatprep.subr.bf16.mxu0 0
  %861 = vmatpush1.bf16.msra.mxu0 0
  %862 = vmatprep.subr.bf16.mxu0 0
  %863 = vmatpush1.bf16.msra.mxu0 0
  %864 = vmatprep.subr.bf16.mxu0 0
  %865 = vmatpush1.bf16.msra.mxu0 0
  %866 = vmatprep.subr.bf16.mxu0 0
  %867 = vmatpush1.bf16.msra.mxu0 0
  %868 = vmatprep.subr.bf16.mxu0 0
  %869 = vmatpush1.bf16.msra.mxu0 0
  %870 = vmatprep.subr.bf16.mxu0 0
  %871 = vmatpush1.bf16.msra.mxu0 0
  %872 = vmatprep.subr.bf16.mxu0 0
  %873 = vmatpush1.bf16.msra.mxu0 0
  %874 = vmatprep.subr.bf16.mxu0 0
  %875 = vmatpush1.bf16.msra.mxu0 0
  %876 = vmatprep.mubr.bf16.mxu0 0
  %877 = vmatmul.mubr.bf16.gmra.mrb[0].mxu0 %v651
  %v878 = vpop.f32.mrb[0].mxu0
  %v879 = vadd.f32 0.0, %v878
  %v880 = vpop.f32.mrb[0].mxu0
  %v881 = vadd.f32 0.0, %v880
  %v882 = vpop.f32.mrb[0].mxu0
  %v883 = vpop.f32.mrb[0].mxu0
  %884 = vdwg.mxu0
  %885 = vmatprep.subr.bf16.mxu0 %v783
  %886 = vmatpush1.bf16.msra.mxu0 %v782
  %887 = vmatprep.subr.bf16.mxu0 %v787
  %888 = vmatpush1.bf16.msra.mxu0 %v786
  %889 = vmatprep.subr.bf16.mxu0 %v791
  %890 = vmatpush1.bf16.msra.mxu0 %v790
  %891 = vmatprep.subr.bf16.mxu0 %v795
  %892 = vmatpush1.bf16.msra.mxu0 %v794
  %893 = vmatprep.subr.bf16.mxu0 %v799
  %894 = vmatpush1.bf16.msra.mxu0 %v798
  %895 = vmatprep.subr.bf16.mxu0 %v803
  %896 = vmatpush1.bf16.msra.mxu0 %v802
  %897 = vmatprep.subr.bf16.mxu0 %v807
  %898 = vmatpush1.bf16.msra.mxu0 %v806
  %899 = vmatprep.subr.bf16.mxu0 %v811
  %900 = vmatpush1.bf16.msra.mxu0 %v810
  %901 = vmatprep.subr.bf16.mxu0 0
  %902 = vmatpush1.bf16.msra.mxu0 0
  %903 = vmatprep.subr.bf16.mxu0 0
  %904 = vmatpush1.bf16.msra.mxu0 0
  %905 = vmatprep.subr.bf16.mxu0 0
  %906 = vmatpush1.bf16.msra.mxu0 0
  %907 = vmatprep.subr.bf16.mxu0 0
  %908 = vmatpush1.bf16.msra.mxu0 0
  %909 = vmatprep.subr.bf16.mxu0 0
  %910 = vmatpush1.bf16.msra.mxu0 0
  %911 = vmatprep.subr.bf16.mxu0 0
  %912 = vmatpush1.bf16.msra.mxu0 0
  %913 = vmatprep.subr.bf16.mxu0 0
  %914 = vmatpush1.bf16.msra.mxu0 0
  %915 = vmatprep.subr.bf16.mxu0 0
  %916 = vmatpush1.bf16.msra.mxu0 0
  %917 = vmatprep.mubr.bf16.mxu0 0
  %918 = vmatmul.mubr.bf16.gmra.mrb[0].mxu0 %v651
  %v919 = vpop.f32.mrb[0].mxu0
  %v920 = vadd.f32 0.0, %v919
  %v921 = vpop.f32.mrb[0].mxu0
  %v922 = vadd.f32 0.0, %v921
  %v923 = vpop.f32.mrb[0].mxu0
  %v924 = vpop.f32.mrb[0].mxu0
  %925 = vdwg.mxu0
  %v926 = vadd.f32 %v647, %v879
  %v927 = vadd.f32 %v648, %v881
  %v928 = vadd.f32 %v649, %v920
  %v929 = vadd.f32 %v650, %v922
  %v930 = vxor.u32 %v926, 2147483648
  %v931 = vxor.u32 %v927, 2147483648
  %v932 = vxor.u32 %v928, 2147483648
  %v933 = vmul.f32 %v930, 1.442695
  %v934 = vpow.pop %v933
  %v935 = vmul.f32 %v931, 1.442695
  %v936 = vpow.pop %v935
  %v937 = vmul.f32 %v932, 1.442695
  %v938 = vpow.pop %v937
  %v939 = vadd.f32 %v934, 1.0
  %v940 = vadd.f32 %v936, 1.0
  %v941 = vadd.f32 %v938, 1.0
  %v942 = vrcp.pop %v939
  %v943 = vmul.f32 1.0, %v942
  %v944 = vrcp.pop %v940
  %v945 = vmul.f32 1.0, %v944
  %v946 = vrcp.pop %v941
  %v947 = vmul.f32 1.0, %v946
  %v948 = vtanh.pop %v929
  %v949 = vmul.f32 %v945, %v645
  %v950 = vmul.f32 %v943, %v948
  %v951 = vadd.f32 %v949, %v950
  %v952 = vtanh.pop %v951
  %v953 = vmul.f32 %v947, %v952
  %954 = vst [vmem:[#allocation2] sm:$0xff] %v953
  %955 = vst [vmem:[#allocation3] sm:$0xff] %v951
  %s956 = scalar_lea.vmem %s2, 16
  %957 = vst [vmem:[%s956] sm:$0xff] %v953
  %v958 = vld [vmem:[#allocation2] sm:$0xff]
  %v959 = vld [vmem:[#allocation3] sm:$0xff]
  %s960 = scalar_lea.vmem %s0, 96
  %v961 = vld [vmem:[%s960] sm:$0xff]
  %v962 = vld [vmem:[%s960 + $0x8] sm:$0xff]
  %v963 = vld [vmem:[%s960 + $0x10] sm:$0xff]
  %v964 = vld [vmem:[%s960 + $0x18] sm:$0xff]
  %v965 = vpack.c.bf16 %v958, %v958
  %v966 = vld [vmem:[%s1] sm:$0xff]
  %v967 = vld [vmem:[%s1 + $0x8] sm:$0xff]
  %v968 = vld [vmem:[%s1 + $0x10] sm:$0xff]
  %v969 = vld [vmem:[%s1 + $0x18] sm:$0xff]
  %v970 = vld [vmem:[%s1 + $0x20] sm:$0xff]
  %v971 = vld [vmem:[%s1 + $0x28] sm:$0xff]
  %v972 = vld [vmem:[%s1 + $0x30] sm:$0xff]
  %v973 = vld [vmem:[%s1 + $0x38] sm:$0xff]
  %v974 = vld [vmem:[%s1 + $0x40] sm:$0xff]
  %v975 = vld [vmem:[%s1 + $0x48] sm:$0xff]
  %v976 = vld [vmem:[%s1 + $0x50] sm:$0xff]
  %v977 = vld [vmem:[%s1 + $0x58] sm:$0xff]
  %v978 = vld [vmem:[%s1 + $0x60] sm:$0xff]
  %v979 = vld [vmem:[%s1 + $0x68] sm:$0xff]
  %v980 = vld [vmem:[%s1 + $0x70] sm:$0xff]
  %v981 = vld [vmem:[%s1 + $0x78] sm:$0xff]
  %v982 = vld [vmem:[%s1 + $0x80] sm:$0xff]
  %v983 = vld [vmem:[%s1 + $0x88] sm:$0xff]
  %v984 = vld [vmem:[%s1 + $0x90] sm:$0xff]
  %v985 = vld [vmem:[%s1 + $0x98] sm:$0xff]
  %v986 = vld [vmem:[%s1 + $0xa0] sm:$0xff]
  %v987 = vld [vmem:[%s1 + $0xa8] sm:$0xff]
  %v988 = vld [vmem:[%s1 + $0xb0] sm:$0xff]
  %v989 = vld [vmem:[%s1 + $0xb8] sm:$0xff]
  %v990 = vld [vmem:[%s1 + $0xc0] sm:$0xff]
  %v991 = vld [vmem:[%s1 + $0xc8] sm:$0xff]
  %v992 = vld [vmem:[%s1 + $0xd0] sm:$0xff]
  %v993 = vld [vmem:[%s1 + $0xd8] sm:$0xff]
  %v994 = vld [vmem:[%s1 + $0xe0] sm:$0xff]
  %v995 = vld [vmem:[%s1 + $0xe8] sm:$0xff]
  %v996 = vld [vmem:[%s1 + $0xf0] sm:$0xff]
  %v997 = vld [vmem:[%s1 + $0xf8] sm:$0xff]
  %v1030 = vunpack.c.l.b16 %v966
  %v1031 = vunpack.c.h.b16 %v966
  %v1032 = vunpack.c.l.b16 %v967
  %v1033 = vunpack.c.h.b16 %v967
  %v1034 = vunpack.c.l.b16 %v968
  %v1035 = vunpack.c.h.b16 %v968
  %v1036 = vunpack.c.l.b16 %v969
  %v1037 = vunpack.c.h.b16 %v969
  %v1038 = vunpack.c.l.b16 %v970
  %v1039 = vunpack.c.h.b16 %v970
  %v1040 = vunpack.c.l.b16 %v971
  %v1041 = vunpack.c.h.b16 %v971
  %v1042 = vunpack.c.l.b16 %v972
  %v1043 = vunpack.c.h.b16 %v972
  %v1044 = vunpack.c.l.b16 %v973
  %v1045 = vunpack.c.h.b16 %v973
  %v1046 = vunpack.c.l.b16 %v974
  %v1047 = vunpack.c.h.b16 %v974
  %v1048 = vunpack.c.l.b16 %v975
  %v1049 = vunpack.c.h.b16 %v975
  %v1050 = vunpack.c.l.b16 %v976
  %v1051 = vunpack.c.h.b16 %v976
  %v1052 = vunpack.c.l.b16 %v977
  %v1053 = vunpack.c.h.b16 %v977
  %v1054 = vunpack.c.l.b16 %v978
  %v1055 = vunpack.c.h.b16 %v978
  %v1056 = vunpack.c.l.b16 %v979
  %v1057 = vunpack.c.h.b16 %v979
  %v1058 = vunpack.c.l.b16 %v980
  %v1059 = vunpack.c.h.b16 %v980
  %v1060 = vunpack.c.l.b16 %v981
  %v1061 = vunpack.c.h.b16 %v981
  %v1062 = vunpack.c.l.b16 %v982
  %v1063 = vunpack.c.h.b16 %v982
  %v1064 = vunpack.c.l.b16 %v983
  %v1065 = vunpack.c.h.b16 %v983
  %v1066 = vunpack.c.l.b16 %v984
  %v1067 = vunpack.c.h.b16 %v984
  %v1068 = vunpack.c.l.b16 %v985
  %v1069 = vunpack.c.h.b16 %v985
  %v1070 = vunpack.c.l.b16 %v986
  %v1071 = vunpack.c.h.b16 %v986
  %v1072 = vunpack.c.l.b16 %v987
  %v1073 = vunpack.c.h.b16 %v987
  %v1074 = vunpack.c.l.b16 %v988
  %v1075 = vunpack.c.h.b16 %v988
  %v1076 = vunpack.c.l.b16 %v989
  %v1077 = vunpack.c.h.b16 %v989
  %v1078 = vunpack.c.l.b16 %v990
  %v1079 = vunpack.c.h.b16 %v990
  %v1080 = vunpack.c.l.b16 %v991
  %v1081 = vunpack.c.h.b16 %v991
  %v1082 = vunpack.c.l.b16 %v992
  %v1083 = vunpack.c.h.b16 %v992
  %v1084 = vunpack.c.l.b16 %v993
  %v1085 = vunpack.c.h.b16 %v993
  %v1086 = vunpack.c.l.b16 %v994
  %v1087 = vunpack.c.h.b16 %v994
  %v1088 = vunpack.c.l.b16 %v995
  %v1089 = vunpack.c.h.b16 %v995
  %v1090 = vunpack.c.l.b16 %v996
  %v1091 = vunpack.c.h.b16 %v996
  %v1092 = vunpack.c.l.b16 %v997
  %v1093 = vunpack.c.h.b16 %v997
  %v1094 = vpack.c.b16 %v1034, %v1030
  %v1095 = vpack.c.b16 %v1035, %v1031
  %v1096 = vpack.c.b16 %v1036, %v1032
  %v1097 = vpack.c.b16 %v1037, %v1033
  %v1098 = vpack.c.b16 %v1042, %v1038
  %v1099 = vpack.c.b16 %v1043, %v1039
  %v1100 = vpack.c.b16 %v1044, %v1040
  %v1101 = vpack.c.b16 %v1045, %v1041
  %v1102 = vpack.c.b16 %v1050, %v1046
  %v1103 = vpack.c.b16 %v1051, %v1047
  %v1104 = vpack.c.b16 %v1052, %v1048
  %v1105 = vpack.c.b16 %v1053, %v1049
  %v1106 = vpack.c.b16 %v1058, %v1054
  %v1107 = vpack.c.b16 %v1059, %v1055
  %v1108 = vpack.c.b16 %v1060, %v1056
  %v1109 = vpack.c.b16 %v1061, %v1057
  %v1110 = vpack.c.b16 %v1066, %v1062
  %v1111 = vpack.c.b16 %v1067, %v1063
  %v1112 = vpack.c.b16 %v1068, %v1064
  %v1113 = vpack.c.b16 %v1069, %v1065
  %v1114 = vpack.c.b16 %v1074, %v1070
  %v1115 = vpack.c.b16 %v1075, %v1071
  %v1116 = vpack.c.b16 %v1076, %v1072
  %v1117 = vpack.c.b16 %v1077, %v1073
  %v1118 = vpack.c.b16 %v1082, %v1078
  %v1119 = vpack.c.b16 %v1083, %v1079
  %v1120 = vpack.c.b16 %v1084, %v1080
  %v1121 = vpack.c.b16 %v1085, %v1081
  %v1122 = vpack.c.b16 %v1090, %v1086
  %v1123 = vpack.c.b16 %v1091, %v1087
  %v1124 = vpack.c.b16 %v1092, %v1088
  %v1125 = vpack.c.b16 %v1093, %v1089
  %1158 = vmatprep.subr.bf16.mxu0 %v1095
  %1159 = vmatpush1.bf16.msra.mxu0 %v1094
  %1160 = vmatprep.subr.bf16.mxu0 %v1099
  %1161 = vmatpush1.bf16.msra.mxu0 %v1098
  %1162 = vmatprep.subr.bf16.mxu0 %v1103
  %1163 = vmatpush1.bf16.msra.mxu0 %v1102
  %1164 = vmatprep.subr.bf16.mxu0 %v1107
  %1165 = vmatpush1.bf16.msra.mxu0 %v1106
  %1166 = vmatprep.subr.bf16.mxu0 %v1111
  %1167 = vmatpush1.bf16.msra.mxu0 %v1110
  %1168 = vmatprep.subr.bf16.mxu0 %v1115
  %1169 = vmatpush1.bf16.msra.mxu0 %v1114
  %1170 = vmatprep.subr.bf16.mxu0 %v1119
  %1171 = vmatpush1.bf16.msra.mxu0 %v1118
  %1172 = vmatprep.subr.bf16.mxu0 %v1123
  %1173 = vmatpush1.bf16.msra.mxu0 %v1122
  %1174 = vmatprep.subr.bf16.mxu0 0
  %1175 = vmatpush1.bf16.msra.mxu0 0
  %1176 = vmatprep.subr.bf16.mxu0 0
  %1177 = vmatpush1.bf16.msra.mxu0 0
  %1178 = vmatprep.subr.bf16.mxu0 0
  %1179 = vmatpush1.bf16.msra.mxu0 0
  %1180 = vmatprep.subr.bf16.mxu0 0
  %1181 = vmatpush1.bf16.msra.mxu0 0
  %1182 = vmatprep.subr.bf16.mxu0 0
  %1183 = vmatpush1.bf16.msra.mxu0 0
  %1184 = vmatprep.subr.bf16.mxu0 0
  %1185 = vmatpush1.bf16.msra.mxu0 0
  %1186 = vmatprep.subr.bf16.mxu0 0
  %1187 = vmatpush1.bf16.msra.mxu0 0
  %1188 = vmatprep.subr.bf16.mxu0 0
  %1189 = vmatpush1.bf16.msra.mxu0 0
  %1190 = vmatprep.mubr.bf16.mxu0 0
  %1191 = vmatmul.mubr.bf16.gmra.mrb[0].mxu0 %v965
  %v1192 = vpop.f32.mrb[0].mxu0
  %v1193 = vadd.f32 0.0, %v1192
  %v1194 = vpop.f32.mrb[0].mxu0
  %v1195 = vadd.f32 0.0, %v1194
  %v1196 = vpop.f32.mrb[0].mxu0
  %v1197 = vpop.f32.mrb[0].mxu0
  %1198 = vdwg.mxu0
  %1199 = vmatprep.subr.bf16.mxu0 %v1097
  %1200 = vmatpush1.bf16.msra.mxu0 %v1096
  %1201 = vmatprep.subr.bf16.mxu0 %v1101
  %1202 = vmatpush1.bf16.msra.mxu0 %v1100
  %1203 = vmatprep.subr.bf16.mxu0 %v1105
  %1204 = vmatpush1.bf16.msra.mxu0 %v1104
  %1205 = vmatprep.subr.bf16.mxu0 %v1109
  %1206 = vmatpush1.bf16.msra.mxu0 %v1108
  %1207 = vmatprep.subr.bf16.mxu0 %v1113
  %1208 = vmatpush1.bf16.msra.mxu0 %v1112
  %1209 = vmatprep.subr.bf16.mxu0 %v1117
  %1210 = vmatpush1.bf16.msra.mxu0 %v1116
  %1211 = vmatprep.subr.bf16.mxu0 %v1121
  %1212 = vmatpush1.bf16.msra.mxu0 %v1120
  %1213 = vmatprep.subr.bf16.mxu0 %v1125
  %1214 = vmatpush1.bf16.msra.mxu0 %v1124
  %1215 = vmatprep.subr.bf16.mxu0 0
  %1216 = vmatpush1.bf16.msra.mxu0 0
  %1217 = vmatprep.subr.bf16.mxu0 0
  %1218 = vmatpush1.bf16.msra.mxu0 0
  %1219 = vmatprep.subr.bf16.mxu0 0
  %1220 = vmatpush1.bf16.msra.mxu0 0
  %1221 = vmatprep.subr.bf16.mxu0 0
  %1222 = vmatpush1.bf16.msra.mxu0 0
  %1223 = vmatprep.subr.bf16.mxu0 0
  %1224 = vmatpush1.bf16.msra.mxu0 0
  %1225 = vmatprep.subr.bf16.mxu0 0
  %1226 = vmatpush1.bf16.msra.mxu0 0
  %1227 = vmatprep.subr.bf16.mxu0 0
  %1228 = vmatpush1.bf16.msra.mxu0 0
  %1229 = vmatprep.subr.bf16.mxu0 0
  %1230 = vmatpush1.bf16.msra.mxu0 0
  %1231 = vmatprep.mubr.bf16.mxu0 0
  %1232 = vmatmul.mubr.bf16.gmra.mrb[0].mxu0 %v965
  %v1233 = vpop.f32.mrb[0].mxu0
  %v1234 = vadd.f32 0.0, %v1233
  %v1235 = vpop.f32.mrb[0].mxu0
  %v1236 = vadd.f32 0.0, %v1235
  %v1237 = vpop.f32.mrb[0].mxu0
  %v1238 = vpop.f32.mrb[0].mxu0
  %1239 = vdwg.mxu0
  %v1240 = vadd.f32 %v961, %v1193
  %v1241 = vadd.f32 %v962, %v1195
  %v1242 = vadd.f32 %v963, %v1234
  %v1243 = vadd.f32 %v964, %v1236
  %v1244 = vxor.u32 %v1240, 2147483648
  %v1245 = vxor.u32 %v1241, 2147483648
  %v1246 = vxor.u32 %v1242, 2147483648
  %v1247 = vmul.f32 %v1244, 1.442695
  %v1248 = vpow.pop %v1247
  %v1249 = vmul.f32 %v1245, 1.442695
  %v1250 = vpow.pop %v1249
  %v1251 = vmul.f32 %v1246, 1.442695
  %v1252 = vpow.pop %v1251
  %v1253 = vadd.f32 %v1248, 1.0
  %v1254 = vadd.f32 %v1250, 1.0
  %v1255 = vadd.f32 %v1252, 1.0
  %v1256 = vrcp.pop %v1253
  %v1257 = vmul.f32 1.0, %v1256
  %v1258 = vrcp.pop %v1254
  %v1259 = vmul.f32 1.0, %v1258
  %v1260 = vrcp.pop %v1255
  %v1261 = vmul.f32 1.0, %v1260
  %v1262 = vtanh.pop %v1243
  %v1263 = vmul.f32 %v1259, %v959
  %v1264 = vmul.f32 %v1257, %v1262
  %v1265 = vadd.f32 %v1263, %v1264
  %v1266 = vtanh.pop %v1265
  %v1267 = vmul.f32 %v1261, %v1266
  %1268 = vst [vmem:[#allocation2] sm:$0xff] %v1267
  %1269 = vst [vmem:[#allocation3] sm:$0xff] %v1265
  %s1270 = scalar_lea.vmem %s2, 24
  %1271 = vst [vmem:[%s1270] sm:$0xff] %v1267
  %v1272 = vld [vmem:[#allocation2] sm:$0xff]
  %v1273 = vld [vmem:[#allocation3] sm:$0xff]
  %s1274 = scalar_lea.vmem %s0, 128
  %v1275 = vld [vmem:[%s1274] sm:$0xff]
  %v1276 = vld [vmem:[%s1274 + $0x8] sm:$0xff]
  %v1277 = vld [vmem:[%s1274 + $0x10] sm:$0xff]
  %v1278 = vld [vmem:[%s1274 + $0x18] sm:$0xff]
  %v1279 = vpack.c.bf16 %v1272, %v1272
  %v1280 = vld [vmem:[%s1] sm:$0xff]
  %v1281 = vld [vmem:[%s1 + $0x8] sm:$0xff]
  %v1282 = vld [vmem:[%s1 + $0x10] sm:$0xff]
  %v1283 = vld [vmem:[%s1 + $0x18] sm:$0xff]
  %v1284 = vld [vmem:[%s1 + $0x20] sm:$0xff]
  %v1285 = vld [vmem:[%s1 + $0x28] sm:$0xff]
  %v1286 = vld [vmem:[%s1 + $0x30] sm:$0xff]
  %v1287 = vld [vmem:[%s1 + $0x38] sm:$0xff]
  %v1288 = vld [vmem:[%s1 + $0x40] sm:$0xff]
  %v1289 = vld [vmem:[%s1 + $0x48] sm:$0xff]
  %v1290 = vld [vmem:[%s1 + $0x50] sm:$0xff]
  %v1291 = vld [vmem:[%s1 + $0x58] sm:$0xff]
  %v1292 = vld [vmem:[%s1 + $0x60] sm:$0xff]
  %v1293 = vld [vmem:[%s1 + $0x68] sm:$0xff]
  %v1294 = vld [vmem:[%s1 + $0x70] sm:$0xff]
  %v1295 = vld [vmem:[%s1 + $0x78] sm:$0xff]
  %v1296 = vld [vmem:[%s1 + $0x80] sm:$0xff]
  %v1297 = vld [vmem:[%s1 + $0x88] sm:$0xff]
  %v1298 = vld [vmem:[%s1 + $0x90] sm:$0xff]
  %v1299 = vld [vmem:[%s1 + $0x98] sm:$0xff]
  %v1300 = vld [vmem:[%s1 + $0xa0] sm:$0xff]
  %v1301 = vld [vmem:[%s1 + $0xa8] sm:$0xff]
  %v1302 = vld [vmem:[%s1 + $0xb0] sm:$0xff]
  %v1303 = vld [vmem:[%s1 + $0xb8] sm:$0xff]
  %v1304 = vld [vmem:[%s1 + $0xc0] sm:$0xff]
  %v1305 = vld [vmem:[%s1 + $0xc8] sm:$0xff]
  %v1306 = vld [vmem:[%s1 + $0xd0] sm:$0xff]
  %v1307 = vld [vmem:[%s1 + $0xd8] sm:$0xff]
  %v1308 = vld [vmem:[%s1 + $0xe0] sm:$0xff]
  %v1309 = vld [vmem:[%s1 + $0xe8] sm:$0xff]
  %v1310 = vld [vmem:[%s1 + $0xf0] sm:$0xff]
  %v1311 = vld [vmem:[%s1 + $0xf8] sm:$0xff]
  %v1344 = vunpack.c.l.b16 %v1280
  %v1345 = vunpack.c.h.b16 %v1280
  %v1346 = vunpack.c.l.b16 %v1281
  %v1347 = vunpack.c.h.b16 %v1281
  %v1348 = vunpack.c.l.b16 %v1282
  %v1349 = vunpack.c.h.b16 %v1282
  %v1350 = vunpack.c.l.b16 %v1283
  %v1351 = vunpack.c.h.b16 %v1283
  %v1352 = vunpack.c.l.b16 %v1284
  %v1353 = vunpack.c.h.b16 %v1284
  %v1354 = vunpack.c.l.b16 %v1285
  %v1355 = vunpack.c.h.b16 %v1285
  %v1356 = vunpack.c.l.b16 %v1286
  %v1357 = vunpack.c.h.b16 %v1286
  %v1358 = vunpack.c.l.b16 %v1287
  %v1359 = vunpack.c.h.b16 %v1287
  %v1360 = vunpack.c.l.b16 %v1288
  %v1361 = vunpack.c.h.b16 %v1288
  %v1362 = vunpack.c.l.b16 %v1289
  %v1363 = vunpack.c.h.b16 %v1289
  %v1364 = vunpack.c.l.b16 %v1290
  %v1365 = vunpack.c.h.b16 %v1290
  %v1366 = vunpack.c.l.b16 %v1291
  %v1367 = vunpack.c.h.b16 %v1291
  %v1368 = vunpack.c.l.b16 %v1292
  %v1369 = vunpack.c.h.b16 %v1292
  %v1370 = vunpack.c.l.b16 %v1293
  %v1371 = vunpack.c.h.b16 %v1293
  %v1372 = vunpack.c.l.b16 %v1294
  %v1373 = vunpack.c.h.b16 %v1294
  %v1374 = vunpack.c.l.b16 %v1295
  %v1375 = vunpack.c.h.b16 %v1295
  %v1376 = vunpack.c.l.b16 %v1296
  %v1377 = vunpack.c.h.b16 %v1296
  %v1378 = vunpack.c.l.b16 %v1297
  %v1379 = vunpack.c.h.b16 %v1297
  %v1380 = vunpack.c.l.b16 %v1298
  %v1381 = vunpack.c.h.b16 %v1298
  %v1382 = vunpack.c.l.b16 %v1299
  %v1383 = vunpack.c.h.b16 %v1299
  %v1384 = vunpack.c.l.b16 %v1300
  %v1385 = vunpack.c.h.b16 %v1300
  %v1386 = vunpack.c.l.b16 %v1301
  %v1387 = vunpack.c.h.b16 %v1301
  %v1388 = vunpack.c.l.b16 %v1302
  %v1389 = vunpack.c.h.b16 %v1302
  %v1390 = vunpack.c.l.b16 %v1303
  %v1391 = vunpack.c.h.b16 %v1303
  %v1392 = vunpack.c.l.b16 %v1304
  %v1393 = vunpack.c.h.b16 %v1304
  %v1394 = vunpack.c.l.b16 %v1305
  %v1395 = vunpack.c.h.b16 %v1305
  %v1396 = vunpack.c.l.b16 %v1306
  %v1397 = vunpack.c.h.b16 %v1306
  %v1398 = vunpack.c.l.b16 %v1307
  %v1399 = vunpack.c.h.b16 %v1307
  %v1400 = vunpack.c.l.b16 %v1308
  %v1401 = vunpack.c.h.b16 %v1308
  %v1402 = vunpack.c.l.b16 %v1309
  %v1403 = vunpack.c.h.b16 %v1309
  %v1404 = vunpack.c.l.b16 %v1310
  %v1405 = vunpack.c.h.b16 %v1310
  %v1406 = vunpack.c.l.b16 %v1311
  %v1407 = vunpack.c.h.b16 %v1311
  %v1408 = vpack.c.b16 %v1348, %v1344
  %v1409 = vpack.c.b16 %v1349, %v1345
  %v1410 = vpack.c.b16 %v1350, %v1346
  %v1411 = vpack.c.b16 %v1351, %v1347
  %v1412 = vpack.c.b16 %v1356, %v1352
  %v1413 = vpack.c.b16 %v1357, %v1353
  %v1414 = vpack.c.b16 %v1358, %v1354
  %v1415 = vpack.c.b16 %v1359, %v1355
  %v1416 = vpack.c.b16 %v1364, %v1360
  %v1417 = vpack.c.b16 %v1365, %v1361
  %v1418 = vpack.c.b16 %v1366, %v1362
  %v1419 = vpack.c.b16 %v1367, %v1363
  %v1420 = vpack.c.b16 %v1372, %v1368
  %v1421 = vpack.c.b16 %v1373, %v1369
  %v1422 = vpack.c.b16 %v1374, %v1370
  %v1423 = vpack.c.b16 %v1375, %v1371
  %v1424 = vpack.c.b16 %v1380, %v1376
  %v1425 = vpack.c.b16 %v1381, %v1377
  %v1426 = vpack.c.b16 %v1382, %v1378
  %v1427 = vpack.c.b16 %v1383, %v1379
  %v1428 = vpack.c.b16 %v1388, %v1384
  %v1429 = vpack.c.b16 %v1389, %v1385
  %v1430 = vpack.c.b16 %v1390, %v1386
  %v1431 = vpack.c.b16 %v1391, %v1387
  %v1432 = vpack.c.b16 %v1396, %v1392
  %v1433 = vpack.c.b16 %v1397, %v1393
  %v1434 = vpack.c.b16 %v1398, %v1394
  %v1435 = vpack.c.b16 %v1399, %v1395
  %v1436 = vpack.c.b16 %v1404, %v1400
  %v1437 = vpack.c.b16 %v1405, %v1401
  %v1438 = vpack.c.b16 %v1406, %v1402
  %v1439 = vpack.c.b16 %v1407, %v1403
  %1472 = vmatprep.subr.bf16.mxu0 %v1409
  %1473 = vmatpush1.bf16.msra.mxu0 %v1408
  %1474 = vmatprep.subr.bf16.mxu0 %v1413
  %1475 = vmatpush1.bf16.msra.mxu0 %v1412
  %1476 = vmatprep.subr.bf16.mxu0 %v1417
  %1477 = vmatpush1.bf16.msra.mxu0 %v1416
  %1478 = vmatprep.subr.bf16.mxu0 %v1421
  %1479 = vmatpush1.bf16.msra.mxu0 %v1420
  %1480 = vmatprep.subr.bf16.mxu0 %v1425
  %1481 = vmatpush1.bf16.msra.mxu0 %v1424
  %1482 = vmatprep.subr.bf16.mxu0 %v1429
  %1483 = vmatpush1.bf16.msra.mxu0 %v1428
  %1484 = vmatprep.subr.bf16.mxu0 %v1433
  %1485 = vmatpush1.bf16.msra.mxu0 %v1432
  %1486 = vmatprep.subr.bf16.mxu0 %v1437
  %1487 = vmatpush1.bf16.msra.mxu0 %v1436
  %1488 = vmatprep.subr.bf16.mxu0 0
  %1489 = vmatpush1.bf16.msra.mxu0 0
  %1490 = vmatprep.subr.bf16.mxu0 0
  %1491 = vmatpush1.bf16.msra.mxu0 0
  %1492 = vmatprep.subr.bf16.mxu0 0
  %1493 = vmatpush1.bf16.msra.mxu0 0
  %1494 = vmatprep.subr.bf16.mxu0 0
  %1495 = vmatpush1.bf16.msra.mxu0 0
  %1496 = vmatprep.subr.bf16.mxu0 0
  %1497 = vmatpush1.bf16.msra.mxu0 0
  %1498 = vmatprep.subr.bf16.mxu0 0
  %1499 = vmatpush1.bf16.msra.mxu0 0
  %1500 = vmatprep.subr.bf16.mxu0 0
  %1501 = vmatpush1.bf16.msra.mxu0 0
  %1502 = vmatprep.subr.bf16.mxu0 0
  %1503 = vmatpush1.bf16.msra.mxu0 0
  %1504 = vmatprep.mubr.bf16.mxu0 0
  %1505 = vmatmul.mubr.bf16.gmra.mrb[0].mxu0 %v1279
  %v1506 = vpop.f32.mrb[0].mxu0
  %v1507 = vadd.f32 0.0, %v1506
  %v1508 = vpop.f32.mrb[0].mxu0
  %v1509 = vadd.f32 0.0, %v1508
  %v1510 = vpop.f32.mrb[0].mxu0
  %v1511 = vpop.f32.mrb[0].mxu0
  %1512 = vdwg.mxu0
  %1513 = vmatprep.subr.bf16.mxu0 %v1411
  %1514 = vmatpush1.bf16.msra.mxu0 %v1410
  %1515 = vmatprep.subr.bf16.mxu0 %v1415
  %1516 = vmatpush1.bf16.msra.mxu0 %v1414
  %1517 = vmatprep.subr.bf16.mxu0 %v1419
  %1518 = vmatpush1.bf16.msra.mxu0 %v1418
  %1519 = vmatprep.subr.bf16.mxu0 %v1423
  %1520 = vmatpush1.bf16.msra.mxu0 %v1422
  %1521 = vmatprep.subr.bf16.mxu0 %v1427
  %1522 = vmatpush1.bf16.msra.mxu0 %v1426
  %1523 = vmatprep.subr.bf16.mxu0 %v1431
  %1524 = vmatpush1.bf16.msra.mxu0 %v1430
  %1525 = vmatprep.subr.bf16.mxu0 %v1435
  %1526 = vmatpush1.bf16.msra.mxu0 %v1434
  %1527 = vmatprep.subr.bf16.mxu0 %v1439
  %1528 = vmatpush1.bf16.msra.mxu0 %v1438
  %1529 = vmatprep.subr.bf16.mxu0 0
  %1530 = vmatpush1.bf16.msra.mxu0 0
  %1531 = vmatprep.subr.bf16.mxu0 0
  %1532 = vmatpush1.bf16.msra.mxu0 0
  %1533 = vmatprep.subr.bf16.mxu0 0
  %1534 = vmatpush1.bf16.msra.mxu0 0
  %1535 = vmatprep.subr.bf16.mxu0 0
  %1536 = vmatpush1.bf16.msra.mxu0 0
  %1537 = vmatprep.subr.bf16.mxu0 0
  %1538 = vmatpush1.bf16.msra.mxu0 0
  %1539 = vmatprep.subr.bf16.mxu0 0
  %1540 = vmatpush1.bf16.msra.mxu0 0
  %1541 = vmatprep.subr.bf16.mxu0 0
  %1542 = vmatpush1.bf16.msra.mxu0 0
  %1543 = vmatprep.subr.bf16.mxu0 0
  %1544 = vmatpush1.bf16.msra.mxu0 0
  %1545 = vmatprep.mubr.bf16.mxu0 0
  %1546 = vmatmul.mubr.bf16.gmra.mrb[0].mxu0 %v1279
  %v1547 = vpop.f32.mrb[0].mxu0
  %v1548 = vadd.f32 0.0, %v1547
  %v1549 = vpop.f32.mrb[0].mxu0
  %v1550 = vadd.f32 0.0, %v1549
  %v1551 = vpop.f32.mrb[0].mxu0
  %v1552 = vpop.f32.mrb[0].mxu0
  %1553 = vdwg.mxu0
  %v1554 = vadd.f32 %v1275, %v1507
  %v1555 = vadd.f32 %v1276, %v1509
  %v1556 = vadd.f32 %v1277, %v1548
  %v1557 = vadd.f32 %v1278, %v1550
  %v1558 = vxor.u32 %v1554, 2147483648
  %v1559 = vxor.u32 %v1555, 2147483648
  %v1560 = vxor.u32 %v1556, 2147483648
  %v1561 = vmul.f32 %v1558, 1.442695
  %v1562 = vpow.pop %v1561
  %v1563 = vmul.f32 %v1559, 1.442695
  %v1564 = vpow.pop %v1563
  %v1565 = vmul.f32 %v1560, 1.442695
  %v1566 = vpow.pop %v1565
  %v1567 = vadd.f32 %v1562, 1.0
  %v1568 = vadd.f32 %v1564, 1.0
  %v1569 = vadd.f32 %v1566, 1.0
  %v1570 = vrcp.pop %v1567
  %v1571 = vmul.f32 1.0, %v1570
  %v1572 = vrcp.pop %v1568
  %v1573 = vmul.f32 1.0, %v1572
  %v1574 = vrcp.pop %v1569
  %v1575 = vmul.f32 1.0, %v1574
  %v1576 = vtanh.pop %v1557
  %v1577 = vmul.f32 %v1573, %v1273
  %v1578 = vmul.f32 %v1571, %v1576
  %v1579 = vadd.f32 %v1577, %v1578
  %v1580 = vtanh.pop %v1579
  %v1581 = vmul.f32 %v1575, %v1580
  %1582 = vst [vmem:[#allocation2] sm:$0xff] %v1581
  %1583 = vst [vmem:[#allocation3] sm:$0xff] %v1579
  %s1584 = scalar_lea.vmem %s2, 32
  %1585 = vst [vmem:[%s1584] sm:$0xff] %v1581
  %v1586 = vld [vmem:[#allocation2] sm:$0xff]
  %v1587 = vld [vmem:[#allocation3] sm:$0xff]
  %s1588 = scalar_lea.vmem %s0, 160
  %v1589 = vld [vmem:[%s1588] sm:$0xff]
  %v1590 = vld [vmem:[%s1588 + $0x8] sm:$0xff]
  %v1591 = vld [vmem:[%s1588 + $0x10] sm:$0xff]
  %v1592 = vld [vmem:[%s1588 + $0x18] sm:$0xff]
  %v1593 = vpack.c.bf16 %v1586, %v1586
  %v1594 = vld [vmem:[%s1] sm:$0xff]
  %v1595 = vld [vmem:[%s1 + $0x8] sm:$0xff]
  %v1596 = vld [vmem:[%s1 + $0x10] sm:$0xff]
  %v1597 = vld [vmem:[%s1 + $0x18] sm:$0xff]
  %v1598 = vld [vmem:[%s1 + $0x20] sm:$0xff]
  %v1599 = vld [vmem:[%s1 + $0x28] sm:$0xff]
  %v1600 = vld [vmem:[%s1 + $0x30] sm:$0xff]
  %v1601 = vld [vmem:[%s1 + $0x38] sm:$0xff]
  %v1602 = vld [vmem:[%s1 + $0x40] sm:$0xff]
  %v1603 = vld [vmem:[%s1 + $0x48] sm:$0xff]
  %v1604 = vld [vmem:[%s1 + $0x50] sm:$0xff]
  %v1605 = vld [vmem:[%s1 + $0x58] sm:$0xff]
  %v1606 = vld [vmem:[%s1 + $0x60] sm:$0xff]
  %v1607 = vld [vmem:[%s1 + $0x68] sm:$0xff]
  %v1608 = vld [vmem:[%s1 + $0x70] sm:$0xff]
  %v1609 = vld [vmem:[%s1 + $0x78] sm:$0xff]
  %v1610 = vld [vmem:[%s1 + $0x80] sm:$0xff]
  %v1611 = vld [vmem:[%s1 + $0x88] sm:$0xff]
  %v1612 = vld [vmem:[%s1 + $0x90] sm:$0xff]
  %v1613 = vld [vmem:[%s1 + $0x98] sm:$0xff]
  %v1614 = vld [vmem:[%s1 + $0xa0] sm:$0xff]
  %v1615 = vld [vmem:[%s1 + $0xa8] sm:$0xff]
  %v1616 = vld [vmem:[%s1 + $0xb0] sm:$0xff]
  %v1617 = vld [vmem:[%s1 + $0xb8] sm:$0xff]
  %v1618 = vld [vmem:[%s1 + $0xc0] sm:$0xff]
  %v1619 = vld [vmem:[%s1 + $0xc8] sm:$0xff]
  %v1620 = vld [vmem:[%s1 + $0xd0] sm:$0xff]
  %v1621 = vld [vmem:[%s1 + $0xd8] sm:$0xff]
  %v1622 = vld [vmem:[%s1 + $0xe0] sm:$0xff]
  %v1623 = vld [vmem:[%s1 + $0xe8] sm:$0xff]
  %v1624 = vld [vmem:[%s1 + $0xf0] sm:$0xff]
  %v1625 = vld [vmem:[%s1 + $0xf8] sm:$0xff]
  %v1658 = vunpack.c.l.b16 %v1594
  %v1659 = vunpack.c.h.b16 %v1594
  %v1660 = vunpack.c.l.b16 %v1595
  %v1661 = vunpack.c.h.b16 %v1595
  %v1662 = vunpack.c.l.b16 %v1596
  %v1663 = vunpack.c.h.b16 %v1596
  %v1664 = vunpack.c.l.b16 %v1597
  %v1665 = vunpack.c.h.b16 %v1597
  %v1666 = vunpack.c.l.b16 %v1598
  %v1667 = vunpack.c.h.b16 %v1598
  %v1668 = vunpack.c.l.b16 %v1599
  %v1669 = vunpack.c.h.b16 %v1599
  %v1670 = vunpack.c.l.b16 %v1600
  %v1671 = vunpack.c.h.b16 %v1600
  %v1672 = vunpack.c.l.b16 %v1601
  %v1673 = vunpack.c.h.b16 %v1601
  %v1674 = vunpack.c.l.b16 %v1602
  %v1675 = vunpack.c.h.b16 %v1602
  %v1676 = vunpack.c.l.b16 %v1603
  %v1677 = vunpack.c.h.b16 %v1603
  %v1678 = vunpack.c.l.b16 %v1604
  %v1679 = vunpack.c.h.b16 %v1604
  %v1680 = vunpack.c.l.b16 %v1605
  %v1681 = vunpack.c.h.b16 %v1605
  %v1682 = vunpack.c.l.b16 %v1606
  %v1683 = vunpack.c.h.b16 %v1606
  %v1684 = vunpack.c.l.b16 %v1607
  %v1685 = vunpack.c.h.b16 %v1607
  %v1686 = vunpack.c.l.b16 %v1608
  %v1687 = vunpack.c.h.b16 %v1608
  %v1688 = vunpack.c.l.b16 %v1609
  %v1689 = vunpack.c.h.b16 %v1609
  %v1690 = vunpack.c.l.b16 %v1610
  %v1691 = vunpack.c.h.b16 %v1610
  %v1692 = vunpack.c.l.b16 %v1611
  %v1693 = vunpack.c.h.b16 %v1611
  %v1694 = vunpack.c.l.b16 %v1612
  %v1695 = vunpack.c.h.b16 %v1612
  %v1696 = vunpack.c.l.b16 %v1613
  %v1697 = vunpack.c.h.b16 %v1613
  %v1698 = vunpack.c.l.b16 %v1614
  %v1699 = vunpack.c.h.b16 %v1614
  %v1700 = vunpack.c.l.b16 %v1615
  %v1701 = vunpack.c.h.b16 %v1615
  %v1702 = vunpack.c.l.b16 %v1616
  %v1703 = vunpack.c.h.b16 %v1616
  %v1704 = vunpack.c.l.b16 %v1617
  %v1705 = vunpack.c.h.b16 %v1617
  %v1706 = vunpack.c.l.b16 %v1618
  %v1707 = vunpack.c.h.b16 %v1618
  %v1708 = vunpack.c.l.b16 %v1619
  %v1709 = vunpack.c.h.b16 %v1619
  %v1710 = vunpack.c.l.b16 %v1620
  %v1711 = vunpack.c.h.b16 %v1620
  %v1712 = vunpack.c.l.b16 %v1621
  %v1713 = vunpack.c.h.b16 %v1621
  %v1714 = vunpack.c.l.b16 %v1622
  %v1715 = vunpack.c.h.b16 %v1622
  %v1716 = vunpack.c.l.b16 %v1623
  %v1717 = vunpack.c.h.b16 %v1623
  %v1718 = vunpack.c.l.b16 %v1624
  %v1719 = vunpack.c.h.b16 %v1624
  %v1720 = vunpack.c.l.b16 %v1625
  %v1721 = vunpack.c.h.b16 %v1625
  %v1722 = vpack.c.b16 %v1662, %v1658
  %v1723 = vpack.c.b16 %v1663, %v1659
  %v1724 = vpack.c.b16 %v1664, %v1660
  %v1725 = vpack.c.b16 %v1665, %v1661
  %v1726 = vpack.c.b16 %v1670, %v1666
  %v1727 = vpack.c.b16 %v1671, %v1667
  %v1728 = vpack.c.b16 %v1672, %v1668
  %v1729 = vpack.c.b16 %v1673, %v1669
  %v1730 = vpack.c.b16 %v1678, %v1674
  %v1731 = vpack.c.b16 %v1679, %v1675
  %v1732 = vpack.c.b16 %v1680, %v1676
  %v1733 = vpack.c.b16 %v1681, %v1677
  %v1734 = vpack.c.b16 %v1686, %v1682
  %v1735 = vpack.c.b16 %v1687, %v1683
  %v1736 = vpack.c.b16 %v1688, %v1684
  %v1737 = vpack.c.b16 %v1689, %v1685
  %v1738 = vpack.c.b16 %v1694, %v1690
  %v1739 = vpack.c.b16 %v1695, %v1691
  %v1740 = vpack.c.b16 %v1696, %v1692
  %v1741 = vpack.c.b16 %v1697, %v1693
  %v1742 = vpack.c.b16 %v1702, %v1698
  %v1743 = vpack.c.b16 %v1703, %v1699
  %v1744 = vpack.c.b16 %v1704, %v1700
  %v1745 = vpack.c.b16 %v1705, %v1701
  %v1746 = vpack.c.b16 %v1710, %v1706
  %v1747 = vpack.c.b16 %v1711, %v1707
  %v1748 = vpack.c.b16 %v1712, %v1708
  %v1749 = vpack.c.b16 %v1713, %v1709
  %v1750 = vpack.c.b16 %v1718, %v1714
  %v1751 = vpack.c.b16 %v1719, %v1715
  %v1752 = vpack.c.b16 %v1720, %v1716
  %v1753 = vpack.c.b16 %v1721, %v1717
  %1786 = vmatprep.subr.bf16.mxu0 %v1723
  %1787 = vmatpush1.bf16.msra.mxu0 %v1722
  %1788 = vmatprep.subr.bf16.mxu0 %v1727
  %1789 = vmatpush1.bf16.msra.mxu0 %v1726
  %1790 = vmatprep.subr.bf16.mxu0 %v1731
  %1791 = vmatpush1.bf16.msra.mxu0 %v1730
  %1792 = vmatprep.subr.bf16.mxu0 %v1735
  %1793 = vmatpush1.bf16.msra.mxu0 %v1734
  %1794 = vmatprep.subr.bf16.mxu0 %v1739
  %1795 = vmatpush1.bf16.msra.mxu0 %v1738
  %1796 = vmatprep.subr.bf16.mxu0 %v1743
  %1797 = vmatpush1.bf16.msra.mxu0 %v1742
  %1798 = vmatprep.subr.bf16.mxu0 %v1747
  %1799 = vmatpush1.bf16.msra.mxu0 %v1746
  %1800 = vmatprep.subr.bf16.mxu0 %v1751
  %1801 = vmatpush1.bf16.msra.mxu0 %v1750
  %1802 = vmatprep.subr.bf16.mxu0 0
  %1803 = vmatpush1.bf16.msra.mxu0 0
  %1804 = vmatprep.subr.bf16.mxu0 0
  %1805 = vmatpush1.bf16.msra.mxu0 0
  %1806 = vmatprep.subr.bf16.mxu0 0
  %1807 = vmatpush1.bf16.msra.mxu0 0
  %1808 = vmatprep.subr.bf16.mxu0 0
  %1809 = vmatpush1.bf16.msra.mxu0 0
  %1810 = vmatprep.subr.bf16.mxu0 0
  %1811 = vmatpush1.bf16.msra.mxu0 0
  %1812 = vmatprep.subr.bf16.mxu0 0
  %1813 = vmatpush1.bf16.msra.mxu0 0
  %1814 = vmatprep.subr.bf16.mxu0 0
  %1815 = vmatpush1.bf16.msra.mxu0 0
  %1816 = vmatprep.subr.bf16.mxu0 0
  %1817 = vmatpush1.bf16.msra.mxu0 0
  %1818 = vmatprep.mubr.bf16.mxu0 0
  %1819 = vmatmul.mubr.bf16.gmra.mrb[0].mxu0 %v1593
  %v1820 = vpop.f32.mrb[0].mxu0
  %v1821 = vadd.f32 0.0, %v1820
  %v1822 = vpop.f32.mrb[0].mxu0
  %v1823 = vadd.f32 0.0, %v1822
  %v1824 = vpop.f32.mrb[0].mxu0
  %v1825 = vpop.f32.mrb[0].mxu0
  %1826 = vdwg.mxu0
  %1827 = vmatprep.subr.bf16.mxu0 %v1725
  %1828 = vmatpush1.bf16.msra.mxu0 %v1724
  %1829 = vmatprep.subr.bf16.mxu0 %v1729
  %1830 = vmatpush1.bf16.msra.mxu0 %v1728
  %1831 = vmatprep.subr.bf16.mxu0 %v1733
  %1832 = vmatpush1.bf16.msra.mxu0 %v1732
  %1833 = vmatprep.subr.bf16.mxu0 %v1737
  %1834 = vmatpush1.bf16.msra.mxu0 %v1736
  %1835 = vmatprep.subr.bf16.mxu0 %v1741
  %1836 = vmatpush1.bf16.msra.mxu0 %v1740
  %1837 = vmatprep.subr.bf16.mxu0 %v1745
  %1838 = vmatpush1.bf16.msra.mxu0 %v1744
  %1839 = vmatprep.subr.bf16.mxu0 %v1749
  %1840 = vmatpush1.bf16.msra.mxu0 %v1748
  %1841 = vmatprep.subr.bf16.mxu0 %v1753
  %1842 = vmatpush1.bf16.msra.mxu0 %v1752
  %1843 = vmatprep.subr.bf16.mxu0 0
  %1844 = vmatpush1.bf16.msra.mxu0 0
  %1845 = vmatprep.subr.bf16.mxu0 0
  %1846 = vmatpush1.bf16.msra.mxu0 0
  %1847 = vmatprep.subr.bf16.mxu0 0
  %1848 = vmatpush1.bf16.msra.mxu0 0
  %1849 = vmatprep.subr.bf16.mxu0 0
  %1850 = vmatpush1.bf16.msra.mxu0 0
  %1851 = vmatprep.subr.bf16.mxu0 0
  %1852 = vmatpush1.bf16.msra.mxu0 0
  %1853 = vmatprep.subr.bf16.mxu0 0
  %1854 = vmatpush1.bf16.msra.mxu0 0
  %1855 = vmatprep.subr.bf16.mxu0 0
  %1856 = vmatpush1.bf16.msra.mxu0 0
  %1857 = vmatprep.subr.bf16.mxu0 0
  %1858 = vmatpush1.bf16.msra.mxu0 0
  %1859 = vmatprep.mubr.bf16.mxu0 0
  %1860 = vmatmul.mubr.bf16.gmra.mrb[0].mxu0 %v1593
  %v1861 = vpop.f32.mrb[0].mxu0
  %v1862 = vadd.f32 0.0, %v1861
  %v1863 = vpop.f32.mrb[0].mxu0
  %v1864 = vadd.f32 0.0, %v1863
  %v1865 = vpop.f32.mrb[0].mxu0
  %v1866 = vpop.f32.mrb[0].mxu0
  %1867 = vdwg.mxu0
  %v1868 = vadd.f32 %v1589, %v1821
  %v1869 = vadd.f32 %v1590, %v1823
  %v1870 = vadd.f32 %v1591, %v1862
  %v1871 = vadd.f32 %v1592, %v1864
  %v1872 = vxor.u32 %v1868, 2147483648
  %v1873 = vxor.u32 %v1869, 2147483648
  %v1874 = vxor.u32 %v1870, 2147483648
  %v1875 = vmul.f32 %v1872, 1.442695
  %v1876 = vpow.pop %v1875
  %v1877 = vmul.f32 %v1873, 1.442695
  %v1878 = vpow.pop %v1877
  %v1879 = vmul.f32 %v1874, 1.442695
  %v1880 = vpow.pop %v1879
  %v1881 = vadd.f32 %v1876, 1.0
  %v1882 = vadd.f32 %v1878, 1.0
  %v1883 = vadd.f32 %v1880, 1.0
  %v1884 = vrcp.pop %v1881
  %v1885 = vmul.f32 1.0, %v1884
  %v1886 = vrcp.pop %v1882
  %v1887 = vmul.f32 1.0, %v1886
  %v1888 = vrcp.pop %v1883
  %v1889 = vmul.f32 1.0, %v1888
  %v1890 = vtanh.pop %v1871
  %v1891 = vmul.f32 %v1887, %v1587
  %v1892 = vmul.f32 %v1885, %v1890
  %v1893 = vadd.f32 %v1891, %v1892
  %v1894 = vtanh.pop %v1893
  %v1895 = vmul.f32 %v1889, %v1894
  %1896 = vst [vmem:[#allocation2] sm:$0xff] %v1895
  %1897 = vst [vmem:[#allocation3] sm:$0xff] %v1893
  %s1898 = scalar_lea.vmem %s2, 40
  %1899 = vst [vmem:[%s1898] sm:$0xff] %v1895
  %v1900 = vld [vmem:[#allocation2] sm:$0xff]
  %v1901 = vld [vmem:[#allocation3] sm:$0xff]
  %s1902 = scalar_lea.vmem %s0, 192
  %v1903 = vld [vmem:[%s1902] sm:$0xff]
  %v1904 = vld [vmem:[%s1902 + $0x8] sm:$0xff]
  %v1905 = vld [vmem:[%s1902 + $0x10] sm:$0xff]
  %v1906 = vld [vmem:[%s1902 + $0x18] sm:$0xff]
  %v1907 = vpack.c.bf16 %v1900, %v1900
  %v1908 = vld [vmem:[%s1] sm:$0xff]
  %v1909 = vld [vmem:[%s1 + $0x8] sm:$0xff]
  %v1910 = vld [vmem:[%s1 + $0x10] sm:$0xff]
  %v1911 = vld [vmem:[%s1 + $0x18] sm:$0xff]
  %v1912 = vld [vmem:[%s1 + $0x20] sm:$0xff]
  %v1913 = vld [vmem:[%s1 + $0x28] sm:$0xff]
  %v1914 = vld [vmem:[%s1 + $0x30] sm:$0xff]
  %v1915 = vld [vmem:[%s1 + $0x38] sm:$0xff]
  %v1916 = vld [vmem:[%s1 + $0x40] sm:$0xff]
  %v1917 = vld [vmem:[%s1 + $0x48] sm:$0xff]
  %v1918 = vld [vmem:[%s1 + $0x50] sm:$0xff]
  %v1919 = vld [vmem:[%s1 + $0x58] sm:$0xff]
  %v1920 = vld [vmem:[%s1 + $0x60] sm:$0xff]
  %v1921 = vld [vmem:[%s1 + $0x68] sm:$0xff]
  %v1922 = vld [vmem:[%s1 + $0x70] sm:$0xff]
  %v1923 = vld [vmem:[%s1 + $0x78] sm:$0xff]
  %v1924 = vld [vmem:[%s1 + $0x80] sm:$0xff]
  %v1925 = vld [vmem:[%s1 + $0x88] sm:$0xff]
  %v1926 = vld [vmem:[%s1 + $0x90] sm:$0xff]
  %v1927 = vld [vmem:[%s1 + $0x98] sm:$0xff]
  %v1928 = vld [vmem:[%s1 + $0xa0] sm:$0xff]
  %v1929 = vld [vmem:[%s1 + $0xa8] sm:$0xff]
  %v1930 = vld [vmem:[%s1 + $0xb0] sm:$0xff]
  %v1931 = vld [vmem:[%s1 + $0xb8] sm:$0xff]
  %v1932 = vld [vmem:[%s1 + $0xc0] sm:$0xff]
  %v1933 = vld [vmem:[%s1 + $0xc8] sm:$0xff]
  %v1934 = vld [vmem:[%s1 + $0xd0] sm:$0xff]
  %v1935 = vld [vmem:[%s1 + $0xd8] sm:$0xff]
  %v1936 = vld [vmem:[%s1 + $0xe0] sm:$0xff]
  %v1937 = vld [vmem:[%s1 + $0xe8] sm:$0xff]
  %v1938 = vld [vmem:[%s1 + $0xf0] sm:$0xff]
  %v1939 = vld [vmem:[%s1 + $0xf8] sm:$0xff]
  %v1972 = vunpack.c.l.b16 %v1908
  %v1973 = vunpack.c.h.b16 %v1908
  %v1974 = vunpack.c.l.b16 %v1909
  %v1975 = vunpack.c.h.b16 %v1909
  %v1976 = vunpack.c.l.b16 %v1910
  %v1977 = vunpack.c.h.b16 %v1910
  %v1978 = vunpack.c.l.b16 %v1911
  %v1979 = vunpack.c.h.b16 %v1911
  %v1980 = vunpack.c.l.b16 %v1912
  %v1981 = vunpack.c.h.b16 %v1912
  %v1982 = vunpack.c.l.b16 %v1913
  %v1983 = vunpack.c.h.b16 %v1913
  %v1984 = vunpack.c.l.b16 %v1914
  %v1985 = vunpack.c.h.b16 %v1914
  %v1986 = vunpack.c.l.b16 %v1915
  %v1987 = vunpack.c.h.b16 %v1915
  %v1988 = vunpack.c.l.b16 %v1916
  %v1989 = vunpack.c.h.b16 %v1916
  %v1990 = vunpack.c.l.b16 %v1917
  %v1991 = vunpack.c.h.b16 %v1917
  %v1992 = vunpack.c.l.b16 %v1918
  %v1993 = vunpack.c.h.b16 %v1918
  %v1994 = vunpack.c.l.b16 %v1919
  %v1995 = vunpack.c.h.b16 %v1919
  %v1996 = vunpack.c.l.b16 %v1920
  %v1997 = vunpack.c.h.b16 %v1920
  %v1998 = vunpack.c.l.b16 %v1921
  %v1999 = vunpack.c.h.b16 %v1921
  %v2000 = vunpack.c.l.b16 %v1922
  %v2001 = vunpack.c.h.b16 %v1922
  %v2002 = vunpack.c.l.b16 %v1923
  %v2003 = vunpack.c.h.b16 %v1923
  %v2004 = vunpack.c.l.b16 %v1924
  %v2005 = vunpack.c.h.b16 %v1924
  %v2006 = vunpack.c.l.b16 %v1925
  %v2007 = vunpack.c.h.b16 %v1925
  %v2008 = vunpack.c.l.b16 %v1926
  %v2009 = vunpack.c.h.b16 %v1926
  %v2010 = vunpack.c.l.b16 %v1927
  %v2011 = vunpack.c.h.b16 %v1927
  %v2012 = vunpack.c.l.b16 %v1928
  %v2013 = vunpack.c.h.b16 %v1928
  %v2014 = vunpack.c.l.b16 %v1929
  %v2015 = vunpack.c.h.b16 %v1929
  %v2016 = vunpack.c.l.b16 %v1930
  %v2017 = vunpack.c.h.b16 %v1930
  %v2018 = vunpack.c.l.b16 %v1931
  %v2019 = vunpack.c.h.b16 %v1931
  %v2020 = vunpack.c.l.b16 %v1932
  %v2021 = vunpack.c.h.b16 %v1932
  %v2022 = vunpack.c.l.b16 %v1933
  %v2023 = vunpack.c.h.b16 %v1933
  %v2024 = vunpack.c.l.b16 %v1934
  %v2025 = vunpack.c.h.b16 %v1934
  %v2026 = vunpack.c.l.b16 %v1935
  %v2027 = vunpack.c.h.b16 %v1935
  %v2028 = vunpack.c.l.b16 %v1936
  %v2029 = vunpack.c.h.b16 %v1936
  %v2030 = vunpack.c.l.b16 %v1937
  %v2031 = vunpack.c.h.b16 %v1937
  %v2032 = vunpack.c.l.b16 %v1938
  %v2033 = vunpack.c.h.b16 %v1938
  %v2034 = vunpack.c.l.b16 %v1939
  %v2035 = vunpack.c.h.b16 %v1939
  %v2036 = vpack.c.b16 %v1976, %v1972
  %v2037 = vpack.c.b16 %v1977, %v1973
  %v2038 = vpack.c.b16 %v1978, %v1974
  %v2039 = vpack.c.b16 %v1979, %v1975
  %v2040 = vpack.c.b16 %v1984, %v1980
  %v2041 = vpack.c.b16 %v1985, %v1981
  %v2042 = vpack.c.b16 %v1986, %v1982
  %v2043 = vpack.c.b16 %v1987, %v1983
  %v2044 = vpack.c.b16 %v1992, %v1988
  %v2045 = vpack.c.b16 %v1993, %v1989
  %v2046 = vpack.c.b16 %v1994, %v1990
  %v2047 = vpack.c.b16 %v1995, %v1991
  %v2048 = vpack.c.b16 %v2000, %v1996
  %v2049 = vpack.c.b16 %v2001, %v1997
  %v2050 = vpack.c.b16 %v2002, %v1998
  %v2051 = vpack.c.b16 %v2003, %v1999
  %v2052 = vpack.c.b16 %v2008, %v2004
  %v2053 = vpack.c.b16 %v2009, %v2005
  %v2054 = vpack.c.b16 %v2010, %v2006
  %v2055 = vpack.c.b16 %v2011, %v2007
  %v2056 = vpack.c.b16 %v2016, %v2012
  %v2057 = vpack.c.b16 %v2017, %v2013
  %v2058 = vpack.c.b16 %v2018, %v2014
  %v2059 = vpack.c.b16 %v2019, %v2015
  %v2060 = vpack.c.b16 %v2024, %v2020
  %v2061 = vpack.c.b16 %v2025, %v2021
  %v2062 = vpack.c.b16 %v2026, %v2022
  %v2063 = vpack.c.b16 %v2027, %v2023
  %v2064 = vpack.c.b16 %v2032, %v2028
  %v2065 = vpack.c.b16 %v2033, %v2029
  %v2066 = vpack.c.b16 %v2034, %v2030
  %v2067 = vpack.c.b16 %v2035, %v2031
  %2100 = vmatprep.subr.bf16.mxu0 %v2037
  %2101 = vmatpush1.bf16.msra.mxu0 %v2036
  %2102 = vmatprep.subr.bf16.mxu0 %v2041
  %2103 = vmatpush1.bf16.msra.mxu0 %v2040
  %2104 = vmatprep.subr.bf16.mxu0 %v2045
  %2105 = vmatpush1.bf16.msra.mxu0 %v2044
  %2106 = vmatprep.subr.bf16.mxu0 %v2049
  %2107 = vmatpush1.bf16.msra.mxu0 %v2048
  %2108 = vmatprep.subr.bf16.mxu0 %v2053
  %2109 = vmatpush1.bf16.msra.mxu0 %v2052
  %2110 = vmatprep.subr.bf16.mxu0 %v2057
  %2111 = vmatpush1.bf16.msra.mxu0 %v2056
  %2112 = vmatprep.subr.bf16.mxu0 %v2061
  %2113 = vmatpush1.bf16.msra.mxu0 %v2060
  %2114 = vmatprep.subr.bf16.mxu0 %v2065
  %2115 = vmatpush1.bf16.msra.mxu0 %v2064
  %2116 = vmatprep.subr.bf16.mxu0 0
  %2117 = vmatpush1.bf16.msra.mxu0 0
  %2118 = vmatprep.subr.bf16.mxu0 0
  %2119 = vmatpush1.bf16.msra.mxu0 0
  %2120 = vmatprep.subr.bf16.mxu0 0
  %2121 = vmatpush1.bf16.msra.mxu0 0
  %2122 = vmatprep.subr.bf16.mxu0 0
  %2123 = vmatpush1.bf16.msra.mxu0 0
  %2124 = vmatprep.subr.bf16.mxu0 0
  %2125 = vmatpush1.bf16.msra.mxu0 0
  %2126 = vmatprep.subr.bf16.mxu0 0
  %2127 = vmatpush1.bf16.msra.mxu0 0
  %2128 = vmatprep.subr.bf16.mxu0 0
  %2129 = vmatpush1.bf16.msra.mxu0 0
  %2130 = vmatprep.subr.bf16.mxu0 0
  %2131 = vmatpush1.bf16.msra.mxu0 0
  %2132 = vmatprep.mubr.bf16.mxu0 0
  %2133 = vmatmul.mubr.bf16.gmra.mrb[0].mxu0 %v1907
  %v2134 = vpop.f32.mrb[0].mxu0
  %v2135 = vadd.f32 0.0, %v2134
  %v2136 = vpop.f32.mrb[0].mxu0
  %v2137 = vadd.f32 0.0, %v2136
  %v2138 = vpop.f32.mrb[0].mxu0
  %v2139 = vpop.f32.mrb[0].mxu0
  %2140 = vdwg.mxu0
  %2141 = vmatprep.subr.bf16.mxu0 %v2039
  %2142 = vmatpush1.bf16.msra.mxu0 %v2038
  %2143 = vmatprep.subr.bf16.mxu0 %v2043
  %2144 = vmatpush1.bf16.msra.mxu0 %v2042
  %2145 = vmatprep.subr.bf16.mxu0 %v2047
  %2146 = vmatpush1.bf16.msra.mxu0 %v2046
  %2147 = vmatprep.subr.bf16.mxu0 %v2051
  %2148 = vmatpush1.bf16.msra.mxu0 %v2050
  %2149 = vmatprep.subr.bf16.mxu0 %v2055
  %2150 = vmatpush1.bf16.msra.mxu0 %v2054
  %2151 = vmatprep.subr.bf16.mxu0 %v2059
  %2152 = vmatpush1.bf16.msra.mxu0 %v2058
  %2153 = vmatprep.subr.bf16.mxu0 %v2063
  %2154 = vmatpush1.bf16.msra.mxu0 %v2062
  %2155 = vmatprep.subr.bf16.mxu0 %v2067
  %2156 = vmatpush1.bf16.msra.mxu0 %v2066
  %2157 = vmatprep.subr.bf16.mxu0 0
  %2158 = vmatpush1.bf16.msra.mxu0 0
  %2159 = vmatprep.subr.bf16.mxu0 0
  %2160 = vmatpush1.bf16.msra.mxu0 0
  %2161 = vmatprep.subr.bf16.mxu0 0
  %2162 = vmatpush1.bf16.msra.mxu0 0
  %2163 = vmatprep.subr.bf16.mxu0 0
  %2164 = vmatpush1.bf16.msra.mxu0 0
  %2165 = vmatprep.subr.bf16.mxu0 0
  %2166 = vmatpush1.bf16.msra.mxu0 0
  %2167 = vmatprep.subr.bf16.mxu0 0
  %2168 = vmatpush1.bf16.msra.mxu0 0
  %2169 = vmatprep.subr.bf16.mxu0 0
  %2170 = vmatpush1.bf16.msra.mxu0 0
  %2171 = vmatprep.subr.bf16.mxu0 0
  %2172 = vmatpush1.bf16.msra.mxu0 0
  %2173 = vmatprep.mubr.bf16.mxu0 0
  %2174 = vmatmul.mubr.bf16.gmra.mrb[0].mxu0 %v1907
  %v2175 = vpop.f32.mrb[0].mxu0
  %v2176 = vadd.f32 0.0, %v2175
  %v2177 = vpop.f32.mrb[0].mxu0
  %v2178 = vadd.f32 0.0, %v2177
  %v2179 = vpop.f32.mrb[0].mxu0
  %v2180 = vpop.f32.mrb[0].mxu0
  %2181 = vdwg.mxu0
  %v2182 = vadd.f32 %v1903, %v2135
  %v2183 = vadd.f32 %v1904, %v2137
  %v2184 = vadd.f32 %v1905, %v2176
  %v2185 = vadd.f32 %v1906, %v2178
  %v2186 = vxor.u32 %v2182, 2147483648
  %v2187 = vxor.u32 %v2183, 2147483648
  %v2188 = vxor.u32 %v2184, 2147483648
  %v2189 = vmul.f32 %v2186, 1.442695
  %v2190 = vpow.pop %v2189
  %v2191 = vmul.f32 %v2187, 1.442695
  %v2192 = vpow.pop %v2191
  %v2193 = vmul.f32 %v2188, 1.442695
  %v2194 = vpow.pop %v2193
  %v2195 = vadd.f32 %v2190, 1.0
  %v2196 = vadd.f32 %v2192, 1.0
  %v2197 = vadd.f32 %v2194, 1.0
  %v2198 = vrcp.pop %v2195
  %v2199 = vmul.f32 1.0, %v2198
  %v2200 = vrcp.pop %v2196
  %v2201 = vmul.f32 1.0, %v2200
  %v2202 = vrcp.pop %v2197
  %v2203 = vmul.f32 1.0, %v2202
  %v2204 = vtanh.pop %v2185
  %v2205 = vmul.f32 %v2201, %v1901
  %v2206 = vmul.f32 %v2199, %v2204
  %v2207 = vadd.f32 %v2205, %v2206
  %v2208 = vtanh.pop %v2207
  %v2209 = vmul.f32 %v2203, %v2208
  %2210 = vst [vmem:[#allocation2] sm:$0xff] %v2209
  %2211 = vst [vmem:[#allocation3] sm:$0xff] %v2207
  %s2212 = scalar_lea.vmem %s2, 48
  %2213 = vst [vmem:[%s2212] sm:$0xff] %v2209
  %v2214 = vld [vmem:[#allocation2] sm:$0xff]
  %v2215 = vld [vmem:[#allocation3] sm:$0xff]
  %s2216 = scalar_lea.vmem %s0, 224
  %v2217 = vld [vmem:[%s2216] sm:$0xff]
  %v2218 = vld [vmem:[%s2216 + $0x8] sm:$0xff]
  %v2219 = vld [vmem:[%s2216 + $0x10] sm:$0xff]
  %v2220 = vld [vmem:[%s2216 + $0x18] sm:$0xff]
  %v2221 = vpack.c.bf16 %v2214, %v2214
  %v2222 = vld [vmem:[%s1] sm:$0xff]
  %v2223 = vld [vmem:[%s1 + $0x8] sm:$0xff]
  %v2224 = vld [vmem:[%s1 + $0x10] sm:$0xff]
  %v2225 = vld [vmem:[%s1 + $0x18] sm:$0xff]
  %v2226 = vld [vmem:[%s1 + $0x20] sm:$0xff]
  %v2227 = vld [vmem:[%s1 + $0x28] sm:$0xff]
  %v2228 = vld [vmem:[%s1 + $0x30] sm:$0xff]
  %v2229 = vld [vmem:[%s1 + $0x38] sm:$0xff]
  %v2230 = vld [vmem:[%s1 + $0x40] sm:$0xff]
  %v2231 = vld [vmem:[%s1 + $0x48] sm:$0xff]
  %v2232 = vld [vmem:[%s1 + $0x50] sm:$0xff]
  %v2233 = vld [vmem:[%s1 + $0x58] sm:$0xff]
  %v2234 = vld [vmem:[%s1 + $0x60] sm:$0xff]
  %v2235 = vld [vmem:[%s1 + $0x68] sm:$0xff]
  %v2236 = vld [vmem:[%s1 + $0x70] sm:$0xff]
  %v2237 = vld [vmem:[%s1 + $0x78] sm:$0xff]
  %v2238 = vld [vmem:[%s1 + $0x80] sm:$0xff]
  %v2239 = vld [vmem:[%s1 + $0x88] sm:$0xff]
  %v2240 = vld [vmem:[%s1 + $0x90] sm:$0xff]
  %v2241 = vld [vmem:[%s1 + $0x98] sm:$0xff]
  %v2242 = vld [vmem:[%s1 + $0xa0] sm:$0xff]
  %v2243 = vld [vmem:[%s1 + $0xa8] sm:$0xff]
  %v2244 = vld [vmem:[%s1 + $0xb0] sm:$0xff]
  %v2245 = vld [vmem:[%s1 + $0xb8] sm:$0xff]
  %v2246 = vld [vmem:[%s1 + $0xc0] sm:$0xff]
  %v2247 = vld [vmem:[%s1 + $0xc8] sm:$0xff]
  %v2248 = vld [vmem:[%s1 + $0xd0] sm:$0xff]
  %v2249 = vld [vmem:[%s1 + $0xd8] sm:$0xff]
  %v2250 = vld [vmem:[%s1 + $0xe0] sm:$0xff]
  %v2251 = vld [vmem:[%s1 + $0xe8] sm:$0xff]
  %v2252 = vld [vmem:[%s1 + $0xf0] sm:$0xff]
  %v2253 = vld [vmem:[%s1 + $0xf8] sm:$0xff]
  %v2286 = vunpack.c.l.b16 %v2222
  %v2287 = vunpack.c.h.b16 %v2222
  %v2288 = vunpack.c.l.b16 %v2223
  %v2289 = vunpack.c.h.b16 %v2223
  %v2290 = vunpack.c.l.b16 %v2224
  %v2291 = vunpack.c.h.b16 %v2224
  %v2292 = vunpack.c.l.b16 %v2225
  %v2293 = vunpack.c.h.b16 %v2225
  %v2294 = vunpack.c.l.b16 %v2226
  %v2295 = vunpack.c.h.b16 %v2226
  %v2296 = vunpack.c.l.b16 %v2227
  %v2297 = vunpack.c.h.b16 %v2227
  %v2298 = vunpack.c.l.b16 %v2228
  %v2299 = vunpack.c.h.b16 %v2228
  %v2300 = vunpack.c.l.b16 %v2229
  %v2301 = vunpack.c.h.b16 %v2229
  %v2302 = vunpack.c.l.b16 %v2230
  %v2303 = vunpack.c.h.b16 %v2230
  %v2304 = vunpack.c.l.b16 %v2231
  %v2305 = vunpack.c.h.b16 %v2231
  %v2306 = vunpack.c.l.b16 %v2232
  %v2307 = vunpack.c.h.b16 %v2232
  %v2308 = vunpack.c.l.b16 %v2233
  %v2309 = vunpack.c.h.b16 %v2233
  %v2310 = vunpack.c.l.b16 %v2234
  %v2311 = vunpack.c.h.b16 %v2234
  %v2312 = vunpack.c.l.b16 %v2235
  %v2313 = vunpack.c.h.b16 %v2235
  %v2314 = vunpack.c.l.b16 %v2236
  %v2315 = vunpack.c.h.b16 %v2236
  %v2316 = vunpack.c.l.b16 %v2237
  %v2317 = vunpack.c.h.b16 %v2237
  %v2318 = vunpack.c.l.b16 %v2238
  %v2319 = vunpack.c.h.b16 %v2238
  %v2320 = vunpack.c.l.b16 %v2239
  %v2321 = vunpack.c.h.b16 %v2239
  %v2322 = vunpack.c.l.b16 %v2240
  %v2323 = vunpack.c.h.b16 %v2240
  %v2324 = vunpack.c.l.b16 %v2241
  %v2325 = vunpack.c.h.b16 %v2241
  %v2326 = vunpack.c.l.b16 %v2242
  %v2327 = vunpack.c.h.b16 %v2242
  %v2328 = vunpack.c.l.b16 %v2243
  %v2329 = vunpack.c.h.b16 %v2243
  %v2330 = vunpack.c.l.b16 %v2244
  %v2331 = vunpack.c.h.b16 %v2244
  %v2332 = vunpack.c.l.b16 %v2245
  %v2333 = vunpack.c.h.b16 %v2245
  %v2334 = vunpack.c.l.b16 %v2246
  %v2335 = vunpack.c.h.b16 %v2246
  %v2336 = vunpack.c.l.b16 %v2247
  %v2337 = vunpack.c.h.b16 %v2247
  %v2338 = vunpack.c.l.b16 %v2248
  %v2339 = vunpack.c.h.b16 %v2248
  %v2340 = vunpack.c.l.b16 %v2249
  %v2341 = vunpack.c.h.b16 %v2249
  %v2342 = vunpack.c.l.b16 %v2250
  %v2343 = vunpack.c.h.b16 %v2250
  %v2344 = vunpack.c.l.b16 %v2251
  %v2345 = vunpack.c.h.b16 %v2251
  %v2346 = vunpack.c.l.b16 %v2252
  %v2347 = vunpack.c.h.b16 %v2252
  %v2348 = vunpack.c.l.b16 %v2253
  %v2349 = vunpack.c.h.b16 %v2253
  %v2350 = vpack.c.b16 %v2290, %v2286
  %v2351 = vpack.c.b16 %v2291, %v2287
  %v2352 = vpack.c.b16 %v2292, %v2288
  %v2353 = vpack.c.b16 %v2293, %v2289
  %v2354 = vpack.c.b16 %v2298, %v2294
  %v2355 = vpack.c.b16 %v2299, %v2295
  %v2356 = vpack.c.b16 %v2300, %v2296
  %v2357 = vpack.c.b16 %v2301, %v2297
  %v2358 = vpack.c.b16 %v2306, %v2302
  %v2359 = vpack.c.b16 %v2307, %v2303
  %v2360 = vpack.c.b16 %v2308, %v2304
  %v2361 = vpack.c.b16 %v2309, %v2305
  %v2362 = vpack.c.b16 %v2314, %v2310
  %v2363 = vpack.c.b16 %v2315, %v2311
  %v2364 = vpack.c.b16 %v2316, %v2312
  %v2365 = vpack.c.b16 %v2317, %v2313
  %v2366 = vpack.c.b16 %v2322, %v2318
  %v2367 = vpack.c.b16 %v2323, %v2319
  %v2368 = vpack.c.b16 %v2324, %v2320
  %v2369 = vpack.c.b16 %v2325, %v2321
  %v2370 = vpack.c.b16 %v2330, %v2326
  %v2371 = vpack.c.b16 %v2331, %v2327
  %v2372 = vpack.c.b16 %v2332, %v2328
  %v2373 = vpack.c.b16 %v2333, %v2329
  %v2374 = vpack.c.b16 %v2338, %v2334
  %v2375 = vpack.c.b16 %v2339, %v2335
  %v2376 = vpack.c.b16 %v2340, %v2336
  %v2377 = vpack.c.b16 %v2341, %v2337
  %v2378 = vpack.c.b16 %v2346, %v2342
  %v2379 = vpack.c.b16 %v2347, %v2343
  %v2380 = vpack.c.b16 %v2348, %v2344
  %v2381 = vpack.c.b16 %v2349, %v2345
  %2414 = vmatprep.subr.bf16.mxu0 %v2351
  %2415 = vmatpush1.bf16.msra.mxu0 %v2350
  %2416 = vmatprep.subr.bf16.mxu0 %v2355
  %2417 = vmatpush1.bf16.msra.mxu0 %v2354
  %2418 = vmatprep.subr.bf16.mxu0 %v2359
  %2419 = vmatpush1.bf16.msra.mxu0 %v2358
  %2420 = vmatprep.subr.bf16.mxu0 %v2363
  %2421 = vmatpush1.bf16.msra.mxu0 %v2362
  %2422 = vmatprep.subr.bf16.mxu0 %v2367
  %2423 = vmatpush1.bf16.msra.mxu0 %v2366
  %2424 = vmatprep.subr.bf16.mxu0 %v2371
  %2425 = vmatpush1.bf16.msra.mxu0 %v2370
  %2426 = vmatprep.subr.bf16.mxu0 %v2375
  %2427 = vmatpush1.bf16.msra.mxu0 %v2374
  %2428 = vmatprep.subr.bf16.mxu0 %v2379
  %2429 = vmatpush1.bf16.msra.mxu0 %v2378
  %2430 = vmatprep.subr.bf16.mxu0 0
  %2431 = vmatpush1.bf16.msra.mxu0 0
  %2432 = vmatprep.subr.bf16.mxu0 0
  %2433 = vmatpush1.bf16.msra.mxu0 0
  %2434 = vmatprep.subr.bf16.mxu0 0
  %2435 = vmatpush1.bf16.msra.mxu0 0
  %2436 = vmatprep.subr.bf16.mxu0 0
  %2437 = vmatpush1.bf16.msra.mxu0 0
  %2438 = vmatprep.subr.bf16.mxu0 0
  %2439 = vmatpush1.bf16.msra.mxu0 0
  %2440 = vmatprep.subr.bf16.mxu0 0
  %2441 = vmatpush1.bf16.msra.mxu0 0
  %2442 = vmatprep.subr.bf16.mxu0 0
  %2443 = vmatpush1.bf16.msra.mxu0 0
  %2444 = vmatprep.subr.bf16.mxu0 0
  %2445 = vmatpush1.bf16.msra.mxu0 0
  %2446 = vmatprep.mubr.bf16.mxu0 0
  %2447 = vmatmul.mubr.bf16.gmra.mrb[0].mxu0 %v2221
  %v2448 = vpop.f32.mrb[0].mxu0
  %v2449 = vadd.f32 0.0, %v2448
  %v2450 = vpop.f32.mrb[0].mxu0
  %v2451 = vadd.f32 0.0, %v2450
  %v2452 = vpop.f32.mrb[0].mxu0
  %v2453 = vpop.f32.mrb[0].mxu0
  %2454 = vdwg.mxu0
  %2455 = vmatprep.subr.bf16.mxu0 %v2353
  %2456 = vmatpush1.bf16.msra.mxu0 %v2352
  %2457 = vmatprep.subr.bf16.mxu0 %v2357
  %2458 = vmatpush1.bf16.msra.mxu0 %v2356
  %2459 = vmatprep.subr.bf16.mxu0 %v2361
  %2460 = vmatpush1.bf16.msra.mxu0 %v2360
  %2461 = vmatprep.subr.bf16.mxu0 %v2365
  %2462 = vmatpush1.bf16.msra.mxu0 %v2364
  %2463 = vmatprep.subr.bf16.mxu0 %v2369
  %2464 = vmatpush1.bf16.msra.mxu0 %v2368
  %2465 = vmatprep.subr.bf16.mxu0 %v2373
  %2466 = vmatpush1.bf16.msra.mxu0 %v2372
  %2467 = vmatprep.subr.bf16.mxu0 %v2377
  %2468 = vmatpush1.bf16.msra.mxu0 %v2376
  %2469 = vmatprep.subr.bf16.mxu0 %v2381
  %2470 = vmatpush1.bf16.msra.mxu0 %v2380
  %2471 = vmatprep.subr.bf16.mxu0 0
  %2472 = vmatpush1.bf16.msra.mxu0 0
  %2473 = vmatprep.subr.bf16.mxu0 0
  %2474 = vmatpush1.bf16.msra.mxu0 0
  %2475 = vmatprep.subr.bf16.mxu0 0
  %2476 = vmatpush1.bf16.msra.mxu0 0
  %2477 = vmatprep.subr.bf16.mxu0 0
  %2478 = vmatpush1.bf16.msra.mxu0 0
  %2479 = vmatprep.subr.bf16.mxu0 0
  %2480 = vmatpush1.bf16.msra.mxu0 0
  %2481 = vmatprep.subr.bf16.mxu0 0
  %2482 = vmatpush1.bf16.msra.mxu0 0
  %2483 = vmatprep.subr.bf16.mxu0 0
  %2484 = vmatpush1.bf16.msra.mxu0 0
  %2485 = vmatprep.subr.bf16.mxu0 0
  %2486 = vmatpush1.bf16.msra.mxu0 0
  %2487 = vmatprep.mubr.bf16.mxu0 0
  %2488 = vmatmul.mubr.bf16.gmra.mrb[0].mxu0 %v2221
  %v2489 = vpop.f32.mrb[0].mxu0
  %v2490 = vadd.f32 0.0, %v2489
  %v2491 = vpop.f32.mrb[0].mxu0
  %v2492 = vadd.f32 0.0, %v2491
  %v2493 = vpop.f32.mrb[0].mxu0
  %v2494 = vpop.f32.mrb[0].mxu0
  %2495 = vdwg.mxu0
  %v2496 = vadd.f32 %v2217, %v2449
  %v2497 = vadd.f32 %v2218, %v2451
  %v2498 = vadd.f32 %v2219, %v2490
  %v2499 = vadd.f32 %v2220, %v2492
  %v2500 = vxor.u32 %v2496, 2147483648
  %v2501 = vxor.u32 %v2497, 2147483648
  %v2502 = vxor.u32 %v2498, 2147483648
  %v2503 = vmul.f32 %v2500, 1.442695
  %v2504 = vpow.pop %v2503
  %v2505 = vmul.f32 %v2501, 1.442695
  %v2506 = vpow.pop %v2505
  %v2507 = vmul.f32 %v2502, 1.442695
  %v2508 = vpow.pop %v2507
  %v2509 = vadd.f32 %v2504, 1.0
  %v2510 = vadd.f32 %v2506, 1.0
  %v2511 = vadd.f32 %v2508, 1.0
  %v2512 = vrcp.pop %v2509
  %v2513 = vmul.f32 1.0, %v2512
  %v2514 = vrcp.pop %v2510
  %v2515 = vmul.f32 1.0, %v2514
  %v2516 = vrcp.pop %v2511
  %v2517 = vmul.f32 1.0, %v2516
  %v2518 = vtanh.pop %v2499
  %v2519 = vmul.f32 %v2515, %v2215
  %v2520 = vmul.f32 %v2513, %v2518
  %v2521 = vadd.f32 %v2519, %v2520
  %v2522 = vtanh.pop %v2521
  %v2523 = vmul.f32 %v2517, %v2522
  %2524 = vst [vmem:[#allocation2] sm:$0xff] %v2523
  %2525 = vst [vmem:[#allocation3] sm:$0xff] %v2521
  %s2526 = scalar_lea.vmem %s2, 56
  %2527 = vst [vmem:[%s2526] sm:$0xff] %v2523
  // Predicated region
  $region14: #{speller_forward.5} parent=0 // pred_check
    _
  $region15: #{speller_forward.5} parent=0 // pred_check_branch
    %2529 = sbr.rel (0) target = $region17
  $region16: #{speller_forward.5} parent=0 // pred_region
    _
  $region17: #{speller_forward.5} parent=0 // pred_fallthru
    _
  // Predicated region
  $region18: #{speller_forward.5} parent=0 // pred_check
    _
  $region19: #{speller_forward.5} parent=0 // pred_check_branch
    %2531 = sbr.rel (0) target = $region21
  $region20: #{speller_forward.5} parent=0 // pred_region
    _
  $region21: #{speller_forward.5} parent=0 // pred_fallthru
    _

</llo_original>
